<compile_context>
chip_gen: v7x
topology: tpu7x:2x2x1
jax: 0.10.0
libtpu: 0.0.40
codegen_flags: <defaults>
</compile_context>

<pallas_src>
import math

import jax
import jax.numpy as jnp
from jax.experimental import pallas as pl
from jax.experimental.pallas import tpu as pltpu

# Layer sizes of DeeTab's nn.Sequential
DIMS = [41, 512, 384, 256, 128, 64, 1]
K_PAD = 128  # zero-padded fan-in of the first layer (41 -> 128)


def _round_up(n, m):
    return -(-n // m) * m


def deetab_kernel(xT_ref,
                  w1, b1, w2, b2, w3, b3, w4, b4, w5, b5, w6c, b6,
                  o_ref):
    """Whole 6-layer MLP on one (features, batch_tile) activation tile.

    xT_ref : (128, T) f32   input features (padded 41->128), batch on lanes
    wk     : (d_out, d_in) bf16  torch-layout weights (w1 padded to (512,128))
    bk     : (d_out, 1) f32      bias columns
    w6c    : (64, 1)  f32        last-layer weight as a column (VPU path)
    b6     : (1, 1)   f32
    o_ref  : (1, T)   f32        lane-dense output row
    """
    def dense_silu(h, w_ref, b_ref):
        # bf16 MXU matmul, f32 accumulate; bias + SiLU in f32.
        z = jnp.dot(w_ref[...], h.astype(jnp.bfloat16),
                    preferred_element_type=jnp.float32) + b_ref[...]
        return z * jax.nn.sigmoid(z)

    h = xT_ref[...]
    h = dense_silu(h, w1, b1)
    h = dense_silu(h, w2, b2)
    h = dense_silu(h, w3, b3)
    h = dense_silu(h, w4, b4)
    h = dense_silu(h, w5, b5)
    # Final 64 -> 1 layer on the VPU/XLU: broadcast multiply + sublane reduce.
    # Result is already lane-dense (1, T).
    z = jnp.sum(h * w6c[...], axis=0, keepdims=True) + b6[...]
    o_ref[...] = jax.nn.sigmoid(z).astype(o_ref.dtype)


def init_params(key):
    """PyTorch-Linear-style params: W is (out, in), b is (out,), uniform init."""
    params = []
    for d_in, d_out in zip(DIMS[:-1], DIMS[1:]):
        key, kw, kb = jax.random.split(key, 3)
        bound = 1.0 / math.sqrt(d_in)
        w = jax.random.uniform(kw, (d_out, d_in), jnp.float32, -bound, bound)
        b = jax.random.uniform(kb, (d_out,), jnp.float32, -bound, bound)
        params.append((w, b))
    return params


def _pack_params(params):
    """Convert torch-layout f32 params into kernel-ready operands."""
    (w1, b1), (w2, b2), (w3, b3), (w4, b4), (w5, b5), (w6, b6) = params
    w1p = jnp.zeros((DIMS[1], K_PAD), jnp.bfloat16)
    w1p = w1p.at[:, :DIMS[0]].set(w1.astype(jnp.bfloat16))
    packed = [w1p, b1.reshape(-1, 1).astype(jnp.float32)]
    for w, b in ((w2, b2), (w3, b3), (w4, b4), (w5, b5)):
        packed += [w.astype(jnp.bfloat16), b.reshape(-1, 1).astype(jnp.float32)]
    # Last layer stays f32 on the VPU: weight as a (64,1) column, bias (1,1).
    packed += [w6.reshape(DIMS[5], 1).astype(jnp.float32),
               b6.reshape(1, 1).astype(jnp.float32)]
    return packed


def deetab_forward(x, params, *, batch_tile=None):
    B, F = x.shape
    assert F == DIMS[0]

    # Large, lane-aligned batch tile; pad ragged batches instead of asserting.
    if batch_tile is None:
        batch_tile = min(2048, _round_up(max(B, 1), 256))
    batch_tile = _round_up(batch_tile, 128)
    B_pad = _round_up(B, batch_tile)
    grid = (B_pad // batch_tile,)

    # One-time layout plumbing: batch on lanes, features zero-padded 41 -> 128.
    xT = jnp.zeros((K_PAD, B_pad), jnp.float32)
    xT = xT.at[:F, :B].set(x.T.astype(jnp.float32))

    operands = _pack_params(params)

    in_specs = [pl.BlockSpec((K_PAD, batch_tile), lambda i: (0, i))]
    for op in operands:
        # Grid-invariant weights / biases: whole array resident in VMEM; the
        # constant index_map means they are DMA'd once and never re-fetched.
        # TODO(synk): pipeline_mode=pl.Buffered(1) would drop the redundant
        # second buffer (~0.8 MB bf16) for these grid-invariant operands.
        in_specs.append(pl.BlockSpec(op.shape, lambda i: (0, 0)))

    out_spec = pl.BlockSpec((1, batch_tile), lambda i: (0, i))

    out = pl.pallas_call(
        deetab_kernel,
        out_shape=jax.ShapeDtypeStruct((1, B_pad), jnp.float32),
        grid_spec=pltpu.PrefetchScalarGridSpec(
            num_scalar_prefetch=0,
            grid=grid,
            in_specs=in_specs,
            out_specs=out_spec,
        ),
        compiler_params=pltpu.CompilerParams(
            dimension_semantics=("parallel",),
            # Budget: bf16 weights (<1 MB, x2 buf) + ~5 KB/row of live f32
            # intermediates at T<=2048 + double-buffered input tile.  Safe on
            # v5e/v6e (128 MiB) and v7x (64 MiB per TC).
            vmem_limit_bytes=48 * 1024 * 1024,
        ),
    )(xT, *operands)

    # Lane-dense (1, B_pad) row -> (B, 1) like the PyTorch module.
    return out[0, :B].reshape(B, 1)


def deetab_reference(x, params):
    """Pure-JAX f32 reference with PyTorch Linear semantics."""
    h = x.astype(jnp.float32)
    n = len(params)
    for i, (w, b) in enumerate(params):
        h = h @ w.T + b
        h = jax.nn.sigmoid(h) if i == n - 1 else h * jax.nn.sigmoid(h)
    return h


if __name__ == "__main__":
    key = jax.random.PRNGKey(0)
    k_params, k_x = jax.random.split(key)

    params = init_params(k_params)

    B = 8  # small test batch (arbitrary B supported via padding)
    x = jax.random.normal(k_x, (B, DIMS[0]), jnp.float32)

    out = jax.block_until_ready(deetab_forward(x, params))
    ref = deetab_reference(x, params)

    assert out.shape == (B, 1)
    err = float(jnp.max(jnp.abs(out - ref)))
    # bf16 MXU operands vs f32 reference: allow a few 1e-2 absolute on [0,1].
    assert err < 3e-2, f"max abs err = {err}"

    print("KERNEL_OK")
</pallas_src>

<mosaic_0001>
module attributes {stable_mosaic.version = 11 : i64} {
  func.func @deetab_kernel(%arg0: i32, %arg1: memref<128x256xf32, #tpu.memory_space<vmem>>, %arg2: memref<512x128xbf16, #tpu.memory_space<vmem>>, %arg3: memref<512x1xf32, #tpu.memory_space<vmem>>, %arg4: memref<384x512xbf16, #tpu.memory_space<vmem>>, %arg5: memref<384x1xf32, #tpu.memory_space<vmem>>, %arg6: memref<256x384xbf16, #tpu.memory_space<vmem>>, %arg7: memref<256x1xf32, #tpu.memory_space<vmem>>, %arg8: memref<128x256xbf16, #tpu.memory_space<vmem>>, %arg9: memref<128x1xf32, #tpu.memory_space<vmem>>, %arg10: memref<64x128xbf16, #tpu.memory_space<vmem>>, %arg11: memref<64x1xf32, #tpu.memory_space<vmem>>, %arg12: memref<64x1xf32, #tpu.memory_space<vmem>>, %arg13: memref<1x1xf32, #tpu.memory_space<vmem>>, %arg14: memref<1x256xf32, #tpu.memory_space<vmem>>) attributes {dimension_semantics = [#tpu.dimension_semantics<parallel>], iteration_bounds = array<i64: 1>, scalar_prefetch = 0 : i64, scratch_operands = 0 : i64, tpu.core_type = #tpu.core_type<tc>, window_params = [{transform_indices = @transform_0, window_bounds = array<i64: 128, 256>}, {pipeline_mode = #tpu.pipeline_mode<synchronous>, transform_indices = @transform_1, window_bounds = array<i64: 512, 128>}, {pipeline_mode = #tpu.pipeline_mode<synchronous>, transform_indices = @transform_2, window_bounds = array<i64: 512, 1>}, {pipeline_mode = #tpu.pipeline_mode<synchronous>, transform_indices = @transform_3, window_bounds = array<i64: 384, 512>}, {pipeline_mode = #tpu.pipeline_mode<synchronous>, transform_indices = @transform_4, window_bounds = array<i64: 384, 1>}, {pipeline_mode = #tpu.pipeline_mode<synchronous>, transform_indices = @transform_5, window_bounds = array<i64: 256, 384>}, {pipeline_mode = #tpu.pipeline_mode<synchronous>, transform_indices = @transform_6, window_bounds = array<i64: 256, 1>}, {pipeline_mode = #tpu.pipeline_mode<synchronous>, transform_indices = @transform_7, window_bounds = array<i64: 128, 256>}, {pipeline_mode = #tpu.pipeline_mode<synchronous>, transform_indices = @transform_8, window_bounds = array<i64: 128, 1>}, {pipeline_mode = #tpu.pipeline_mode<synchronous>, transform_indices = @transform_9, window_bounds = array<i64: 64, 128>}, {pipeline_mode = #tpu.pipeline_mode<synchronous>, transform_indices = @transform_10, window_bounds = array<i64: 64, 1>}, {pipeline_mode = #tpu.pipeline_mode<synchronous>, transform_indices = @transform_11, window_bounds = array<i64: 64, 1>}, {pipeline_mode = #tpu.pipeline_mode<synchronous>, transform_indices = @transform_12, window_bounds = array<i64: 1, 1>}, {transform_indices = @transform_13, window_bounds = array<i64: 1, 256>}]} {
    %c0 = arith.constant 0 : index
    %c0_0 = arith.constant 0 : index
    %0 = vector.load %arg1[%c0, %c0_0] : memref<128x256xf32, #tpu.memory_space<vmem>>, vector<128x256xf32>
    %c0_1 = arith.constant 0 : index
    %c0_2 = arith.constant 0 : index
    %1 = vector.load %arg2[%c0_1, %c0_2] : memref<512x128xbf16, #tpu.memory_space<vmem>>, vector<512x128xbf16>
    %2 = arith.truncf %0 : vector<128x256xf32> to vector<128x256xbf16>
    %cst = arith.constant dense<0.000000e+00> : vector<512x256xf32>
    %3 = tpu.matmul %1, %2, %cst {dimension_numbers = #tpu.dot_dimension_numbers<[1], [0], [0], [1], [0, 0, 1, 1], [], []>} : vector<512x128xbf16>, vector<128x256xbf16>, vector<512x256xf32> -> vector<512x256xf32>
    %c0_3 = arith.constant 0 : index
    %c0_4 = arith.constant 0 : index
    %4 = vector.load %arg3[%c0_3, %c0_4] : memref<512x1xf32, #tpu.memory_space<vmem>>, vector<512x1xf32>
    %5 = vector.broadcast %4 : vector<512x1xf32> to vector<512x256xf32>
    %6 = arith.addf %3, %5 : vector<512x256xf32>
    %7 = arith.negf %6 : vector<512x256xf32>
    %8 = math.exp %7 : vector<512x256xf32>
    %cst_5 = arith.constant 1.000000e+00 : f32
    %9 = vector.broadcast %cst_5 : f32 to vector<512x256xf32>
    %10 = arith.addf %9, %8 : vector<512x256xf32>
    %11 = arith.divf %9, %10 : vector<512x256xf32>
    %12 = arith.mulf %6, %11 : vector<512x256xf32>
    %c0_6 = arith.constant 0 : index
    %c0_7 = arith.constant 0 : index
    %13 = vector.load %arg4[%c0_6, %c0_7] : memref<384x512xbf16, #tpu.memory_space<vmem>>, vector<384x512xbf16>
    %14 = arith.truncf %12 : vector<512x256xf32> to vector<512x256xbf16>
    %cst_8 = arith.constant dense<0.000000e+00> : vector<384x256xf32>
    %15 = tpu.matmul %13, %14, %cst_8 {dimension_numbers = #tpu.dot_dimension_numbers<[1], [0], [0], [1], [0, 0, 1, 1], [], []>} : vector<384x512xbf16>, vector<512x256xbf16>, vector<384x256xf32> -> vector<384x256xf32>
    %c0_9 = arith.constant 0 : index
    %c0_10 = arith.constant 0 : index
    %16 = vector.load %arg5[%c0_9, %c0_10] : memref<384x1xf32, #tpu.memory_space<vmem>>, vector<384x1xf32>
    %17 = vector.broadcast %16 : vector<384x1xf32> to vector<384x256xf32>
    %18 = arith.addf %15, %17 : vector<384x256xf32>
    %19 = arith.negf %18 : vector<384x256xf32>
    %20 = math.exp %19 : vector<384x256xf32>
    %cst_11 = arith.constant 1.000000e+00 : f32
    %21 = vector.broadcast %cst_11 : f32 to vector<384x256xf32>
    %22 = arith.addf %21, %20 : vector<384x256xf32>
    %23 = arith.divf %21, %22 : vector<384x256xf32>
    %24 = arith.mulf %18, %23 : vector<384x256xf32>
    %c0_12 = arith.constant 0 : index
    %c0_13 = arith.constant 0 : index
    %25 = vector.load %arg6[%c0_12, %c0_13] : memref<256x384xbf16, #tpu.memory_space<vmem>>, vector<256x384xbf16>
    %26 = arith.truncf %24 : vector<384x256xf32> to vector<384x256xbf16>
    %cst_14 = arith.constant dense<0.000000e+00> : vector<256x256xf32>
    %27 = tpu.matmul %25, %26, %cst_14 {dimension_numbers = #tpu.dot_dimension_numbers<[1], [0], [0], [1], [0, 0, 1, 1], [], []>} : vector<256x384xbf16>, vector<384x256xbf16>, vector<256x256xf32> -> vector<256x256xf32>
    %c0_15 = arith.constant 0 : index
    %c0_16 = arith.constant 0 : index
    %28 = vector.load %arg7[%c0_15, %c0_16] : memref<256x1xf32, #tpu.memory_space<vmem>>, vector<256x1xf32>
    %29 = vector.broadcast %28 : vector<256x1xf32> to vector<256x256xf32>
    %30 = arith.addf %27, %29 : vector<256x256xf32>
    %31 = arith.negf %30 : vector<256x256xf32>
    %32 = math.exp %31 : vector<256x256xf32>
    %cst_17 = arith.constant 1.000000e+00 : f32
    %33 = vector.broadcast %cst_17 : f32 to vector<256x256xf32>
    %34 = arith.addf %33, %32 : vector<256x256xf32>
    %35 = arith.divf %33, %34 : vector<256x256xf32>
    %36 = arith.mulf %30, %35 : vector<256x256xf32>
    %c0_18 = arith.constant 0 : index
    %c0_19 = arith.constant 0 : index
    %37 = vector.load %arg8[%c0_18, %c0_19] : memref<128x256xbf16, #tpu.memory_space<vmem>>, vector<128x256xbf16>
    %38 = arith.truncf %36 : vector<256x256xf32> to vector<256x256xbf16>
    %cst_20 = arith.constant dense<0.000000e+00> : vector<128x256xf32>
    %39 = tpu.matmul %37, %38, %cst_20 {dimension_numbers = #tpu.dot_dimension_numbers<[1], [0], [0], [1], [0, 0, 1, 1], [], []>} : vector<128x256xbf16>, vector<256x256xbf16>, vector<128x256xf32> -> vector<128x256xf32>
    %c0_21 = arith.constant 0 : index
    %c0_22 = arith.constant 0 : index
    %40 = vector.load %arg9[%c0_21, %c0_22] : memref<128x1xf32, #tpu.memory_space<vmem>>, vector<128x1xf32>
    %41 = vector.broadcast %40 : vector<128x1xf32> to vector<128x256xf32>
    %42 = arith.addf %39, %41 : vector<128x256xf32>
    %43 = arith.negf %42 : vector<128x256xf32>
    %44 = math.exp %43 : vector<128x256xf32>
    %cst_23 = arith.constant 1.000000e+00 : f32
    %45 = vector.broadcast %cst_23 : f32 to vector<128x256xf32>
    %46 = arith.addf %45, %44 : vector<128x256xf32>
    %47 = arith.divf %45, %46 : vector<128x256xf32>
    %48 = arith.mulf %42, %47 : vector<128x256xf32>
    %c0_24 = arith.constant 0 : index
    %c0_25 = arith.constant 0 : index
    %49 = vector.load %arg10[%c0_24, %c0_25] : memref<64x128xbf16, #tpu.memory_space<vmem>>, vector<64x128xbf16>
    %50 = arith.truncf %48 : vector<128x256xf32> to vector<128x256xbf16>
    %cst_26 = arith.constant dense<0.000000e+00> : vector<64x256xf32>
    %51 = tpu.matmul %49, %50, %cst_26 {dimension_numbers = #tpu.dot_dimension_numbers<[1], [0], [0], [1], [0, 0, 1, 1], [], []>} : vector<64x128xbf16>, vector<128x256xbf16>, vector<64x256xf32> -> vector<64x256xf32>
    %c0_27 = arith.constant 0 : index
    %c0_28 = arith.constant 0 : index
    %52 = vector.load %arg11[%c0_27, %c0_28] : memref<64x1xf32, #tpu.memory_space<vmem>>, vector<64x1xf32>
    %53 = vector.broadcast %52 : vector<64x1xf32> to vector<64x256xf32>
    %54 = arith.addf %51, %53 : vector<64x256xf32>
    %55 = arith.negf %54 : vector<64x256xf32>
    %56 = math.exp %55 : vector<64x256xf32>
    %cst_29 = arith.constant 1.000000e+00 : f32
    %57 = vector.broadcast %cst_29 : f32 to vector<64x256xf32>
    %58 = arith.addf %57, %56 : vector<64x256xf32>
    %59 = arith.divf %57, %58 : vector<64x256xf32>
    %60 = arith.mulf %54, %59 : vector<64x256xf32>
    %c0_30 = arith.constant 0 : index
    %c0_31 = arith.constant 0 : index
    %61 = vector.load %arg12[%c0_30, %c0_31] : memref<64x1xf32, #tpu.memory_space<vmem>>, vector<64x1xf32>
    %62 = vector.broadcast %61 : vector<64x1xf32> to vector<64x256xf32>
    %63 = arith.mulf %60, %62 : vector<64x256xf32>
    %cst_32 = arith.constant dense<0.000000e+00> : vector<256xf32>
    %64 = vector.multi_reduction <add>, %63, %cst_32 [0] : vector<64x256xf32> to vector<256xf32>
    %65 = vector.shape_cast %64 : vector<256xf32> to vector<1x256xf32>
    %c0_33 = arith.constant 0 : index
    %c0_34 = arith.constant 0 : index
    %66 = vector.load %arg13[%c0_33, %c0_34] : memref<1x1xf32, #tpu.memory_space<vmem>>, vector<1x1xf32>
    %67 = vector.broadcast %66 : vector<1x1xf32> to vector<1x256xf32>
    %68 = arith.addf %65, %67 : vector<1x256xf32>
    %69 = arith.negf %68 : vector<1x256xf32>
    %70 = math.exp %69 : vector<1x256xf32>
    %cst_35 = arith.constant 1.000000e+00 : f32
    %71 = vector.broadcast %cst_35 : f32 to vector<1x256xf32>
    %72 = arith.addf %71, %70 : vector<1x256xf32>
    %73 = arith.divf %71, %72 : vector<1x256xf32>
    %c0_36 = arith.constant 0 : index
    %c0_37 = arith.constant 0 : index
    %74 = vector.load %arg14[%c0_36, %c0_37] : memref<1x256xf32, #tpu.memory_space<vmem>>, vector<1x256xf32>
    tpu.vector_store %arg14[%c0_36, %c0_37], %73 {strides = array<i32>} : memref<1x256xf32, #tpu.memory_space<vmem>>, vector<1x256xf32>,
    return
  }
  func.func @transform_0(%arg0: i32) -> (i32, i32) {
    %c0_i32 = arith.constant 0 : i32
    %c0_i32_0 = arith.constant 0 : i32
    return %c0_i32, %arg0 : i32, i32
  }
  func.func @transform_1(%arg0: i32) -> (i32, i32) {
    %c0_i32 = arith.constant 0 : i32
    %c0_i32_0 = arith.constant 0 : i32
    %c0_i32_1 = arith.constant 0 : i32
    return %c0_i32, %c0_i32_0 : i32, i32
  }
  func.func @transform_2(%arg0: i32) -> (i32, i32) {
    %c0_i32 = arith.constant 0 : i32
    %c0_i32_0 = arith.constant 0 : i32
    %c0_i32_1 = arith.constant 0 : i32
    return %c0_i32, %c0_i32_0 : i32, i32
  }
  func.func @transform_3(%arg0: i32) -> (i32, i32) {
    %c0_i32 = arith.constant 0 : i32
    %c0_i32_0 = arith.constant 0 : i32
    %c0_i32_1 = arith.constant 0 : i32
    return %c0_i32, %c0_i32_0 : i32, i32
  }
  func.func @transform_4(%arg0: i32) -> (i32, i32) {
    %c0_i32 = arith.constant 0 : i32
    %c0_i32_0 = arith.constant 0 : i32
    %c0_i32_1 = arith.constant 0 : i32
    return %c0_i32, %c0_i32_0 : i32, i32
  }
  func.func @transform_5(%arg0: i32) -> (i32, i32) {
    %c0_i32 = arith.constant 0 : i32
    %c0_i32_0 = arith.constant 0 : i32
    %c0_i32_1 = arith.constant 0 : i32
    return %c0_i32, %c0_i32_0 : i32, i32
  }
  func.func @transform_6(%arg0: i32) -> (i32, i32) {
    %c0_i32 = arith.constant 0 : i32
    %c0_i32_0 = arith.constant 0 : i32
    %c0_i32_1 = arith.constant 0 : i32
    return %c0_i32, %c0_i32_0 : i32, i32
  }
  func.func @transform_7(%arg0: i32) -> (i32, i32) {
    %c0_i32 = arith.constant 0 : i32
    %c0_i32_0 = arith.constant 0 : i32
    %c0_i32_1 = arith.constant 0 : i32
    return %c0_i32, %c0_i32_0 : i32, i32
  }
  func.func @transform_8(%arg0: i32) -> (i32, i32) {
    %c0_i32 = arith.constant 0 : i32
    %c0_i32_0 = arith.constant 0 : i32
    %c0_i32_1 = arith.constant 0 : i32
    return %c0_i32, %c0_i32_0 : i32, i32
  }
  func.func @transform_9(%arg0: i32) -> (i32, i32) {
    %c0_i32 = arith.constant 0 : i32
    %c0_i32_0 = arith.constant 0 : i32
    %c0_i32_1 = arith.constant 0 : i32
    return %c0_i32, %c0_i32_0 : i32, i32
  }
  func.func @transform_10(%arg0: i32) -> (i32, i32) {
    %c0_i32 = arith.constant 0 : i32
    %c0_i32_0 = arith.constant 0 : i32
    %c0_i32_1 = arith.constant 0 : i32
    return %c0_i32, %c0_i32_0 : i32, i32
  }
  func.func @transform_11(%arg0: i32) -> (i32, i32) {
    %c0_i32 = arith.constant 0 : i32
    %c0_i32_0 = arith.constant 0 : i32
    %c0_i32_1 = arith.constant 0 : i32
    return %c0_i32, %c0_i32_0 : i32, i32
  }
  func.func @transform_12(%arg0: i32) -> (i32, i32) {
    %c0_i32 = arith.constant 0 : i32
    %c0_i32_0 = arith.constant 0 : i32
    %c0_i32_1 = arith.constant 0 : i32
    return %c0_i32, %c0_i32_0 : i32, i32
  }
  func.func @transform_13(%arg0: i32) -> (i32, i32) {
    %c0_i32 = arith.constant 0 : i32
    %c0_i32_0 = arith.constant 0 : i32
    return %c0_i32, %arg0 : i32, i32
  }
}

</mosaic_0001>

<llo_original>
// kernel: tpu_custom_call.1
$region0: #{tpu_custom_call.1}
  #allocation0 [shape = 'u32[]', space=smem, size = 0x4, offset = 0x4, fixed_abs, tag = 'smem constant byte address 0x4 - core index']
  #allocation1 [shape = 'u32[144,128]{1,0:T(1,128)}', space=vmem, size = 0x12000, scoped, tag = 'internal scratch']
  #allocation2 [shape = 'f32[1,1]{1,0:T(1,128)S(1)}', space=vmem, size = 0x200, scoped, tag = 'scoped memory for tpu_custom_call.1']
  %s0 = inlined_call_operand.vmem [shape: f32[128,256], index: 0, kind: input, shape index: {}]
  %s1 = inlined_call_operand.hbm [shape: bf16[512,128], index: 1, kind: input, shape index: {}]
  %s2 = inlined_call_operand.vmem [shape: f32[512,1], index: 2, kind: input, shape index: {}]
  %s3 = inlined_call_operand.vmem [shape: bf16[384,512], index: 3, kind: input, shape index: {}]
  %s4 = inlined_call_operand.vmem [shape: f32[384,1], index: 4, kind: input, shape index: {}]
  %s5 = inlined_call_operand.vmem [shape: bf16[256,384], index: 5, kind: input, shape index: {}]
  %s6 = inlined_call_operand.vmem [shape: f32[256,1], index: 6, kind: input, shape index: {}]
  %s7 = inlined_call_operand.hbm [shape: bf16[128,256], index: 7, kind: input, shape index: {}]
  %s8 = inlined_call_operand.vmem [shape: f32[128,1], index: 8, kind: input, shape index: {}]
  %s9 = inlined_call_operand.vmem [shape: bf16[64,128], index: 9, kind: input, shape index: {}]
  %s10 = inlined_call_operand.vmem [shape: f32[64,1], index: 10, kind: input, shape index: {}]
  %s11 = inlined_call_operand.vmem [shape: f32[64,1], index: 11, kind: input, shape index: {}]
  %s12 = inlined_call_operand.<no memory space> [shape: f32[1,1], index: 12, kind: input, shape index: {}]
  %s13 = inlined_call_operand.hbm [shape: f32[1,256], index: 13, kind: output, shape index: {}]
  %s14 = sld [smem:[#allocation0]]
  $region70: #{tpu_custom_call.1} parent=0
    _
  %s16 = ssub.s32 1, %s14
  %s17 = scalar_select 0, %s16, %s14
  %v18 = vstv %s12
  %19 = vst [vmem:[#allocation2] sm:$0x1] %v18
  $region1: #{tpu_custom_call.1} parent=0
    #allocation3 [shape = 'u8[131072]{0}', space=vmem, size = 0x20000, scoped, tag = 'input window, operand 1, single buffered']
    #allocation4 [shape = 's32[1]{0}', space=sflag, size = 0x4, scoped, tag = 'scoped memory for tpu_custom_call.1']
    #allocation5 [shape = 's32[1]{0}', space=sflag, size = 0x4, scoped, tag = 'scoped memory for tpu_custom_call.1']
    #allocation6 [shape = 'u8[65536]{0}', space=vmem, size = 0x10000, scoped, tag = 'input window, operand 7, single buffered']
    #allocation7 [shape = 's32[1]{0}', space=sflag, size = 0x4, scoped, tag = 'scoped memory for tpu_custom_call.1']
    #allocation8 [shape = 'u8[1024]{0}', space=vmem, size = 0x400, scoped, tag = 'output window, operand 0, single buffered']
    %20 = vsyncpa [#allocation4], 0
    %21 = vsyncpa [#allocation7], 0
    %22 = vsyncpa [#allocation5], 0
    // Predicated region
    $region2: #{tpu_custom_call.1} parent=1 // pred_check
      _
    $region3: #{tpu_custom_call.1} parent=1 // pred_check_branch
      %24 = sbr.rel (0) target = $region5
    $region4: #{tpu_custom_call.1} parent=1 // pred_region
      _
    $region5: #{tpu_custom_call.1} parent=1 // pred_fallthru
      _
    // Predicated region
    $region6: #{tpu_custom_call.1} parent=1 // pred_check
      _
    $region7: #{tpu_custom_call.1} parent=1 // pred_check_branch
      %26 = sbr.rel (0) target = $region9
    $region8: #{tpu_custom_call.1} parent=1 // pred_region
      %s28 = ssub.s32 4096, 4096
      %29 = vsyncadd [#allocation4], %s28
      %s30 = sshll.u32 [#allocation3], 4
      %s31 = int_to_ptr.vmem [resolvable:$true] %s30
      %36 = dma.hbm_to_vmem [thread:$0]  %s1, 4096, %s31, [#allocation4], 64, 64, 4
    $region9: #{tpu_custom_call.1} parent=1 // pred_fallthru
      _
    // Predicated region
    $region10: #{tpu_custom_call.1} parent=1 // pred_check
      _
    $region11: #{tpu_custom_call.1} parent=1 // pred_check_branch
      %38 = sbr.rel (0) target = $region13
    $region12: #{tpu_custom_call.1} parent=1 // pred_region
      _
    $region13: #{tpu_custom_call.1} parent=1 // pred_fallthru
      _
    // Predicated region
    $region14: #{tpu_custom_call.1} parent=1 // pred_check
      _
    $region15: #{tpu_custom_call.1} parent=1 // pred_check_branch
      %40 = sbr.rel (0) target = $region17
    $region16: #{tpu_custom_call.1} parent=1 // pred_region
      _
    $region17: #{tpu_custom_call.1} parent=1 // pred_fallthru
      _
    // Predicated region
    $region18: #{tpu_custom_call.1} parent=1 // pred_check
      _
    $region19: #{tpu_custom_call.1} parent=1 // pred_check_branch
      %42 = sbr.rel (0) target = $region21
    $region20: #{tpu_custom_call.1} parent=1 // pred_region
      _
    $region21: #{tpu_custom_call.1} parent=1 // pred_fallthru
      _
    // Predicated region
    $region22: #{tpu_custom_call.1} parent=1 // pred_check
      _
    $region23: #{tpu_custom_call.1} parent=1 // pred_check_branch
      %44 = sbr.rel (0) target = $region25
    $region24: #{tpu_custom_call.1} parent=1 // pred_region
      _
    $region25: #{tpu_custom_call.1} parent=1 // pred_fallthru
      _
    // Predicated region
    $region26: #{tpu_custom_call.1} parent=1 // pred_check
      _
    $region27: #{tpu_custom_call.1} parent=1 // pred_check_branch
      %46 = sbr.rel (0) target = $region29
    $region28: #{tpu_custom_call.1} parent=1 // pred_region
      _
    $region29: #{tpu_custom_call.1} parent=1 // pred_fallthru
      _
    // Predicated region
    $region30: #{tpu_custom_call.1} parent=1 // pred_check
      _
    $region31: #{tpu_custom_call.1} parent=1 // pred_check_branch
      %48 = sbr.rel (0) target = $region33
    $region32: #{tpu_custom_call.1} parent=1 // pred_region
      %s50 = ssub.s32 2048, 2048
      %51 = vsyncadd [#allocation7], %s50
      %s52 = sshll.u32 [#allocation6], 4
      %s53 = int_to_ptr.vmem [resolvable:$true] %s52
      %58 = dma.hbm_to_vmem [thread:$0]  %s7, 2048, %s53, [#allocation7], 128, 128, 8
    $region33: #{tpu_custom_call.1} parent=1 // pred_fallthru
      _
    // Predicated region
    $region34: #{tpu_custom_call.1} parent=1 // pred_check
      _
    $region35: #{tpu_custom_call.1} parent=1 // pred_check_branch
      %60 = sbr.rel (0) target = $region37
    $region36: #{tpu_custom_call.1} parent=1 // pred_region
      _
    $region37: #{tpu_custom_call.1} parent=1 // pred_fallthru
      _
    // Predicated region
    $region38: #{tpu_custom_call.1} parent=1 // pred_check
      _
    $region39: #{tpu_custom_call.1} parent=1 // pred_check_branch
      %62 = sbr.rel (0) target = $region41
    $region40: #{tpu_custom_call.1} parent=1 // pred_region
      _
    $region41: #{tpu_custom_call.1} parent=1 // pred_fallthru
      _
    // Predicated region
    $region42: #{tpu_custom_call.1} parent=1 // pred_check
      _
    $region43: #{tpu_custom_call.1} parent=1 // pred_check_branch
      %64 = sbr.rel (0) target = $region45
    $region44: #{tpu_custom_call.1} parent=1 // pred_region
      _
    $region45: #{tpu_custom_call.1} parent=1 // pred_fallthru
      _
    // Predicated region
    $region46: #{tpu_custom_call.1} parent=1 // pred_check
      _
    $region47: #{tpu_custom_call.1} parent=1 // pred_check_branch
      %66 = sbr.rel (0) target = $region49
    $region48: #{tpu_custom_call.1} parent=1 // pred_region
      _
    $region49: #{tpu_custom_call.1} parent=1 // pred_fallthru
      _
    // Predicated region
    $region50: #{tpu_custom_call.1} parent=1 // pred_check
      _
    $region51: #{tpu_custom_call.1} parent=1 // pred_check_branch
      %68 = sbr.rel (0) target = $region53
    $region52: #{tpu_custom_call.1} parent=1 // pred_region
      _
    $region53: #{tpu_custom_call.1} parent=1 // pred_fallthru
      _
    // Predicated region
    $region54: #{tpu_custom_call.1} parent=1 // pred_check
      _
    $region55: #{tpu_custom_call.1} parent=1 // pred_check_branch
      %70 = sbr.rel (0) target = $region57
    $region56: #{tpu_custom_call.1} parent=1 // pred_region
      %71 = dma.done [#allocation4], 4096
    $region57: #{tpu_custom_call.1} parent=1 // pred_fallthru
      _
    // Predicated region
    $region58: #{tpu_custom_call.1} parent=1 // pred_check
      _
    $region59: #{tpu_custom_call.1} parent=1 // pred_check_branch
      %73 = sbr.rel (0) target = $region61
    $region60: #{tpu_custom_call.1} parent=1 // pred_region
      %74 = dma.done [#allocation7], 2048
    $region61: #{tpu_custom_call.1} parent=1 // pred_fallthru
      _
    %v76 = vld [vmem:[%s0] sm:$0xff]
    %v77 = vld [vmem:[%s0 + $0x8] sm:$0xff]
    %v78 = vld [vmem:[%s0 + $0x10] sm:$0xff]
    %v79 = vld [vmem:[%s0 + $0x18] sm:$0xff]
    %v80 = vld [vmem:[%s0 + $0x20] sm:$0xff]
    %v81 = vld [vmem:[%s0 + $0x28] sm:$0xff]
    %v82 = vld [vmem:[%s0 + $0x30] sm:$0xff]
    %v83 = vld [vmem:[%s0 + $0x38] sm:$0xff]
    %v84 = vld [vmem:[%s0 + $0x40] sm:$0xff]
    %v85 = vld [vmem:[%s0 + $0x48] sm:$0xff]
    %v86 = vld [vmem:[%s0 + $0x50] sm:$0xff]
    %v87 = vld [vmem:[%s0 + $0x58] sm:$0xff]
    %v88 = vld [vmem:[%s0 + $0x60] sm:$0xff]
    %v89 = vld [vmem:[%s0 + $0x68] sm:$0xff]
    %v90 = vld [vmem:[%s0 + $0x70] sm:$0xff]
    %v91 = vld [vmem:[%s0 + $0x78] sm:$0xff]
    %v92 = vld [vmem:[%s0 + $0x80] sm:$0xff]
    %v93 = vld [vmem:[%s0 + $0x88] sm:$0xff]
    %v94 = vld [vmem:[%s0 + $0x90] sm:$0xff]
    %v95 = vld [vmem:[%s0 + $0x98] sm:$0xff]
    %v96 = vld [vmem:[%s0 + $0xa0] sm:$0xff]
    %v97 = vld [vmem:[%s0 + $0xa8] sm:$0xff]
    %v98 = vld [vmem:[%s0 + $0xb0] sm:$0xff]
    %v99 = vld [vmem:[%s0 + $0xb8] sm:$0xff]
    %v100 = vld [vmem:[%s0 + $0xc0] sm:$0xff]
    %v101 = vld [vmem:[%s0 + $0xc8] sm:$0xff]
    %v102 = vld [vmem:[%s0 + $0xd0] sm:$0xff]
    %v103 = vld [vmem:[%s0 + $0xd8] sm:$0xff]
    %v104 = vld [vmem:[%s0 + $0xe0] sm:$0xff]
    %v105 = vld [vmem:[%s0 + $0xe8] sm:$0xff]
    %v106 = vld [vmem:[%s0 + $0xf0] sm:$0xff]
    %v107 = vld [vmem:[%s0 + $0xf8] sm:$0xff]
    %v108 = vld [vmem:[#allocation3] sm:$0xf]
    %v109 = vld [vmem:[#allocation3 + $0x4] sm:$0xf]
    %v110 = vld [vmem:[#allocation3 + $0x8] sm:$0xf]
    %v111 = vld [vmem:[#allocation3 + $0xc] sm:$0xf]
    %v112 = vld [vmem:[#allocation3 + $0x10] sm:$0xf]
    %v113 = vld [vmem:[#allocation3 + $0x14] sm:$0xf]
    %v114 = vld [vmem:[#allocation3 + $0x18] sm:$0xf]
    %v115 = vld [vmem:[#allocation3 + $0x1c] sm:$0xf]
    %v116 = vld [vmem:[#allocation3 + $0x20] sm:$0xf]
    %v117 = vld [vmem:[#allocation3 + $0x24] sm:$0xf]
    %v118 = vld [vmem:[#allocation3 + $0x28] sm:$0xf]
    %v119 = vld [vmem:[#allocation3 + $0x2c] sm:$0xf]
    %v120 = vld [vmem:[#allocation3 + $0x30] sm:$0xf]
    %v121 = vld [vmem:[#allocation3 + $0x34] sm:$0xf]
    %v122 = vld [vmem:[#allocation3 + $0x38] sm:$0xf]
    %v123 = vld [vmem:[#allocation3 + $0x3c] sm:$0xf]
    %v124 = vld [vmem:[#allocation3 + $0x40] sm:$0xf]
    %v125 = vld [vmem:[#allocation3 + $0x44] sm:$0xf]
    %v126 = vld [vmem:[#allocation3 + $0x48] sm:$0xf]
    %v127 = vld [vmem:[#allocation3 + $0x4c] sm:$0xf]
    %v128 = vld [vmem:[#allocation3 + $0x50] sm:$0xf]
    %v129 = vld [vmem:[#allocation3 + $0x54] sm:$0xf]
    %v130 = vld [vmem:[#allocation3 + $0x58] sm:$0xf]
    %v131 = vld [vmem:[#allocation3 + $0x5c] sm:$0xf]
    %v132 = vld [vmem:[#allocation3 + $0x60] sm:$0xf]
    %v133 = vld [vmem:[#allocation3 + $0x64] sm:$0xf]
    %v134 = vld [vmem:[#allocation3 + $0x68] sm:$0xf]
    %v135 = vld [vmem:[#allocation3 + $0x6c] sm:$0xf]
    %v136 = vld [vmem:[#allocation3 + $0x70] sm:$0xf]
    %v137 = vld [vmem:[#allocation3 + $0x74] sm:$0xf]
    %v138 = vld [vmem:[#allocation3 + $0x78] sm:$0xf]
    %v139 = vld [vmem:[#allocation3 + $0x7c] sm:$0xf]
    %v140 = vld [vmem:[#allocation3 + $0x80] sm:$0xf]
    %v141 = vld [vmem:[#allocation3 + $0x84] sm:$0xf]
    %v142 = vld [vmem:[#allocation3 + $0x88] sm:$0xf]
    %v143 = vld [vmem:[#allocation3 + $0x8c] sm:$0xf]
    %v144 = vld [vmem:[#allocation3 + $0x90] sm:$0xf]
    %v145 = vld [vmem:[#allocation3 + $0x94] sm:$0xf]
    %v146 = vld [vmem:[#allocation3 + $0x98] sm:$0xf]
    %v147 = vld [vmem:[#allocation3 + $0x9c] sm:$0xf]
    %v148 = vld [vmem:[#allocation3 + $0xa0] sm:$0xf]
    %v149 = vld [vmem:[#allocation3 + $0xa4] sm:$0xf]
    %v150 = vld [vmem:[#allocation3 + $0xa8] sm:$0xf]
    %v151 = vld [vmem:[#allocation3 + $0xac] sm:$0xf]
    %v152 = vld [vmem:[#allocation3 + $0xb0] sm:$0xf]
    %v153 = vld [vmem:[#allocation3 + $0xb4] sm:$0xf]
    %v154 = vld [vmem:[#allocation3 + $0xb8] sm:$0xf]
    %v155 = vld [vmem:[#allocation3 + $0xbc] sm:$0xf]
    %v156 = vld [vmem:[#allocation3 + $0xc0] sm:$0xf]
    %v157 = vld [vmem:[#allocation3 + $0xc4] sm:$0xf]
    %v158 = vld [vmem:[#allocation3 + $0xc8] sm:$0xf]
    %v159 = vld [vmem:[#allocation3 + $0xcc] sm:$0xf]
    %v160 = vld [vmem:[#allocation3 + $0xd0] sm:$0xf]
    %v161 = vld [vmem:[#allocation3 + $0xd4] sm:$0xf]
    %v162 = vld [vmem:[#allocation3 + $0xd8] sm:$0xf]
    %v163 = vld [vmem:[#allocation3 + $0xdc] sm:$0xf]
    %v164 = vld [vmem:[#allocation3 + $0xe0] sm:$0xf]
    %v165 = vld [vmem:[#allocation3 + $0xe4] sm:$0xf]
    %v166 = vld [vmem:[#allocation3 + $0xe8] sm:$0xf]
    %v167 = vld [vmem:[#allocation3 + $0xec] sm:$0xf]
    %v168 = vld [vmem:[#allocation3 + $0xf0] sm:$0xf]
    %v169 = vld [vmem:[#allocation3 + $0xf4] sm:$0xf]
    %v170 = vld [vmem:[#allocation3 + $0xf8] sm:$0xf]
    %v171 = vld [vmem:[#allocation3 + $0xfc] sm:$0xf]
    %v172 = vpack.c.bf16 %v78, %v76
    %v173 = vpack.c.bf16 %v79, %v77
    %v174 = vpack.c.bf16 %v82, %v80
    %v175 = vpack.c.bf16 %v83, %v81
    %v176 = vpack.c.bf16 %v86, %v84
    %v177 = vpack.c.bf16 %v87, %v85
    %v178 = vpack.c.bf16 %v90, %v88
    %v179 = vpack.c.bf16 %v91, %v89
    %v180 = vpack.c.bf16 %v94, %v92
    %v181 = vpack.c.bf16 %v95, %v93
    %v182 = vpack.c.bf16 %v98, %v96
    %v183 = vpack.c.bf16 %v99, %v97
    %v184 = vpack.c.bf16 %v102, %v100
    %v185 = vpack.c.bf16 %v103, %v101
    %v186 = vpack.c.bf16 %v106, %v104
    %v187 = vpack.c.bf16 %v107, %v105
    %v188 = vld [vmem:[%s2] sm:$0xff]
    %v189 = vld [vmem:[%s2 + $0x8] sm:$0xff]
    %v190 = vld [vmem:[%s2 + $0x10] sm:$0xff]
    %v191 = vld [vmem:[%s2 + $0x18] sm:$0xff]
    %v192 = vld [vmem:[%s2 + $0x20] sm:$0xff]
    %v193 = vld [vmem:[%s2 + $0x28] sm:$0xff]
    %v194 = vld [vmem:[%s2 + $0x30] sm:$0xff]
    %v195 = vld [vmem:[%s2 + $0x38] sm:$0xff]
    %v196 = vld [vmem:[%s2 + $0x40] sm:$0xff]
    %v197 = vld [vmem:[%s2 + $0x48] sm:$0xff]
    %v198 = vld [vmem:[%s2 + $0x50] sm:$0xff]
    %v199 = vld [vmem:[%s2 + $0x58] sm:$0xff]
    %v200 = vld [vmem:[%s2 + $0x60] sm:$0xff]
    %v201 = vld [vmem:[%s2 + $0x68] sm:$0xff]
    %v202 = vld [vmem:[%s2 + $0x70] sm:$0xff]
    %v203 = vld [vmem:[%s2 + $0x78] sm:$0xff]
    %v204 = vld [vmem:[%s2 + $0x80] sm:$0xff]
    %v205 = vld [vmem:[%s2 + $0x88] sm:$0xff]
    %v206 = vld [vmem:[%s2 + $0x90] sm:$0xff]
    %v207 = vld [vmem:[%s2 + $0x98] sm:$0xff]
    %v208 = vld [vmem:[%s2 + $0xa0] sm:$0xff]
    %v209 = vld [vmem:[%s2 + $0xa8] sm:$0xff]
    %v210 = vld [vmem:[%s2 + $0xb0] sm:$0xff]
    %v211 = vld [vmem:[%s2 + $0xb8] sm:$0xff]
    %v212 = vld [vmem:[%s2 + $0xc0] sm:$0xff]
    %v213 = vld [vmem:[%s2 + $0xc8] sm:$0xff]
    %v214 = vld [vmem:[%s2 + $0xd0] sm:$0xff]
    %v215 = vld [vmem:[%s2 + $0xd8] sm:$0xff]
    %v216 = vld [vmem:[%s2 + $0xe0] sm:$0xff]
    %v217 = vld [vmem:[%s2 + $0xe8] sm:$0xff]
    %v218 = vld [vmem:[%s2 + $0xf0] sm:$0xff]
    %v219 = vld [vmem:[%s2 + $0xf8] sm:$0xff]
    %v220 = vld [vmem:[%s2 + $0x100] sm:$0xff]
    %v221 = vld [vmem:[%s2 + $0x108] sm:$0xff]
    %v222 = vld [vmem:[%s2 + $0x110] sm:$0xff]
    %v223 = vld [vmem:[%s2 + $0x118] sm:$0xff]
    %v224 = vld [vmem:[%s2 + $0x120] sm:$0xff]
    %v225 = vld [vmem:[%s2 + $0x128] sm:$0xff]
    %v226 = vld [vmem:[%s2 + $0x130] sm:$0xff]
    %v227 = vld [vmem:[%s2 + $0x138] sm:$0xff]
    %v228 = vld [vmem:[%s2 + $0x140] sm:$0xff]
    %v229 = vld [vmem:[%s2 + $0x148] sm:$0xff]
    %v230 = vld [vmem:[%s2 + $0x150] sm:$0xff]
    %v231 = vld [vmem:[%s2 + $0x158] sm:$0xff]
    %v232 = vld [vmem:[%s2 + $0x160] sm:$0xff]
    %v233 = vld [vmem:[%s2 + $0x168] sm:$0xff]
    %v234 = vld [vmem:[%s2 + $0x170] sm:$0xff]
    %v235 = vld [vmem:[%s2 + $0x178] sm:$0xff]
    %v236 = vld [vmem:[%s2 + $0x180] sm:$0xff]
    %v237 = vld [vmem:[%s2 + $0x188] sm:$0xff]
    %v238 = vld [vmem:[%s2 + $0x190] sm:$0xff]
    %v239 = vld [vmem:[%s2 + $0x198] sm:$0xff]
    %v240 = vld [vmem:[%s2 + $0x1a0] sm:$0xff]
    %v241 = vld [vmem:[%s2 + $0x1a8] sm:$0xff]
    %v242 = vld [vmem:[%s2 + $0x1b0] sm:$0xff]
    %v243 = vld [vmem:[%s2 + $0x1b8] sm:$0xff]
    %v244 = vld [vmem:[%s2 + $0x1c0] sm:$0xff]
    %v245 = vld [vmem:[%s2 + $0x1c8] sm:$0xff]
    %v246 = vld [vmem:[%s2 + $0x1d0] sm:$0xff]
    %v247 = vld [vmem:[%s2 + $0x1d8] sm:$0xff]
    %v248 = vld [vmem:[%s2 + $0x1e0] sm:$0xff]
    %v249 = vld [vmem:[%s2 + $0x1e8] sm:$0xff]
    %v250 = vld [vmem:[%s2 + $0x1f0] sm:$0xff]
    %v251 = vld [vmem:[%s2 + $0x1f8] sm:$0xff]
    %253 = vset.pattern.permute.xlu0 0
    %254 = vperm.xlu0 %253, %v188
    %v255 = vpop.permute.xlu0 %254
    %258 = vset.pattern.permute.xlu0 0
    %259 = vperm.xlu0 %258, %v189
    %v260 = vpop.permute.xlu0 %259
    %263 = vset.pattern.permute.xlu0 0
    %264 = vperm.xlu0 %263, %v190
    %v265 = vpop.permute.xlu0 %264
    %268 = vset.pattern.permute.xlu0 0
    %269 = vperm.xlu0 %268, %v191
    %v270 = vpop.permute.xlu0 %269
    %273 = vset.pattern.permute.xlu0 0
    %274 = vperm.xlu0 %273, %v192
    %v275 = vpop.permute.xlu0 %274
    %278 = vset.pattern.permute.xlu0 0
    %279 = vperm.xlu0 %278, %v193
    %v280 = vpop.permute.xlu0 %279
    %283 = vset.pattern.permute.xlu0 0
    %284 = vperm.xlu0 %283, %v194
    %v285 = vpop.permute.xlu0 %284
    %288 = vset.pattern.permute.xlu0 0
    %289 = vperm.xlu0 %288, %v195
    %v290 = vpop.permute.xlu0 %289
    %293 = vset.pattern.permute.xlu0 0
    %294 = vperm.xlu0 %293, %v196
    %v295 = vpop.permute.xlu0 %294
    %298 = vset.pattern.permute.xlu0 0
    %299 = vperm.xlu0 %298, %v197
    %v300 = vpop.permute.xlu0 %299
    %303 = vset.pattern.permute.xlu0 0
    %304 = vperm.xlu0 %303, %v198
    %v305 = vpop.permute.xlu0 %304
    %308 = vset.pattern.permute.xlu0 0
    %309 = vperm.xlu0 %308, %v199
    %v310 = vpop.permute.xlu0 %309
    %313 = vset.pattern.permute.xlu0 0
    %314 = vperm.xlu0 %313, %v200
    %v315 = vpop.permute.xlu0 %314
    %318 = vset.pattern.permute.xlu0 0
    %319 = vperm.xlu0 %318, %v201
    %v320 = vpop.permute.xlu0 %319
    %323 = vset.pattern.permute.xlu0 0
    %324 = vperm.xlu0 %323, %v202
    %v325 = vpop.permute.xlu0 %324
    %328 = vset.pattern.permute.xlu0 0
    %329 = vperm.xlu0 %328, %v203
    %v330 = vpop.permute.xlu0 %329
    %333 = vset.pattern.permute.xlu0 0
    %334 = vperm.xlu0 %333, %v204
    %v335 = vpop.permute.xlu0 %334
    %338 = vset.pattern.permute.xlu0 0
    %339 = vperm.xlu0 %338, %v205
    %v340 = vpop.permute.xlu0 %339
    %343 = vset.pattern.permute.xlu0 0
    %344 = vperm.xlu0 %343, %v206
    %v345 = vpop.permute.xlu0 %344
    %348 = vset.pattern.permute.xlu0 0
    %349 = vperm.xlu0 %348, %v207
    %v350 = vpop.permute.xlu0 %349
    %353 = vset.pattern.permute.xlu0 0
    %354 = vperm.xlu0 %353, %v208
    %v355 = vpop.permute.xlu0 %354
    %358 = vset.pattern.permute.xlu0 0
    %359 = vperm.xlu0 %358, %v209
    %v360 = vpop.permute.xlu0 %359
    %363 = vset.pattern.permute.xlu0 0
    %364 = vperm.xlu0 %363, %v210
    %v365 = vpop.permute.xlu0 %364
    %368 = vset.pattern.permute.xlu0 0
    %369 = vperm.xlu0 %368, %v211
    %v370 = vpop.permute.xlu0 %369
    %373 = vset.pattern.permute.xlu0 0
    %374 = vperm.xlu0 %373, %v212
    %v375 = vpop.permute.xlu0 %374
    %378 = vset.pattern.permute.xlu0 0
    %379 = vperm.xlu0 %378, %v213
    %v380 = vpop.permute.xlu0 %379
    %383 = vset.pattern.permute.xlu0 0
    %384 = vperm.xlu0 %383, %v214
    %v385 = vpop.permute.xlu0 %384
    %388 = vset.pattern.permute.xlu0 0
    %389 = vperm.xlu0 %388, %v215
    %v390 = vpop.permute.xlu0 %389
    %393 = vset.pattern.permute.xlu0 0
    %394 = vperm.xlu0 %393, %v216
    %v395 = vpop.permute.xlu0 %394
    %398 = vset.pattern.permute.xlu0 0
    %399 = vperm.xlu0 %398, %v217
    %v400 = vpop.permute.xlu0 %399
    %403 = vset.pattern.permute.xlu0 0
    %404 = vperm.xlu0 %403, %v218
    %v405 = vpop.permute.xlu0 %404
    %408 = vset.pattern.permute.xlu0 0
    %409 = vperm.xlu0 %408, %v219
    %v410 = vpop.permute.xlu0 %409
    %413 = vset.pattern.permute.xlu0 0
    %414 = vperm.xlu0 %413, %v220
    %v415 = vpop.permute.xlu0 %414
    %418 = vset.pattern.permute.xlu0 0
    %419 = vperm.xlu0 %418, %v221
    %v420 = vpop.permute.xlu0 %419
    %423 = vset.pattern.permute.xlu0 0
    %424 = vperm.xlu0 %423, %v222
    %v425 = vpop.permute.xlu0 %424
    %428 = vset.pattern.permute.xlu0 0
    %429 = vperm.xlu0 %428, %v223
    %v430 = vpop.permute.xlu0 %429
    %433 = vset.pattern.permute.xlu0 0
    %434 = vperm.xlu0 %433, %v224
    %v435 = vpop.permute.xlu0 %434
    %438 = vset.pattern.permute.xlu0 0
    %439 = vperm.xlu0 %438, %v225
    %v440 = vpop.permute.xlu0 %439
    %443 = vset.pattern.permute.xlu0 0
    %444 = vperm.xlu0 %443, %v226
    %v445 = vpop.permute.xlu0 %444
    %448 = vset.pattern.permute.xlu0 0
    %449 = vperm.xlu0 %448, %v227
    %v450 = vpop.permute.xlu0 %449
    %453 = vset.pattern.permute.xlu0 0
    %454 = vperm.xlu0 %453, %v228
    %v455 = vpop.permute.xlu0 %454
    %458 = vset.pattern.permute.xlu0 0
    %459 = vperm.xlu0 %458, %v229
    %v460 = vpop.permute.xlu0 %459
    %463 = vset.pattern.permute.xlu0 0
    %464 = vperm.xlu0 %463, %v230
    %v465 = vpop.permute.xlu0 %464
    %468 = vset.pattern.permute.xlu0 0
    %469 = vperm.xlu0 %468, %v231
    %v470 = vpop.permute.xlu0 %469
    %473 = vset.pattern.permute.xlu0 0
    %474 = vperm.xlu0 %473, %v232
    %v475 = vpop.permute.xlu0 %474
    %478 = vset.pattern.permute.xlu0 0
    %479 = vperm.xlu0 %478, %v233
    %v480 = vpop.permute.xlu0 %479
    %483 = vset.pattern.permute.xlu0 0
    %484 = vperm.xlu0 %483, %v234
    %v485 = vpop.permute.xlu0 %484
    %488 = vset.pattern.permute.xlu0 0
    %489 = vperm.xlu0 %488, %v235
    %v490 = vpop.permute.xlu0 %489
    %493 = vset.pattern.permute.xlu0 0
    %494 = vperm.xlu0 %493, %v236
    %v495 = vpop.permute.xlu0 %494
    %498 = vset.pattern.permute.xlu0 0
    %499 = vperm.xlu0 %498, %v237
    %v500 = vpop.permute.xlu0 %499
    %503 = vset.pattern.permute.xlu0 0
    %504 = vperm.xlu0 %503, %v238
    %v505 = vpop.permute.xlu0 %504
    %508 = vset.pattern.permute.xlu0 0
    %509 = vperm.xlu0 %508, %v239
    %v510 = vpop.permute.xlu0 %509
    %513 = vset.pattern.permute.xlu0 0
    %514 = vperm.xlu0 %513, %v240
    %v515 = vpop.permute.xlu0 %514
    %518 = vset.pattern.permute.xlu0 0
    %519 = vperm.xlu0 %518, %v241
    %v520 = vpop.permute.xlu0 %519
    %523 = vset.pattern.permute.xlu0 0
    %524 = vperm.xlu0 %523, %v242
    %v525 = vpop.permute.xlu0 %524
    %528 = vset.pattern.permute.xlu0 0
    %529 = vperm.xlu0 %528, %v243
    %v530 = vpop.permute.xlu0 %529
    %533 = vset.pattern.permute.xlu0 0
    %534 = vperm.xlu0 %533, %v244
    %v535 = vpop.permute.xlu0 %534
    %538 = vset.pattern.permute.xlu0 0
    %539 = vperm.xlu0 %538, %v245
    %v540 = vpop.permute.xlu0 %539
    %543 = vset.pattern.permute.xlu0 0
    %544 = vperm.xlu0 %543, %v246
    %v545 = vpop.permute.xlu0 %544
    %548 = vset.pattern.permute.xlu0 0
    %549 = vperm.xlu0 %548, %v247
    %v550 = vpop.permute.xlu0 %549
    %553 = vset.pattern.permute.xlu0 0
    %554 = vperm.xlu0 %553, %v248
    %v555 = vpop.permute.xlu0 %554
    %558 = vset.pattern.permute.xlu0 0
    %559 = vperm.xlu0 %558, %v249
    %v560 = vpop.permute.xlu0 %559
    %563 = vset.pattern.permute.xlu0 0
    %564 = vperm.xlu0 %563, %v250
    %v565 = vpop.permute.xlu0 %564
    %568 = vset.pattern.permute.xlu0 0
    %569 = vperm.xlu0 %568, %v251
    %v570 = vpop.permute.xlu0 %569
    %v636 = vunpack.c.l.b16 %v108
    %v637 = vunpack.c.l.b16 %v109
    %v638 = vunpack.c.l.b16 %v110
    %v639 = vunpack.c.l.b16 %v111
    %v640 = vunpack.c.l.b16 %v112
    %v641 = vunpack.c.l.b16 %v113
    %v642 = vunpack.c.l.b16 %v114
    %v643 = vunpack.c.l.b16 %v115
    %v644 = vunpack.c.l.b16 %v116
    %v645 = vunpack.c.l.b16 %v117
    %v646 = vunpack.c.l.b16 %v118
    %v647 = vunpack.c.l.b16 %v119
    %v648 = vunpack.c.l.b16 %v120
    %v649 = vunpack.c.l.b16 %v121
    %v650 = vunpack.c.l.b16 %v122
    %v651 = vunpack.c.l.b16 %v123
    %v652 = vunpack.c.l.b16 %v124
    %v653 = vunpack.c.l.b16 %v125
    %v654 = vunpack.c.l.b16 %v126
    %v655 = vunpack.c.l.b16 %v127
    %v656 = vunpack.c.l.b16 %v128
    %v657 = vunpack.c.l.b16 %v129
    %v658 = vunpack.c.l.b16 %v130
    %v659 = vunpack.c.l.b16 %v131
    %v660 = vunpack.c.l.b16 %v132
    %v661 = vunpack.c.l.b16 %v133
    %v662 = vunpack.c.l.b16 %v134
    %v663 = vunpack.c.l.b16 %v135
    %v664 = vunpack.c.l.b16 %v136
    %v665 = vunpack.c.l.b16 %v137
    %v666 = vunpack.c.l.b16 %v138
    %v667 = vunpack.c.l.b16 %v139
    %v668 = vunpack.c.l.b16 %v140
    %v669 = vunpack.c.l.b16 %v141
    %v670 = vunpack.c.l.b16 %v142
    %v671 = vunpack.c.l.b16 %v143
    %v672 = vunpack.c.l.b16 %v144
    %v673 = vunpack.c.l.b16 %v145
    %v674 = vunpack.c.l.b16 %v146
    %v675 = vunpack.c.l.b16 %v147
    %v676 = vunpack.c.l.b16 %v148
    %v677 = vunpack.c.l.b16 %v149
    %v678 = vunpack.c.l.b16 %v150
    %v679 = vunpack.c.l.b16 %v151
    %v680 = vunpack.c.l.b16 %v152
    %v681 = vunpack.c.l.b16 %v153
    %v682 = vunpack.c.l.b16 %v154
    %v683 = vunpack.c.l.b16 %v155
    %v684 = vunpack.c.l.b16 %v156
    %v685 = vunpack.c.l.b16 %v157
    %v686 = vunpack.c.l.b16 %v158
    %v687 = vunpack.c.l.b16 %v159
    %v688 = vunpack.c.l.b16 %v160
    %v689 = vunpack.c.l.b16 %v161
    %v690 = vunpack.c.l.b16 %v162
    %v691 = vunpack.c.l.b16 %v163
    %v692 = vunpack.c.l.b16 %v164
    %v693 = vunpack.c.l.b16 %v165
    %v694 = vunpack.c.l.b16 %v166
    %v695 = vunpack.c.l.b16 %v167
    %v696 = vunpack.c.l.b16 %v168
    %v697 = vunpack.c.l.b16 %v169
    %v698 = vunpack.c.l.b16 %v170
    %v699 = vunpack.c.l.b16 %v171
    %v700 = vpack.c.b16 %v637, %v636
    %v701 = vpack.c.b16 %v639, %v638
    %v702 = vpack.c.b16 %v641, %v640
    %v703 = vpack.c.b16 %v643, %v642
    %v704 = vpack.c.b16 %v645, %v644
    %v705 = vpack.c.b16 %v647, %v646
    %v706 = vpack.c.b16 %v649, %v648
    %v707 = vpack.c.b16 %v651, %v650
    %v708 = vpack.c.b16 %v653, %v652
    %v709 = vpack.c.b16 %v655, %v654
    %v710 = vpack.c.b16 %v657, %v656
    %v711 = vpack.c.b16 %v659, %v658
    %v712 = vpack.c.b16 %v661, %v660
    %v713 = vpack.c.b16 %v663, %v662
    %v714 = vpack.c.b16 %v665, %v664
    %v715 = vpack.c.b16 %v667, %v666
    %v716 = vpack.c.b16 %v669, %v668
    %v717 = vpack.c.b16 %v671, %v670
    %v718 = vpack.c.b16 %v673, %v672
    %v719 = vpack.c.b16 %v675, %v674
    %v720 = vpack.c.b16 %v677, %v676
    %v721 = vpack.c.b16 %v679, %v678
    %v722 = vpack.c.b16 %v681, %v680
    %v723 = vpack.c.b16 %v683, %v682
    %v724 = vpack.c.b16 %v685, %v684
    %v725 = vpack.c.b16 %v687, %v686
    %v726 = vpack.c.b16 %v689, %v688
    %v727 = vpack.c.b16 %v691, %v690
    %v728 = vpack.c.b16 %v693, %v692
    %v729 = vpack.c.b16 %v695, %v694
    %v730 = vpack.c.b16 %v697, %v696
    %v731 = vpack.c.b16 %v699, %v698
    %764 = vmatprep.subr.bf16.mxu0 %v173
    %765 = vmatpush1.bf16.msra.mxu0 %v172
    %766 = vmatprep.subr.bf16.mxu0 %v175
    %767 = vmatpush1.bf16.msra.mxu0 %v174
    %768 = vmatprep.subr.bf16.mxu0 %v177
    %769 = vmatpush1.bf16.msra.mxu0 %v176
    %770 = vmatprep.subr.bf16.mxu0 %v179
    %771 = vmatpush1.bf16.msra.mxu0 %v178
    %772 = vmatprep.subr.bf16.mxu0 %v181
    %773 = vmatpush1.bf16.msra.mxu0 %v180
    %774 = vmatprep.subr.bf16.mxu0 %v183
    %775 = vmatpush1.bf16.msra.mxu0 %v182
    %776 = vmatprep.subr.bf16.mxu0 %v185
    %777 = vmatpush1.bf16.msra.mxu0 %v184
    %778 = vmatprep.subr.bf16.mxu0 %v187
    %779 = vmatpush1.bf16.msra.mxu0 %v186
    %780 = vmatprep.subr.bf16.mxu0 0
    %781 = vmatpush1.bf16.msra.mxu0 0
    %782 = vmatprep.subr.bf16.mxu0 0
    %783 = vmatpush1.bf16.msra.mxu0 0
    %784 = vmatprep.subr.bf16.mxu0 0
    %785 = vmatpush1.bf16.msra.mxu0 0
    %786 = vmatprep.subr.bf16.mxu0 0
    %787 = vmatpush1.bf16.msra.mxu0 0
    %788 = vmatprep.subr.bf16.mxu0 0
    %789 = vmatpush1.bf16.msra.mxu0 0
    %790 = vmatprep.subr.bf16.mxu0 0
    %791 = vmatpush1.bf16.msra.mxu0 0
    %792 = vmatprep.subr.bf16.mxu0 0
    %793 = vmatpush1.bf16.msra.mxu0 0
    %794 = vmatprep.subr.bf16.mxu0 0
    %795 = vmatpush1.bf16.msra.mxu0 0
    %796 = vmatprep.mubr.bf16.mxu0 0
    %797 = vmatmul.mubr.bf16.gmra.mrb[0].mxu0 %v700
    %v798 = vpop.f32.mrb[0].mxu0
    %v799 = vadd.f32 %v255, %v798
    %v800 = vpop.f32.mrb[0].mxu0
    %v801 = vadd.f32 %v255, %v800
    %v802 = vpop.f32.mrb[0].mxu0
    %v803 = vadd.f32 %v260, %v802
    %v804 = vpop.f32.mrb[0].mxu0
    %v805 = vadd.f32 %v260, %v804
    %806 = vmatprep.mubr.bf16.mxu0 0
    %807 = vmatmul.mubr.bf16.gmra.mrb[0].mxu0 %v701
    %v808 = vpop.f32.mrb[0].mxu0
    %v809 = vadd.f32 %v265, %v808
    %v810 = vpop.f32.mrb[0].mxu0
    %v811 = vadd.f32 %v265, %v810
    %v812 = vpop.f32.mrb[0].mxu0
    %v813 = vadd.f32 %v270, %v812
    %v814 = vpop.f32.mrb[0].mxu0
    %v815 = vadd.f32 %v270, %v814
    %816 = vmatprep.mubr.bf16.mxu0 0
    %817 = vmatmul.mubr.bf16.gmra.mrb[0].mxu0 %v702
    %v818 = vpop.f32.mrb[0].mxu0
    %v819 = vadd.f32 %v275, %v818
    %v820 = vpop.f32.mrb[0].mxu0
    %v821 = vadd.f32 %v275, %v820
    %v822 = vpop.f32.mrb[0].mxu0
    %v823 = vadd.f32 %v280, %v822
    %v824 = vpop.f32.mrb[0].mxu0
    %v825 = vadd.f32 %v280, %v824
    %826 = vmatprep.mubr.bf16.mxu0 0
    %827 = vmatmul.mubr.bf16.gmra.mrb[0].mxu0 %v703
    %v828 = vpop.f32.mrb[0].mxu0
    %v829 = vadd.f32 %v285, %v828
    %v830 = vpop.f32.mrb[0].mxu0
    %v831 = vadd.f32 %v285, %v830
    %v832 = vpop.f32.mrb[0].mxu0
    %v833 = vadd.f32 %v290, %v832
    %v834 = vpop.f32.mrb[0].mxu0
    %v835 = vadd.f32 %v290, %v834
    %836 = vmatprep.mubr.bf16.mxu0 0
    %837 = vmatmul.mubr.bf16.gmra.mrb[0].mxu0 %v704
    %v838 = vpop.f32.mrb[0].mxu0
    %v839 = vadd.f32 %v295, %v838
    %v840 = vpop.f32.mrb[0].mxu0
    %v841 = vadd.f32 %v295, %v840
    %v842 = vpop.f32.mrb[0].mxu0
    %v843 = vadd.f32 %v300, %v842
    %v844 = vpop.f32.mrb[0].mxu0
    %v845 = vadd.f32 %v300, %v844
    %846 = vmatprep.mubr.bf16.mxu0 0
    %847 = vmatmul.mubr.bf16.gmra.mrb[0].mxu0 %v705
    %v848 = vpop.f32.mrb[0].mxu0
    %v849 = vadd.f32 %v305, %v848
    %v850 = vpop.f32.mrb[0].mxu0
    %v851 = vadd.f32 %v305, %v850
    %v852 = vpop.f32.mrb[0].mxu0
    %v853 = vadd.f32 %v310, %v852
    %v854 = vpop.f32.mrb[0].mxu0
    %v855 = vadd.f32 %v310, %v854
    %856 = vmatprep.mubr.bf16.mxu0 0
    %857 = vmatmul.mubr.bf16.gmra.mrb[0].mxu0 %v706
    %v858 = vpop.f32.mrb[0].mxu0
    %v859 = vadd.f32 %v315, %v858
    %v860 = vpop.f32.mrb[0].mxu0
    %v861 = vadd.f32 %v315, %v860
    %v862 = vpop.f32.mrb[0].mxu0
    %v863 = vadd.f32 %v320, %v862
    %v864 = vpop.f32.mrb[0].mxu0
    %v865 = vadd.f32 %v320, %v864
    %866 = vmatprep.mubr.bf16.mxu0 0
    %867 = vmatmul.mubr.bf16.gmra.mrb[0].mxu0 %v707
    %v868 = vpop.f32.mrb[0].mxu0
    %v869 = vadd.f32 %v325, %v868
    %v870 = vpop.f32.mrb[0].mxu0
    %v871 = vadd.f32 %v325, %v870
    %v872 = vpop.f32.mrb[0].mxu0
    %v873 = vadd.f32 %v330, %v872
    %v874 = vpop.f32.mrb[0].mxu0
    %v875 = vadd.f32 %v330, %v874
    %876 = vmatprep.mubr.bf16.mxu0 0
    %877 = vmatmul.mubr.bf16.gmra.mrb[0].mxu0 %v708
    %v878 = vpop.f32.mrb[0].mxu0
    %v879 = vadd.f32 %v335, %v878
    %v880 = vpop.f32.mrb[0].mxu0
    %v881 = vadd.f32 %v335, %v880
    %v882 = vpop.f32.mrb[0].mxu0
    %v883 = vadd.f32 %v340, %v882
    %v884 = vpop.f32.mrb[0].mxu0
    %v885 = vadd.f32 %v340, %v884
    %886 = vmatprep.mubr.bf16.mxu0 0
    %887 = vmatmul.mubr.bf16.gmra.mrb[0].mxu0 %v709
    %v888 = vpop.f32.mrb[0].mxu0
    %v889 = vadd.f32 %v345, %v888
    %v890 = vpop.f32.mrb[0].mxu0
    %v891 = vadd.f32 %v345, %v890
    %v892 = vpop.f32.mrb[0].mxu0
    %v893 = vadd.f32 %v350, %v892
    %v894 = vpop.f32.mrb[0].mxu0
    %v895 = vadd.f32 %v350, %v894
    %896 = vmatprep.mubr.bf16.mxu0 0
    %897 = vmatmul.mubr.bf16.gmra.mrb[0].mxu0 %v710
    %v898 = vpop.f32.mrb[0].mxu0
    %v899 = vadd.f32 %v355, %v898
    %v900 = vpop.f32.mrb[0].mxu0
    %v901 = vadd.f32 %v355, %v900
    %v902 = vpop.f32.mrb[0].mxu0
    %v903 = vadd.f32 %v360, %v902
    %v904 = vpop.f32.mrb[0].mxu0
    %v905 = vadd.f32 %v360, %v904
    %906 = vmatprep.mubr.bf16.mxu0 0
    %907 = vmatmul.mubr.bf16.gmra.mrb[0].mxu0 %v711
    %v908 = vpop.f32.mrb[0].mxu0
    %v909 = vadd.f32 %v365, %v908
    %v910 = vpop.f32.mrb[0].mxu0
    %v911 = vadd.f32 %v365, %v910
    %v912 = vpop.f32.mrb[0].mxu0
    %v913 = vadd.f32 %v370, %v912
    %v914 = vpop.f32.mrb[0].mxu0
    %v915 = vadd.f32 %v370, %v914
    %916 = vmatprep.mubr.bf16.mxu0 0
    %917 = vmatmul.mubr.bf16.gmra.mrb[0].mxu0 %v712
    %v918 = vpop.f32.mrb[0].mxu0
    %v919 = vadd.f32 %v375, %v918
    %v920 = vpop.f32.mrb[0].mxu0
    %v921 = vadd.f32 %v375, %v920
    %v922 = vpop.f32.mrb[0].mxu0
    %v923 = vadd.f32 %v380, %v922
    %v924 = vpop.f32.mrb[0].mxu0
    %v925 = vadd.f32 %v380, %v924
    %926 = vmatprep.mubr.bf16.mxu0 0
    %927 = vmatmul.mubr.bf16.gmra.mrb[0].mxu0 %v713
    %v928 = vpop.f32.mrb[0].mxu0
    %v929 = vadd.f32 %v385, %v928
    %v930 = vpop.f32.mrb[0].mxu0
    %v931 = vadd.f32 %v385, %v930
    %v932 = vpop.f32.mrb[0].mxu0
    %v933 = vadd.f32 %v390, %v932
    %v934 = vpop.f32.mrb[0].mxu0
    %v935 = vadd.f32 %v390, %v934
    %936 = vmatprep.mubr.bf16.mxu0 0
    %937 = vmatmul.mubr.bf16.gmra.mrb[0].mxu0 %v714
    %v938 = vpop.f32.mrb[0].mxu0
    %v939 = vadd.f32 %v395, %v938
    %v940 = vpop.f32.mrb[0].mxu0
    %v941 = vadd.f32 %v395, %v940
    %v942 = vpop.f32.mrb[0].mxu0
    %v943 = vadd.f32 %v400, %v942
    %v944 = vpop.f32.mrb[0].mxu0
    %v945 = vadd.f32 %v400, %v944
    %946 = vmatprep.mubr.bf16.mxu0 0
    %947 = vmatmul.mubr.bf16.gmra.mrb[0].mxu0 %v715
    %v948 = vpop.f32.mrb[0].mxu0
    %v949 = vadd.f32 %v405, %v948
    %v950 = vpop.f32.mrb[0].mxu0
    %v951 = vadd.f32 %v405, %v950
    %v952 = vpop.f32.mrb[0].mxu0
    %v953 = vadd.f32 %v410, %v952
    %v954 = vpop.f32.mrb[0].mxu0
    %v955 = vadd.f32 %v410, %v954
    %956 = vmatprep.mubr.bf16.mxu0 0
    %957 = vmatmul.mubr.bf16.gmra.mrb[0].mxu0 %v716
    %v958 = vpop.f32.mrb[0].mxu0
    %v959 = vadd.f32 %v415, %v958
    %v960 = vpop.f32.mrb[0].mxu0
    %v961 = vadd.f32 %v415, %v960
    %v962 = vpop.f32.mrb[0].mxu0
    %v963 = vadd.f32 %v420, %v962
    %v964 = vpop.f32.mrb[0].mxu0
    %v965 = vadd.f32 %v420, %v964
    %966 = vmatprep.mubr.bf16.mxu0 0
    %967 = vmatmul.mubr.bf16.gmra.mrb[0].mxu0 %v717
    %v968 = vpop.f32.mrb[0].mxu0
    %v969 = vadd.f32 %v425, %v968
    %v970 = vpop.f32.mrb[0].mxu0
    %v971 = vadd.f32 %v425, %v970
    %v972 = vpop.f32.mrb[0].mxu0
    %v973 = vadd.f32 %v430, %v972
    %v974 = vpop.f32.mrb[0].mxu0
    %v975 = vadd.f32 %v430, %v974
    %976 = vmatprep.mubr.bf16.mxu0 0
    %977 = vmatmul.mubr.bf16.gmra.mrb[0].mxu0 %v718
    %v978 = vpop.f32.mrb[0].mxu0
    %v979 = vadd.f32 %v435, %v978
    %v980 = vpop.f32.mrb[0].mxu0
    %v981 = vadd.f32 %v435, %v980
    %v982 = vpop.f32.mrb[0].mxu0
    %v983 = vadd.f32 %v440, %v982
    %v984 = vpop.f32.mrb[0].mxu0
    %v985 = vadd.f32 %v440, %v984
    %986 = vmatprep.mubr.bf16.mxu0 0
    %987 = vmatmul.mubr.bf16.gmra.mrb[0].mxu0 %v719
    %v988 = vpop.f32.mrb[0].mxu0
    %v989 = vadd.f32 %v445, %v988
    %v990 = vpop.f32.mrb[0].mxu0
    %v991 = vadd.f32 %v445, %v990
    %v992 = vpop.f32.mrb[0].mxu0
    %v993 = vadd.f32 %v450, %v992
    %v994 = vpop.f32.mrb[0].mxu0
    %v995 = vadd.f32 %v450, %v994
    %996 = vmatprep.mubr.bf16.mxu0 0
    %997 = vmatmul.mubr.bf16.gmra.mrb[0].mxu0 %v720
    %v998 = vpop.f32.mrb[0].mxu0
    %v999 = vadd.f32 %v455, %v998
    %v1000 = vpop.f32.mrb[0].mxu0
    %v1001 = vadd.f32 %v455, %v1000
    %v1002 = vpop.f32.mrb[0].mxu0
    %v1003 = vadd.f32 %v460, %v1002
    %v1004 = vpop.f32.mrb[0].mxu0
    %v1005 = vadd.f32 %v460, %v1004
    %1006 = vmatprep.mubr.bf16.mxu0 0
    %1007 = vmatmul.mubr.bf16.gmra.mrb[0].mxu0 %v721
    %v1008 = vpop.f32.mrb[0].mxu0
    %v1009 = vadd.f32 %v465, %v1008
    %v1010 = vpop.f32.mrb[0].mxu0
    %v1011 = vadd.f32 %v465, %v1010
    %v1012 = vpop.f32.mrb[0].mxu0
    %v1013 = vadd.f32 %v470, %v1012
    %v1014 = vpop.f32.mrb[0].mxu0
    %v1015 = vadd.f32 %v470, %v1014
    %1016 = vmatprep.mubr.bf16.mxu0 0
    %1017 = vmatmul.mubr.bf16.gmra.mrb[0].mxu0 %v722
    %v1018 = vpop.f32.mrb[0].mxu0
    %v1019 = vadd.f32 %v475, %v1018
    %v1020 = vpop.f32.mrb[0].mxu0
    %v1021 = vadd.f32 %v475, %v1020
    %v1022 = vpop.f32.mrb[0].mxu0
    %v1023 = vadd.f32 %v480, %v1022
    %v1024 = vpop.f32.mrb[0].mxu0
    %v1025 = vadd.f32 %v480, %v1024
    %1026 = vmatprep.mubr.bf16.mxu0 0
    %1027 = vmatmul.mubr.bf16.gmra.mrb[0].mxu0 %v723
    %v1028 = vpop.f32.mrb[0].mxu0
    %v1029 = vadd.f32 %v485, %v1028
    %v1030 = vpop.f32.mrb[0].mxu0
    %v1031 = vadd.f32 %v485, %v1030
    %v1032 = vpop.f32.mrb[0].mxu0
    %v1033 = vadd.f32 %v490, %v1032
    %v1034 = vpop.f32.mrb[0].mxu0
    %v1035 = vadd.f32 %v490, %v1034
    %1036 = vmatprep.mubr.bf16.mxu0 0
    %1037 = vmatmul.mubr.bf16.gmra.mrb[0].mxu0 %v724
    %v1038 = vpop.f32.mrb[0].mxu0
    %v1039 = vadd.f32 %v495, %v1038
    %v1040 = vpop.f32.mrb[0].mxu0
    %v1041 = vadd.f32 %v495, %v1040
    %v1042 = vpop.f32.mrb[0].mxu0
    %v1043 = vadd.f32 %v500, %v1042
    %v1044 = vpop.f32.mrb[0].mxu0
    %v1045 = vadd.f32 %v500, %v1044
    %1046 = vmatprep.mubr.bf16.mxu0 0
    %1047 = vmatmul.mubr.bf16.gmra.mrb[0].mxu0 %v725
    %v1048 = vpop.f32.mrb[0].mxu0
    %v1049 = vadd.f32 %v505, %v1048
    %v1050 = vpop.f32.mrb[0].mxu0
    %v1051 = vadd.f32 %v505, %v1050
    %v1052 = vpop.f32.mrb[0].mxu0
    %v1053 = vadd.f32 %v510, %v1052
    %v1054 = vpop.f32.mrb[0].mxu0
    %v1055 = vadd.f32 %v510, %v1054
    %1056 = vmatprep.mubr.bf16.mxu0 0
    %1057 = vmatmul.mubr.bf16.gmra.mrb[0].mxu0 %v726
    %v1058 = vpop.f32.mrb[0].mxu0
    %v1059 = vadd.f32 %v515, %v1058
    %v1060 = vpop.f32.mrb[0].mxu0
    %v1061 = vadd.f32 %v515, %v1060
    %v1062 = vpop.f32.mrb[0].mxu0
    %v1063 = vadd.f32 %v520, %v1062
    %v1064 = vpop.f32.mrb[0].mxu0
    %v1065 = vadd.f32 %v520, %v1064
    %1066 = vmatprep.mubr.bf16.mxu0 0
    %1067 = vmatmul.mubr.bf16.gmra.mrb[0].mxu0 %v727
    %v1068 = vpop.f32.mrb[0].mxu0
    %v1069 = vadd.f32 %v525, %v1068
    %v1070 = vpop.f32.mrb[0].mxu0
    %v1071 = vadd.f32 %v525, %v1070
    %v1072 = vpop.f32.mrb[0].mxu0
    %v1073 = vadd.f32 %v530, %v1072
    %v1074 = vpop.f32.mrb[0].mxu0
    %v1075 = vadd.f32 %v530, %v1074
    %1076 = vmatprep.mubr.bf16.mxu0 0
    %1077 = vmatmul.mubr.bf16.gmra.mrb[0].mxu0 %v728
    %v1078 = vpop.f32.mrb[0].mxu0
    %v1079 = vadd.f32 %v535, %v1078
    %v1080 = vpop.f32.mrb[0].mxu0
    %v1081 = vadd.f32 %v535, %v1080
    %v1082 = vpop.f32.mrb[0].mxu0
    %v1083 = vadd.f32 %v540, %v1082
    %v1084 = vpop.f32.mrb[0].mxu0
    %v1085 = vadd.f32 %v540, %v1084
    %1086 = vmatprep.mubr.bf16.mxu0 0
    %1087 = vmatmul.mubr.bf16.gmra.mrb[0].mxu0 %v729
    %v1088 = vpop.f32.mrb[0].mxu0
    %v1089 = vadd.f32 %v545, %v1088
    %v1090 = vpop.f32.mrb[0].mxu0
    %v1091 = vadd.f32 %v545, %v1090
    %v1092 = vpop.f32.mrb[0].mxu0
    %v1093 = vadd.f32 %v550, %v1092
    %v1094 = vpop.f32.mrb[0].mxu0
    %v1095 = vadd.f32 %v550, %v1094
    %1096 = vmatprep.mubr.bf16.mxu0 0
    %1097 = vmatmul.mubr.bf16.gmra.mrb[0].mxu0 %v730
    %v1098 = vpop.f32.mrb[0].mxu0
    %v1099 = vadd.f32 %v555, %v1098
    %v1100 = vpop.f32.mrb[0].mxu0
    %v1101 = vadd.f32 %v555, %v1100
    %v1102 = vpop.f32.mrb[0].mxu0
    %v1103 = vadd.f32 %v560, %v1102
    %v1104 = vpop.f32.mrb[0].mxu0
    %v1105 = vadd.f32 %v560, %v1104
    %1106 = vmatprep.mubr.bf16.mxu0 0
    %1107 = vmatmul.mubr.bf16.gmra.mrb[0].mxu0 %v731
    %v1108 = vpop.f32.mrb[0].mxu0
    %v1109 = vadd.f32 %v565, %v1108
    %v1110 = vpop.f32.mrb[0].mxu0
    %v1111 = vadd.f32 %v565, %v1110
    %v1112 = vpop.f32.mrb[0].mxu0
    %v1113 = vadd.f32 %v570, %v1112
    %v1114 = vpop.f32.mrb[0].mxu0
    %v1115 = vadd.f32 %v570, %v1114
    %1116 = vdwg.mxu0
    %v1117 = vxor.u32 %v799, 2147483648
    %v1118 = vxor.u32 %v801, 2147483648
    %v1119 = vxor.u32 %v803, 2147483648
    %v1120 = vxor.u32 %v805, 2147483648
    %v1121 = vxor.u32 %v809, 2147483648
    %v1122 = vxor.u32 %v811, 2147483648
    %v1123 = vxor.u32 %v813, 2147483648
    %v1124 = vxor.u32 %v815, 2147483648
    %v1125 = vxor.u32 %v819, 2147483648
    %v1126 = vxor.u32 %v821, 2147483648
    %v1127 = vxor.u32 %v823, 2147483648
    %v1128 = vxor.u32 %v825, 2147483648
    %v1129 = vxor.u32 %v829, 2147483648
    %v1130 = vxor.u32 %v831, 2147483648
    %v1131 = vxor.u32 %v833, 2147483648
    %v1132 = vxor.u32 %v835, 2147483648
    %v1133 = vxor.u32 %v839, 2147483648
    %v1134 = vxor.u32 %v841, 2147483648
    %v1135 = vxor.u32 %v843, 2147483648
    %v1136 = vxor.u32 %v845, 2147483648
    %v1137 = vxor.u32 %v849, 2147483648
    %v1138 = vxor.u32 %v851, 2147483648
    %v1139 = vxor.u32 %v853, 2147483648
    %v1140 = vxor.u32 %v855, 2147483648
    %v1141 = vxor.u32 %v859, 2147483648
    %v1142 = vxor.u32 %v861, 2147483648
    %v1143 = vxor.u32 %v863, 2147483648
    %v1144 = vxor.u32 %v865, 2147483648
    %v1145 = vxor.u32 %v869, 2147483648
    %v1146 = vxor.u32 %v871, 2147483648
    %v1147 = vxor.u32 %v873, 2147483648
    %v1148 = vxor.u32 %v875, 2147483648
    %v1149 = vxor.u32 %v879, 2147483648
    %v1150 = vxor.u32 %v881, 2147483648
    %v1151 = vxor.u32 %v883, 2147483648
    %v1152 = vxor.u32 %v885, 2147483648
    %v1153 = vxor.u32 %v889, 2147483648
    %v1154 = vxor.u32 %v891, 2147483648
    %v1155 = vxor.u32 %v893, 2147483648
    %v1156 = vxor.u32 %v895, 2147483648
    %v1157 = vxor.u32 %v899, 2147483648
    %v1158 = vxor.u32 %v901, 2147483648
    %v1159 = vxor.u32 %v903, 2147483648
    %v1160 = vxor.u32 %v905, 2147483648
    %v1161 = vxor.u32 %v909, 2147483648
    %v1162 = vxor.u32 %v911, 2147483648
    %v1163 = vxor.u32 %v913, 2147483648
    %v1164 = vxor.u32 %v915, 2147483648
    %v1165 = vxor.u32 %v919, 2147483648
    %v1166 = vxor.u32 %v921, 2147483648
    %v1167 = vxor.u32 %v923, 2147483648
    %v1168 = vxor.u32 %v925, 2147483648
    %v1169 = vxor.u32 %v929, 2147483648
    %v1170 = vxor.u32 %v931, 2147483648
    %v1171 = vxor.u32 %v933, 2147483648
    %v1172 = vxor.u32 %v935, 2147483648
    %v1173 = vxor.u32 %v939, 2147483648
    %v1174 = vxor.u32 %v941, 2147483648
    %v1175 = vxor.u32 %v943, 2147483648
    %v1176 = vxor.u32 %v945, 2147483648
    %v1177 = vxor.u32 %v949, 2147483648
    %v1178 = vxor.u32 %v951, 2147483648
    %v1179 = vxor.u32 %v953, 2147483648
    %v1180 = vxor.u32 %v955, 2147483648
    %v1181 = vxor.u32 %v959, 2147483648
    %v1182 = vxor.u32 %v961, 2147483648
    %v1183 = vxor.u32 %v963, 2147483648
    %v1184 = vxor.u32 %v965, 2147483648
    %v1185 = vxor.u32 %v969, 2147483648
    %v1186 = vxor.u32 %v971, 2147483648
    %v1187 = vxor.u32 %v973, 2147483648
    %v1188 = vxor.u32 %v975, 2147483648
    %v1189 = vxor.u32 %v979, 2147483648
    %v1190 = vxor.u32 %v981, 2147483648
    %v1191 = vxor.u32 %v983, 2147483648
    %v1192 = vxor.u32 %v985, 2147483648
    %v1193 = vxor.u32 %v989, 2147483648
    %v1194 = vxor.u32 %v991, 2147483648
    %v1195 = vxor.u32 %v993, 2147483648
    %v1196 = vxor.u32 %v995, 2147483648
    %v1197 = vxor.u32 %v999, 2147483648
    %v1198 = vxor.u32 %v1001, 2147483648
    %v1199 = vxor.u32 %v1003, 2147483648
    %v1200 = vxor.u32 %v1005, 2147483648
    %v1201 = vxor.u32 %v1009, 2147483648
    %v1202 = vxor.u32 %v1011, 2147483648
    %v1203 = vxor.u32 %v1013, 2147483648
    %v1204 = vxor.u32 %v1015, 2147483648
    %v1205 = vxor.u32 %v1019, 2147483648
    %v1206 = vxor.u32 %v1021, 2147483648
    %v1207 = vxor.u32 %v1023, 2147483648
    %v1208 = vxor.u32 %v1025, 2147483648
    %v1209 = vxor.u32 %v1029, 2147483648
    %v1210 = vxor.u32 %v1031, 2147483648
    %v1211 = vxor.u32 %v1033, 2147483648
    %v1212 = vxor.u32 %v1035, 2147483648
    %v1213 = vxor.u32 %v1039, 2147483648
    %v1214 = vxor.u32 %v1041, 2147483648
    %v1215 = vxor.u32 %v1043, 2147483648
    %v1216 = vxor.u32 %v1045, 2147483648
    %v1217 = vxor.u32 %v1049, 2147483648
    %v1218 = vxor.u32 %v1051, 2147483648
    %v1219 = vxor.u32 %v1053, 2147483648
    %v1220 = vxor.u32 %v1055, 2147483648
    %v1221 = vxor.u32 %v1059, 2147483648
    %v1222 = vxor.u32 %v1061, 2147483648
    %v1223 = vxor.u32 %v1063, 2147483648
    %v1224 = vxor.u32 %v1065, 2147483648
    %v1225 = vxor.u32 %v1069, 2147483648
    %v1226 = vxor.u32 %v1071, 2147483648
    %v1227 = vxor.u32 %v1073, 2147483648
    %v1228 = vxor.u32 %v1075, 2147483648
    %v1229 = vxor.u32 %v1079, 2147483648
    %v1230 = vxor.u32 %v1081, 2147483648
    %v1231 = vxor.u32 %v1083, 2147483648
    %v1232 = vxor.u32 %v1085, 2147483648
    %v1233 = vxor.u32 %v1089, 2147483648
    %v1234 = vxor.u32 %v1091, 2147483648
    %v1235 = vxor.u32 %v1093, 2147483648
    %v1236 = vxor.u32 %v1095, 2147483648
    %v1237 = vxor.u32 %v1099, 2147483648
    %v1238 = vxor.u32 %v1101, 2147483648
    %v1239 = vxor.u32 %v1103, 2147483648
    %v1240 = vxor.u32 %v1105, 2147483648
    %v1241 = vxor.u32 %v1109, 2147483648
    %v1242 = vxor.u32 %v1111, 2147483648
    %v1243 = vxor.u32 %v1113, 2147483648
    %v1244 = vxor.u32 %v1115, 2147483648
    %v1245 = vmul.f32 %v1117, 1.442695
    %v1246 = vpow.pop %v1245
    %v1247 = vmul.f32 %v1118, 1.442695
    %v1248 = vpow.pop %v1247
    %v1249 = vmul.f32 %v1119, 1.442695
    %v1250 = vpow.pop %v1249
    %v1251 = vmul.f32 %v1120, 1.442695
    %v1252 = vpow.pop %v1251
    %v1253 = vmul.f32 %v1121, 1.442695
    %v1254 = vpow.pop %v1253
    %v1255 = vmul.f32 %v1122, 1.442695
    %v1256 = vpow.pop %v1255
    %v1257 = vmul.f32 %v1123, 1.442695
    %v1258 = vpow.pop %v1257
    %v1259 = vmul.f32 %v1124, 1.442695
    %v1260 = vpow.pop %v1259
    %v1261 = vmul.f32 %v1125, 1.442695
    %v1262 = vpow.pop %v1261
    %v1263 = vmul.f32 %v1126, 1.442695
    %v1264 = vpow.pop %v1263
    %v1265 = vmul.f32 %v1127, 1.442695
    %v1266 = vpow.pop %v1265
    %v1267 = vmul.f32 %v1128, 1.442695
    %v1268 = vpow.pop %v1267
    %v1269 = vmul.f32 %v1129, 1.442695
    %v1270 = vpow.pop %v1269
    %v1271 = vmul.f32 %v1130, 1.442695
    %v1272 = vpow.pop %v1271
    %v1273 = vmul.f32 %v1131, 1.442695
    %v1274 = vpow.pop %v1273
    %v1275 = vmul.f32 %v1132, 1.442695
    %v1276 = vpow.pop %v1275
    %v1277 = vmul.f32 %v1133, 1.442695
    %v1278 = vpow.pop %v1277
    %v1279 = vmul.f32 %v1134, 1.442695
    %v1280 = vpow.pop %v1279
    %v1281 = vmul.f32 %v1135, 1.442695
    %v1282 = vpow.pop %v1281
    %v1283 = vmul.f32 %v1136, 1.442695
    %v1284 = vpow.pop %v1283
    %v1285 = vmul.f32 %v1137, 1.442695
    %v1286 = vpow.pop %v1285
    %v1287 = vmul.f32 %v1138, 1.442695
    %v1288 = vpow.pop %v1287
    %v1289 = vmul.f32 %v1139, 1.442695
    %v1290 = vpow.pop %v1289
    %v1291 = vmul.f32 %v1140, 1.442695
    %v1292 = vpow.pop %v1291
    %v1293 = vmul.f32 %v1141, 1.442695
    %v1294 = vpow.pop %v1293
    %v1295 = vmul.f32 %v1142, 1.442695
    %v1296 = vpow.pop %v1295
    %v1297 = vmul.f32 %v1143, 1.442695
    %v1298 = vpow.pop %v1297
    %v1299 = vmul.f32 %v1144, 1.442695
    %v1300 = vpow.pop %v1299
    %v1301 = vmul.f32 %v1145, 1.442695
    %v1302 = vpow.pop %v1301
    %v1303 = vmul.f32 %v1146, 1.442695
    %v1304 = vpow.pop %v1303
    %v1305 = vmul.f32 %v1147, 1.442695
    %v1306 = vpow.pop %v1305
    %v1307 = vmul.f32 %v1148, 1.442695
    %v1308 = vpow.pop %v1307
    %v1309 = vmul.f32 %v1149, 1.442695
    %v1310 = vpow.pop %v1309
    %v1311 = vmul.f32 %v1150, 1.442695
    %v1312 = vpow.pop %v1311
    %v1313 = vmul.f32 %v1151, 1.442695
    %v1314 = vpow.pop %v1313
    %v1315 = vmul.f32 %v1152, 1.442695
    %v1316 = vpow.pop %v1315
    %v1317 = vmul.f32 %v1153, 1.442695
    %v1318 = vpow.pop %v1317
    %v1319 = vmul.f32 %v1154, 1.442695
    %v1320 = vpow.pop %v1319
    %v1321 = vmul.f32 %v1155, 1.442695
    %v1322 = vpow.pop %v1321
    %v1323 = vmul.f32 %v1156, 1.442695
    %v1324 = vpow.pop %v1323
    %v1325 = vmul.f32 %v1157, 1.442695
    %v1326 = vpow.pop %v1325
    %v1327 = vmul.f32 %v1158, 1.442695
    %v1328 = vpow.pop %v1327
    %v1329 = vmul.f32 %v1159, 1.442695
    %v1330 = vpow.pop %v1329
    %v1331 = vmul.f32 %v1160, 1.442695
    %v1332 = vpow.pop %v1331
    %v1333 = vmul.f32 %v1161, 1.442695
    %v1334 = vpow.pop %v1333
    %v1335 = vmul.f32 %v1162, 1.442695
    %v1336 = vpow.pop %v1335
    %v1337 = vmul.f32 %v1163, 1.442695
    %v1338 = vpow.pop %v1337
    %v1339 = vmul.f32 %v1164, 1.442695
    %v1340 = vpow.pop %v1339
    %v1341 = vmul.f32 %v1165, 1.442695
    %v1342 = vpow.pop %v1341
    %v1343 = vmul.f32 %v1166, 1.442695
    %v1344 = vpow.pop %v1343
    %v1345 = vmul.f32 %v1167, 1.442695
    %v1346 = vpow.pop %v1345
    %v1347 = vmul.f32 %v1168, 1.442695
    %v1348 = vpow.pop %v1347
    %v1349 = vmul.f32 %v1169, 1.442695
    %v1350 = vpow.pop %v1349
    %v1351 = vmul.f32 %v1170, 1.442695
    %v1352 = vpow.pop %v1351
    %v1353 = vmul.f32 %v1171, 1.442695
    %v1354 = vpow.pop %v1353
    %v1355 = vmul.f32 %v1172, 1.442695
    %v1356 = vpow.pop %v1355
    %v1357 = vmul.f32 %v1173, 1.442695
    %v1358 = vpow.pop %v1357
    %v1359 = vmul.f32 %v1174, 1.442695
    %v1360 = vpow.pop %v1359
    %v1361 = vmul.f32 %v1175, 1.442695
    %v1362 = vpow.pop %v1361
    %v1363 = vmul.f32 %v1176, 1.442695
    %v1364 = vpow.pop %v1363
    %v1365 = vmul.f32 %v1177, 1.442695
    %v1366 = vpow.pop %v1365
    %v1367 = vmul.f32 %v1178, 1.442695
    %v1368 = vpow.pop %v1367
    %v1369 = vmul.f32 %v1179, 1.442695
    %v1370 = vpow.pop %v1369
    %v1371 = vmul.f32 %v1180, 1.442695
    %v1372 = vpow.pop %v1371
    %v1373 = vmul.f32 %v1181, 1.442695
    %v1374 = vpow.pop %v1373
    %v1375 = vmul.f32 %v1182, 1.442695
    %v1376 = vpow.pop %v1375
    %v1377 = vmul.f32 %v1183, 1.442695
    %v1378 = vpow.pop %v1377
    %v1379 = vmul.f32 %v1184, 1.442695
    %v1380 = vpow.pop %v1379
    %v1381 = vmul.f32 %v1185, 1.442695
    %v1382 = vpow.pop %v1381
    %v1383 = vmul.f32 %v1186, 1.442695
    %v1384 = vpow.pop %v1383
    %v1385 = vmul.f32 %v1187, 1.442695
    %v1386 = vpow.pop %v1385
    %v1387 = vmul.f32 %v1188, 1.442695
    %v1388 = vpow.pop %v1387
    %v1389 = vmul.f32 %v1189, 1.442695
    %v1390 = vpow.pop %v1389
    %v1391 = vmul.f32 %v1190, 1.442695
    %v1392 = vpow.pop %v1391
    %v1393 = vmul.f32 %v1191, 1.442695
    %v1394 = vpow.pop %v1393
    %v1395 = vmul.f32 %v1192, 1.442695
    %v1396 = vpow.pop %v1395
    %v1397 = vmul.f32 %v1193, 1.442695
    %v1398 = vpow.pop %v1397
    %v1399 = vmul.f32 %v1194, 1.442695
    %v1400 = vpow.pop %v1399
    %v1401 = vmul.f32 %v1195, 1.442695
    %v1402 = vpow.pop %v1401
    %v1403 = vmul.f32 %v1196, 1.442695
    %v1404 = vpow.pop %v1403
    %v1405 = vmul.f32 %v1197, 1.442695
    %v1406 = vpow.pop %v1405
    %v1407 = vmul.f32 %v1198, 1.442695
    %v1408 = vpow.pop %v1407
    %v1409 = vmul.f32 %v1199, 1.442695
    %v1410 = vpow.pop %v1409
    %v1411 = vmul.f32 %v1200, 1.442695
    %v1412 = vpow.pop %v1411
    %v1413 = vmul.f32 %v1201, 1.442695
    %v1414 = vpow.pop %v1413
    %v1415 = vmul.f32 %v1202, 1.442695
    %v1416 = vpow.pop %v1415
    %v1417 = vmul.f32 %v1203, 1.442695
    %v1418 = vpow.pop %v1417
    %v1419 = vmul.f32 %v1204, 1.442695
    %v1420 = vpow.pop %v1419
    %v1421 = vmul.f32 %v1205, 1.442695
    %v1422 = vpow.pop %v1421
    %v1423 = vmul.f32 %v1206, 1.442695
    %v1424 = vpow.pop %v1423
    %v1425 = vmul.f32 %v1207, 1.442695
    %v1426 = vpow.pop %v1425
    %v1427 = vmul.f32 %v1208, 1.442695
    %v1428 = vpow.pop %v1427
    %v1429 = vmul.f32 %v1209, 1.442695
    %v1430 = vpow.pop %v1429
    %v1431 = vmul.f32 %v1210, 1.442695
    %v1432 = vpow.pop %v1431
    %v1433 = vmul.f32 %v1211, 1.442695
    %v1434 = vpow.pop %v1433
    %v1435 = vmul.f32 %v1212, 1.442695
    %v1436 = vpow.pop %v1435
    %v1437 = vmul.f32 %v1213, 1.442695
    %v1438 = vpow.pop %v1437
    %v1439 = vmul.f32 %v1214, 1.442695
    %v1440 = vpow.pop %v1439
    %v1441 = vmul.f32 %v1215, 1.442695
    %v1442 = vpow.pop %v1441
    %v1443 = vmul.f32 %v1216, 1.442695
    %v1444 = vpow.pop %v1443
    %v1445 = vmul.f32 %v1217, 1.442695
    %v1446 = vpow.pop %v1445
    %v1447 = vmul.f32 %v1218, 1.442695
    %v1448 = vpow.pop %v1447
    %v1449 = vmul.f32 %v1219, 1.442695
    %v1450 = vpow.pop %v1449
    %v1451 = vmul.f32 %v1220, 1.442695
    %v1452 = vpow.pop %v1451
    %v1453 = vmul.f32 %v1221, 1.442695
    %v1454 = vpow.pop %v1453
    %v1455 = vmul.f32 %v1222, 1.442695
    %v1456 = vpow.pop %v1455
    %v1457 = vmul.f32 %v1223, 1.442695
    %v1458 = vpow.pop %v1457
    %v1459 = vmul.f32 %v1224, 1.442695
    %v1460 = vpow.pop %v1459
    %v1461 = vmul.f32 %v1225, 1.442695
    %v1462 = vpow.pop %v1461
    %v1463 = vmul.f32 %v1226, 1.442695
    %v1464 = vpow.pop %v1463
    %v1465 = vmul.f32 %v1227, 1.442695
    %v1466 = vpow.pop %v1465
    %v1467 = vmul.f32 %v1228, 1.442695
    %v1468 = vpow.pop %v1467
    %v1469 = vmul.f32 %v1229, 1.442695
    %v1470 = vpow.pop %v1469
    %v1471 = vmul.f32 %v1230, 1.442695
    %v1472 = vpow.pop %v1471
    %v1473 = vmul.f32 %v1231, 1.442695
    %v1474 = vpow.pop %v1473
    %v1475 = vmul.f32 %v1232, 1.442695
    %v1476 = vpow.pop %v1475
    %v1477 = vmul.f32 %v1233, 1.442695
    %v1478 = vpow.pop %v1477
    %v1479 = vmul.f32 %v1234, 1.442695
    %v1480 = vpow.pop %v1479
    %v1481 = vmul.f32 %v1235, 1.442695
    %v1482 = vpow.pop %v1481
    %v1483 = vmul.f32 %v1236, 1.442695
    %v1484 = vpow.pop %v1483
    %v1485 = vmul.f32 %v1237, 1.442695
    %v1486 = vpow.pop %v1485
    %v1487 = vmul.f32 %v1238, 1.442695
    %v1488 = vpow.pop %v1487
    %v1489 = vmul.f32 %v1239, 1.442695
    %v1490 = vpow.pop %v1489
    %v1491 = vmul.f32 %v1240, 1.442695
    %v1492 = vpow.pop %v1491
    %v1493 = vmul.f32 %v1241, 1.442695
    %v1494 = vpow.pop %v1493
    %v1495 = vmul.f32 %v1242, 1.442695
    %v1496 = vpow.pop %v1495
    %v1497 = vmul.f32 %v1243, 1.442695
    %v1498 = vpow.pop %v1497
    %v1499 = vmul.f32 %v1244, 1.442695
    %v1500 = vpow.pop %v1499
    %v1501 = vadd.f32 %v1246, 1.0
    %v1502 = vadd.f32 %v1248, 1.0
    %v1503 = vadd.f32 %v1250, 1.0
    %v1504 = vadd.f32 %v1252, 1.0
    %v1505 = vadd.f32 %v1254, 1.0
    %v1506 = vadd.f32 %v1256, 1.0
    %v1507 = vadd.f32 %v1258, 1.0
    %v1508 = vadd.f32 %v1260, 1.0
    %v1509 = vadd.f32 %v1262, 1.0
    %v1510 = vadd.f32 %v1264, 1.0
    %v1511 = vadd.f32 %v1266, 1.0
    %v1512 = vadd.f32 %v1268, 1.0
    %v1513 = vadd.f32 %v1270, 1.0
    %v1514 = vadd.f32 %v1272, 1.0
    %v1515 = vadd.f32 %v1274, 1.0
    %v1516 = vadd.f32 %v1276, 1.0
    %v1517 = vadd.f32 %v1278, 1.0
    %v1518 = vadd.f32 %v1280, 1.0
    %v1519 = vadd.f32 %v1282, 1.0
    %v1520 = vadd.f32 %v1284, 1.0
    %v1521 = vadd.f32 %v1286, 1.0
    %v1522 = vadd.f32 %v1288, 1.0
    %v1523 = vadd.f32 %v1290, 1.0
    %v1524 = vadd.f32 %v1292, 1.0
    %v1525 = vadd.f32 %v1294, 1.0
    %v1526 = vadd.f32 %v1296, 1.0
    %v1527 = vadd.f32 %v1298, 1.0
    %v1528 = vadd.f32 %v1300, 1.0
    %v1529 = vadd.f32 %v1302, 1.0
    %v1530 = vadd.f32 %v1304, 1.0
    %v1531 = vadd.f32 %v1306, 1.0
    %v1532 = vadd.f32 %v1308, 1.0
    %v1533 = vadd.f32 %v1310, 1.0
    %v1534 = vadd.f32 %v1312, 1.0
    %v1535 = vadd.f32 %v1314, 1.0
    %v1536 = vadd.f32 %v1316, 1.0
    %v1537 = vadd.f32 %v1318, 1.0
    %v1538 = vadd.f32 %v1320, 1.0
    %v1539 = vadd.f32 %v1322, 1.0
    %v1540 = vadd.f32 %v1324, 1.0
    %v1541 = vadd.f32 %v1326, 1.0
    %v1542 = vadd.f32 %v1328, 1.0
    %v1543 = vadd.f32 %v1330, 1.0
    %v1544 = vadd.f32 %v1332, 1.0
    %v1545 = vadd.f32 %v1334, 1.0
    %v1546 = vadd.f32 %v1336, 1.0
    %v1547 = vadd.f32 %v1338, 1.0
    %v1548 = vadd.f32 %v1340, 1.0
    %v1549 = vadd.f32 %v1342, 1.0
    %v1550 = vadd.f32 %v1344, 1.0
    %v1551 = vadd.f32 %v1346, 1.0
    %v1552 = vadd.f32 %v1348, 1.0
    %v1553 = vadd.f32 %v1350, 1.0
    %v1554 = vadd.f32 %v1352, 1.0
    %v1555 = vadd.f32 %v1354, 1.0
    %v1556 = vadd.f32 %v1356, 1.0
    %v1557 = vadd.f32 %v1358, 1.0
    %v1558 = vadd.f32 %v1360, 1.0
    %v1559 = vadd.f32 %v1362, 1.0
    %v1560 = vadd.f32 %v1364, 1.0
    %v1561 = vadd.f32 %v1366, 1.0
    %v1562 = vadd.f32 %v1368, 1.0
    %v1563 = vadd.f32 %v1370, 1.0
    %v1564 = vadd.f32 %v1372, 1.0
    %v1565 = vadd.f32 %v1374, 1.0
    %v1566 = vadd.f32 %v1376, 1.0
    %v1567 = vadd.f32 %v1378, 1.0
    %v1568 = vadd.f32 %v1380, 1.0
    %v1569 = vadd.f32 %v1382, 1.0
    %v1570 = vadd.f32 %v1384, 1.0
    %v1571 = vadd.f32 %v1386, 1.0
    %v1572 = vadd.f32 %v1388, 1.0
    %v1573 = vadd.f32 %v1390, 1.0
    %v1574 = vadd.f32 %v1392, 1.0
    %v1575 = vadd.f32 %v1394, 1.0
    %v1576 = vadd.f32 %v1396, 1.0
    %v1577 = vadd.f32 %v1398, 1.0
    %v1578 = vadd.f32 %v1400, 1.0
    %v1579 = vadd.f32 %v1402, 1.0
    %v1580 = vadd.f32 %v1404, 1.0
    %v1581 = vadd.f32 %v1406, 1.0
    %v1582 = vadd.f32 %v1408, 1.0
    %v1583 = vadd.f32 %v1410, 1.0
    %v1584 = vadd.f32 %v1412, 1.0
    %v1585 = vadd.f32 %v1414, 1.0
    %v1586 = vadd.f32 %v1416, 1.0
    %v1587 = vadd.f32 %v1418, 1.0
    %v1588 = vadd.f32 %v1420, 1.0
    %v1589 = vadd.f32 %v1422, 1.0
    %v1590 = vadd.f32 %v1424, 1.0
    %v1591 = vadd.f32 %v1426, 1.0
    %v1592 = vadd.f32 %v1428, 1.0
    %v1593 = vadd.f32 %v1430, 1.0
    %v1594 = vadd.f32 %v1432, 1.0
    %v1595 = vadd.f32 %v1434, 1.0
    %v1596 = vadd.f32 %v1436, 1.0
    %v1597 = vadd.f32 %v1438, 1.0
    %v1598 = vadd.f32 %v1440, 1.0
    %v1599 = vadd.f32 %v1442, 1.0
    %v1600 = vadd.f32 %v1444, 1.0
    %v1601 = vadd.f32 %v1446, 1.0
    %v1602 = vadd.f32 %v1448, 1.0
    %v1603 = vadd.f32 %v1450, 1.0
    %v1604 = vadd.f32 %v1452, 1.0
    %v1605 = vadd.f32 %v1454, 1.0
    %v1606 = vadd.f32 %v1456, 1.0
    %v1607 = vadd.f32 %v1458, 1.0
    %v1608 = vadd.f32 %v1460, 1.0
    %v1609 = vadd.f32 %v1462, 1.0
    %v1610 = vadd.f32 %v1464, 1.0
    %v1611 = vadd.f32 %v1466, 1.0
    %v1612 = vadd.f32 %v1468, 1.0
    %v1613 = vadd.f32 %v1470, 1.0
    %v1614 = vadd.f32 %v1472, 1.0
    %v1615 = vadd.f32 %v1474, 1.0
    %v1616 = vadd.f32 %v1476, 1.0
    %v1617 = vadd.f32 %v1478, 1.0
    %v1618 = vadd.f32 %v1480, 1.0
    %v1619 = vadd.f32 %v1482, 1.0
    %v1620 = vadd.f32 %v1484, 1.0
    %v1621 = vadd.f32 %v1486, 1.0
    %v1622 = vadd.f32 %v1488, 1.0
    %v1623 = vadd.f32 %v1490, 1.0
    %v1624 = vadd.f32 %v1492, 1.0
    %v1625 = vadd.f32 %v1494, 1.0
    %v1626 = vadd.f32 %v1496, 1.0
    %v1627 = vadd.f32 %v1498, 1.0
    %v1628 = vadd.f32 %v1500, 1.0
    %v1629 = vrcp.pop %v1501
    %v1630 = vmul.f32 1.0, %v1629
    %v1631 = vrcp.pop %v1502
    %v1632 = vmul.f32 1.0, %v1631
    %v1633 = vrcp.pop %v1503
    %v1634 = vmul.f32 1.0, %v1633
    %v1635 = vrcp.pop %v1504
    %v1636 = vmul.f32 1.0, %v1635
    %v1637 = vrcp.pop %v1505
    %v1638 = vmul.f32 1.0, %v1637
    %v1639 = vrcp.pop %v1506
    %v1640 = vmul.f32 1.0, %v1639
    %v1641 = vrcp.pop %v1507
    %v1642 = vmul.f32 1.0, %v1641
    %v1643 = vrcp.pop %v1508
    %v1644 = vmul.f32 1.0, %v1643
    %v1645 = vrcp.pop %v1509
    %v1646 = vmul.f32 1.0, %v1645
    %v1647 = vrcp.pop %v1510
    %v1648 = vmul.f32 1.0, %v1647
    %v1649 = vrcp.pop %v1511
    %v1650 = vmul.f32 1.0, %v1649
    %v1651 = vrcp.pop %v1512
    %v1652 = vmul.f32 1.0, %v1651
    %v1653 = vrcp.pop %v1513
    %v1654 = vmul.f32 1.0, %v1653
    %v1655 = vrcp.pop %v1514
    %v1656 = vmul.f32 1.0, %v1655
    %v1657 = vrcp.pop %v1515
    %v1658 = vmul.f32 1.0, %v1657
    %v1659 = vrcp.pop %v1516
    %v1660 = vmul.f32 1.0, %v1659
    %v1661 = vrcp.pop %v1517
    %v1662 = vmul.f32 1.0, %v1661
    %v1663 = vrcp.pop %v1518
    %v1664 = vmul.f32 1.0, %v1663
    %v1665 = vrcp.pop %v1519
    %v1666 = vmul.f32 1.0, %v1665
    %v1667 = vrcp.pop %v1520
    %v1668 = vmul.f32 1.0, %v1667
    %v1669 = vrcp.pop %v1521
    %v1670 = vmul.f32 1.0, %v1669
    %v1671 = vrcp.pop %v1522
    %v1672 = vmul.f32 1.0, %v1671
    %v1673 = vrcp.pop %v1523
    %v1674 = vmul.f32 1.0, %v1673
    %v1675 = vrcp.pop %v1524
    %v1676 = vmul.f32 1.0, %v1675
    %v1677 = vrcp.pop %v1525
    %v1678 = vmul.f32 1.0, %v1677
    %v1679 = vrcp.pop %v1526
    %v1680 = vmul.f32 1.0, %v1679
    %v1681 = vrcp.pop %v1527
    %v1682 = vmul.f32 1.0, %v1681
    %v1683 = vrcp.pop %v1528
    %v1684 = vmul.f32 1.0, %v1683
    %v1685 = vrcp.pop %v1529
    %v1686 = vmul.f32 1.0, %v1685
    %v1687 = vrcp.pop %v1530
    %v1688 = vmul.f32 1.0, %v1687
    %v1689 = vrcp.pop %v1531
    %v1690 = vmul.f32 1.0, %v1689
    %v1691 = vrcp.pop %v1532
    %v1692 = vmul.f32 1.0, %v1691
    %v1693 = vrcp.pop %v1533
    %v1694 = vmul.f32 1.0, %v1693
    %v1695 = vrcp.pop %v1534
    %v1696 = vmul.f32 1.0, %v1695
    %v1697 = vrcp.pop %v1535
    %v1698 = vmul.f32 1.0, %v1697
    %v1699 = vrcp.pop %v1536
    %v1700 = vmul.f32 1.0, %v1699
    %v1701 = vrcp.pop %v1537
    %v1702 = vmul.f32 1.0, %v1701
    %v1703 = vrcp.pop %v1538
    %v1704 = vmul.f32 1.0, %v1703
    %v1705 = vrcp.pop %v1539
    %v1706 = vmul.f32 1.0, %v1705
    %v1707 = vrcp.pop %v1540
    %v1708 = vmul.f32 1.0, %v1707
    %v1709 = vrcp.pop %v1541
    %v1710 = vmul.f32 1.0, %v1709
    %v1711 = vrcp.pop %v1542
    %v1712 = vmul.f32 1.0, %v1711
    %v1713 = vrcp.pop %v1543
    %v1714 = vmul.f32 1.0, %v1713
    %v1715 = vrcp.pop %v1544
    %v1716 = vmul.f32 1.0, %v1715
    %v1717 = vrcp.pop %v1545
    %v1718 = vmul.f32 1.0, %v1717
    %v1719 = vrcp.pop %v1546
    %v1720 = vmul.f32 1.0, %v1719
    %v1721 = vrcp.pop %v1547
    %v1722 = vmul.f32 1.0, %v1721
    %v1723 = vrcp.pop %v1548
    %v1724 = vmul.f32 1.0, %v1723
    %v1725 = vrcp.pop %v1549
    %v1726 = vmul.f32 1.0, %v1725
    %v1727 = vrcp.pop %v1550
    %v1728 = vmul.f32 1.0, %v1727
    %v1729 = vrcp.pop %v1551
    %v1730 = vmul.f32 1.0, %v1729
    %v1731 = vrcp.pop %v1552
    %v1732 = vmul.f32 1.0, %v1731
    %v1733 = vrcp.pop %v1553
    %v1734 = vmul.f32 1.0, %v1733
    %v1735 = vrcp.pop %v1554
    %v1736 = vmul.f32 1.0, %v1735
    %v1737 = vrcp.pop %v1555
    %v1738 = vmul.f32 1.0, %v1737
    %v1739 = vrcp.pop %v1556
    %v1740 = vmul.f32 1.0, %v1739
    %v1741 = vrcp.pop %v1557
    %v1742 = vmul.f32 1.0, %v1741
    %v1743 = vrcp.pop %v1558
    %v1744 = vmul.f32 1.0, %v1743
    %v1745 = vrcp.pop %v1559
    %v1746 = vmul.f32 1.0, %v1745
    %v1747 = vrcp.pop %v1560
    %v1748 = vmul.f32 1.0, %v1747
    %v1749 = vrcp.pop %v1561
    %v1750 = vmul.f32 1.0, %v1749
    %v1751 = vrcp.pop %v1562
    %v1752 = vmul.f32 1.0, %v1751
    %v1753 = vrcp.pop %v1563
    %v1754 = vmul.f32 1.0, %v1753
    %v1755 = vrcp.pop %v1564
    %v1756 = vmul.f32 1.0, %v1755
    %v1757 = vrcp.pop %v1565
    %v1758 = vmul.f32 1.0, %v1757
    %v1759 = vrcp.pop %v1566
    %v1760 = vmul.f32 1.0, %v1759
    %v1761 = vrcp.pop %v1567
    %v1762 = vmul.f32 1.0, %v1761
    %v1763 = vrcp.pop %v1568
    %v1764 = vmul.f32 1.0, %v1763
    %v1765 = vrcp.pop %v1569
    %v1766 = vmul.f32 1.0, %v1765
    %v1767 = vrcp.pop %v1570
    %v1768 = vmul.f32 1.0, %v1767
    %v1769 = vrcp.pop %v1571
    %v1770 = vmul.f32 1.0, %v1769
    %v1771 = vrcp.pop %v1572
    %v1772 = vmul.f32 1.0, %v1771
    %v1773 = vrcp.pop %v1573
    %v1774 = vmul.f32 1.0, %v1773
    %v1775 = vrcp.pop %v1574
    %v1776 = vmul.f32 1.0, %v1775
    %v1777 = vrcp.pop %v1575
    %v1778 = vmul.f32 1.0, %v1777
    %v1779 = vrcp.pop %v1576
    %v1780 = vmul.f32 1.0, %v1779
    %v1781 = vrcp.pop %v1577
    %v1782 = vmul.f32 1.0, %v1781
    %v1783 = vrcp.pop %v1578
    %v1784 = vmul.f32 1.0, %v1783
    %v1785 = vrcp.pop %v1579
    %v1786 = vmul.f32 1.0, %v1785
    %v1787 = vrcp.pop %v1580
    %v1788 = vmul.f32 1.0, %v1787
    %v1789 = vrcp.pop %v1581
    %v1790 = vmul.f32 1.0, %v1789
    %v1791 = vrcp.pop %v1582
    %v1792 = vmul.f32 1.0, %v1791
    %v1793 = vrcp.pop %v1583
    %v1794 = vmul.f32 1.0, %v1793
    %v1795 = vrcp.pop %v1584
    %v1796 = vmul.f32 1.0, %v1795
    %v1797 = vrcp.pop %v1585
    %v1798 = vmul.f32 1.0, %v1797
    %v1799 = vrcp.pop %v1586
    %v1800 = vmul.f32 1.0, %v1799
    %v1801 = vrcp.pop %v1587
    %v1802 = vmul.f32 1.0, %v1801
    %v1803 = vrcp.pop %v1588
    %v1804 = vmul.f32 1.0, %v1803
    %v1805 = vrcp.pop %v1589
    %v1806 = vmul.f32 1.0, %v1805
    %v1807 = vrcp.pop %v1590
    %v1808 = vmul.f32 1.0, %v1807
    %v1809 = vrcp.pop %v1591
    %v1810 = vmul.f32 1.0, %v1809
    %v1811 = vrcp.pop %v1592
    %v1812 = vmul.f32 1.0, %v1811
    %v1813 = vrcp.pop %v1593
    %v1814 = vmul.f32 1.0, %v1813
    %v1815 = vrcp.pop %v1594
    %v1816 = vmul.f32 1.0, %v1815
    %v1817 = vrcp.pop %v1595
    %v1818 = vmul.f32 1.0, %v1817
    %v1819 = vrcp.pop %v1596
    %v1820 = vmul.f32 1.0, %v1819
    %v1821 = vrcp.pop %v1597
    %v1822 = vmul.f32 1.0, %v1821
    %v1823 = vrcp.pop %v1598
    %v1824 = vmul.f32 1.0, %v1823
    %v1825 = vrcp.pop %v1599
    %v1826 = vmul.f32 1.0, %v1825
    %v1827 = vrcp.pop %v1600
    %v1828 = vmul.f32 1.0, %v1827
    %v1829 = vrcp.pop %v1601
    %v1830 = vmul.f32 1.0, %v1829
    %v1831 = vrcp.pop %v1602
    %v1832 = vmul.f32 1.0, %v1831
    %v1833 = vrcp.pop %v1603
    %v1834 = vmul.f32 1.0, %v1833
    %v1835 = vrcp.pop %v1604
    %v1836 = vmul.f32 1.0, %v1835
    %v1837 = vrcp.pop %v1605
    %v1838 = vmul.f32 1.0, %v1837
    %v1839 = vrcp.pop %v1606
    %v1840 = vmul.f32 1.0, %v1839
    %v1841 = vrcp.pop %v1607
    %v1842 = vmul.f32 1.0, %v1841
    %v1843 = vrcp.pop %v1608
    %v1844 = vmul.f32 1.0, %v1843
    %v1845 = vrcp.pop %v1609
    %v1846 = vmul.f32 1.0, %v1845
    %v1847 = vrcp.pop %v1610
    %v1848 = vmul.f32 1.0, %v1847
    %v1849 = vrcp.pop %v1611
    %v1850 = vmul.f32 1.0, %v1849
    %v1851 = vrcp.pop %v1612
    %v1852 = vmul.f32 1.0, %v1851
    %v1853 = vrcp.pop %v1613
    %v1854 = vmul.f32 1.0, %v1853
    %v1855 = vrcp.pop %v1614
    %v1856 = vmul.f32 1.0, %v1855
    %v1857 = vrcp.pop %v1615
    %v1858 = vmul.f32 1.0, %v1857
    %v1859 = vrcp.pop %v1616
    %v1860 = vmul.f32 1.0, %v1859
    %v1861 = vrcp.pop %v1617
    %v1862 = vmul.f32 1.0, %v1861
    %v1863 = vrcp.pop %v1618
    %v1864 = vmul.f32 1.0, %v1863
    %v1865 = vrcp.pop %v1619
    %v1866 = vmul.f32 1.0, %v1865
    %v1867 = vrcp.pop %v1620
    %v1868 = vmul.f32 1.0, %v1867
    %v1869 = vrcp.pop %v1621
    %v1870 = vmul.f32 1.0, %v1869
    %v1871 = vrcp.pop %v1622
    %v1872 = vmul.f32 1.0, %v1871
    %v1873 = vrcp.pop %v1623
    %v1874 = vmul.f32 1.0, %v1873
    %v1875 = vrcp.pop %v1624
    %v1876 = vmul.f32 1.0, %v1875
    %v1877 = vrcp.pop %v1625
    %v1878 = vmul.f32 1.0, %v1877
    %v1879 = vrcp.pop %v1626
    %v1880 = vmul.f32 1.0, %v1879
    %v1881 = vrcp.pop %v1627
    %v1882 = vmul.f32 1.0, %v1881
    %v1883 = vrcp.pop %v1628
    %v1884 = vmul.f32 1.0, %v1883
    %v1885 = vmul.f32 %v799, %v1630
    %v1886 = vmul.f32 %v801, %v1632
    %v1887 = vmul.f32 %v803, %v1634
    %v1888 = vmul.f32 %v805, %v1636
    %v1889 = vmul.f32 %v809, %v1638
    %v1890 = vmul.f32 %v811, %v1640
    %v1891 = vmul.f32 %v813, %v1642
    %v1892 = vmul.f32 %v815, %v1644
    %v1893 = vmul.f32 %v819, %v1646
    %v1894 = vmul.f32 %v821, %v1648
    %v1895 = vmul.f32 %v823, %v1650
    %v1896 = vmul.f32 %v825, %v1652
    %v1897 = vmul.f32 %v829, %v1654
    %v1898 = vmul.f32 %v831, %v1656
    %v1899 = vmul.f32 %v833, %v1658
    %v1900 = vmul.f32 %v835, %v1660
    %v1901 = vmul.f32 %v839, %v1662
    %v1902 = vmul.f32 %v841, %v1664
    %v1903 = vmul.f32 %v843, %v1666
    %v1904 = vmul.f32 %v845, %v1668
    %v1905 = vmul.f32 %v849, %v1670
    %v1906 = vmul.f32 %v851, %v1672
    %v1907 = vmul.f32 %v853, %v1674
    %v1908 = vmul.f32 %v855, %v1676
    %v1909 = vmul.f32 %v859, %v1678
    %v1910 = vmul.f32 %v861, %v1680
    %v1911 = vmul.f32 %v863, %v1682
    %v1912 = vmul.f32 %v865, %v1684
    %v1913 = vmul.f32 %v869, %v1686
    %v1914 = vmul.f32 %v871, %v1688
    %v1915 = vmul.f32 %v873, %v1690
    %v1916 = vmul.f32 %v875, %v1692
    %v1917 = vmul.f32 %v879, %v1694
    %v1918 = vmul.f32 %v881, %v1696
    %v1919 = vmul.f32 %v883, %v1698
    %v1920 = vmul.f32 %v885, %v1700
    %v1921 = vmul.f32 %v889, %v1702
    %v1922 = vmul.f32 %v891, %v1704
    %v1923 = vmul.f32 %v893, %v1706
    %v1924 = vmul.f32 %v895, %v1708
    %v1925 = vmul.f32 %v899, %v1710
    %v1926 = vmul.f32 %v901, %v1712
    %v1927 = vmul.f32 %v903, %v1714
    %v1928 = vmul.f32 %v905, %v1716
    %v1929 = vmul.f32 %v909, %v1718
    %v1930 = vmul.f32 %v911, %v1720
    %v1931 = vmul.f32 %v913, %v1722
    %v1932 = vmul.f32 %v915, %v1724
    %v1933 = vmul.f32 %v919, %v1726
    %v1934 = vmul.f32 %v921, %v1728
    %v1935 = vmul.f32 %v923, %v1730
    %v1936 = vmul.f32 %v925, %v1732
    %v1937 = vmul.f32 %v929, %v1734
    %v1938 = vmul.f32 %v931, %v1736
    %v1939 = vmul.f32 %v933, %v1738
    %v1940 = vmul.f32 %v935, %v1740
    %v1941 = vmul.f32 %v939, %v1742
    %v1942 = vmul.f32 %v941, %v1744
    %v1943 = vmul.f32 %v943, %v1746
    %v1944 = vmul.f32 %v945, %v1748
    %v1945 = vmul.f32 %v949, %v1750
    %v1946 = vmul.f32 %v951, %v1752
    %v1947 = vmul.f32 %v953, %v1754
    %v1948 = vmul.f32 %v955, %v1756
    %v1949 = vmul.f32 %v959, %v1758
    %v1950 = vmul.f32 %v961, %v1760
    %v1951 = vmul.f32 %v963, %v1762
    %v1952 = vmul.f32 %v965, %v1764
    %v1953 = vmul.f32 %v969, %v1766
    %v1954 = vmul.f32 %v971, %v1768
    %v1955 = vmul.f32 %v973, %v1770
    %v1956 = vmul.f32 %v975, %v1772
    %v1957 = vmul.f32 %v979, %v1774
    %v1958 = vmul.f32 %v981, %v1776
    %v1959 = vmul.f32 %v983, %v1778
    %v1960 = vmul.f32 %v985, %v1780
    %v1961 = vmul.f32 %v989, %v1782
    %v1962 = vmul.f32 %v991, %v1784
    %v1963 = vmul.f32 %v993, %v1786
    %v1964 = vmul.f32 %v995, %v1788
    %v1965 = vmul.f32 %v999, %v1790
    %v1966 = vmul.f32 %v1001, %v1792
    %v1967 = vmul.f32 %v1003, %v1794
    %v1968 = vmul.f32 %v1005, %v1796
    %v1969 = vmul.f32 %v1009, %v1798
    %v1970 = vmul.f32 %v1011, %v1800
    %v1971 = vmul.f32 %v1013, %v1802
    %v1972 = vmul.f32 %v1015, %v1804
    %v1973 = vmul.f32 %v1019, %v1806
    %v1974 = vmul.f32 %v1021, %v1808
    %v1975 = vmul.f32 %v1023, %v1810
    %v1976 = vmul.f32 %v1025, %v1812
    %v1977 = vmul.f32 %v1029, %v1814
    %v1978 = vmul.f32 %v1031, %v1816
    %v1979 = vmul.f32 %v1033, %v1818
    %v1980 = vmul.f32 %v1035, %v1820
    %v1981 = vmul.f32 %v1039, %v1822
    %v1982 = vmul.f32 %v1041, %v1824
    %v1983 = vmul.f32 %v1043, %v1826
    %v1984 = vmul.f32 %v1045, %v1828
    %v1985 = vmul.f32 %v1049, %v1830
    %v1986 = vmul.f32 %v1051, %v1832
    %v1987 = vmul.f32 %v1053, %v1834
    %v1988 = vmul.f32 %v1055, %v1836
    %v1989 = vmul.f32 %v1059, %v1838
    %v1990 = vmul.f32 %v1061, %v1840
    %v1991 = vmul.f32 %v1063, %v1842
    %v1992 = vmul.f32 %v1065, %v1844
    %v1993 = vmul.f32 %v1069, %v1846
    %v1994 = vmul.f32 %v1071, %v1848
    %v1995 = vmul.f32 %v1073, %v1850
    %v1996 = vmul.f32 %v1075, %v1852
    %v1997 = vmul.f32 %v1079, %v1854
    %v1998 = vmul.f32 %v1081, %v1856
    %v1999 = vmul.f32 %v1083, %v1858
    %v2000 = vmul.f32 %v1085, %v1860
    %v2001 = vmul.f32 %v1089, %v1862
    %v2002 = vmul.f32 %v1091, %v1864
    %v2003 = vmul.f32 %v1093, %v1866
    %v2004 = vmul.f32 %v1095, %v1868
    %v2005 = vmul.f32 %v1099, %v1870
    %v2006 = vmul.f32 %v1101, %v1872
    %v2007 = vmul.f32 %v1103, %v1874
    %v2008 = vmul.f32 %v1105, %v1876
    %v2009 = vmul.f32 %v1109, %v1878
    %v2010 = vmul.f32 %v1111, %v1880
    %v2011 = vmul.f32 %v1113, %v1882
    %v2012 = vmul.f32 %v1115, %v1884
    %v2013 = vld [vmem:[%s3] sm:$0xff]
    %v2014 = vld [vmem:[%s3 + $0x8] sm:$0xff]
    %v2015 = vld [vmem:[%s3 + $0x10] sm:$0xff]
    %v2016 = vld [vmem:[%s3 + $0x18] sm:$0xff]
    %v2017 = vld [vmem:[%s3 + $0x20] sm:$0xff]
    %v2018 = vld [vmem:[%s3 + $0x28] sm:$0xff]
    %v2019 = vld [vmem:[%s3 + $0x30] sm:$0xff]
    %v2020 = vld [vmem:[%s3 + $0x38] sm:$0xff]
    %v2021 = vld [vmem:[%s3 + $0x40] sm:$0xff]
    %v2022 = vld [vmem:[%s3 + $0x48] sm:$0xff]
    %v2023 = vld [vmem:[%s3 + $0x50] sm:$0xff]
    %v2024 = vld [vmem:[%s3 + $0x58] sm:$0xff]
    %v2025 = vld [vmem:[%s3 + $0x60] sm:$0xff]
    %v2026 = vld [vmem:[%s3 + $0x68] sm:$0xff]
    %v2027 = vld [vmem:[%s3 + $0x70] sm:$0xff]
    %v2028 = vld [vmem:[%s3 + $0x78] sm:$0xff]
    %v2029 = vld [vmem:[%s3 + $0x80] sm:$0xff]
    %v2030 = vld [vmem:[%s3 + $0x88] sm:$0xff]
    %v2031 = vld [vmem:[%s3 + $0x90] sm:$0xff]
    %v2032 = vld [vmem:[%s3 + $0x98] sm:$0xff]
    %v2033 = vld [vmem:[%s3 + $0xa0] sm:$0xff]
    %v2034 = vld [vmem:[%s3 + $0xa8] sm:$0xff]
    %v2035 = vld [vmem:[%s3 + $0xb0] sm:$0xff]
    %v2036 = vld [vmem:[%s3 + $0xb8] sm:$0xff]
    %v2037 = vld [vmem:[%s3 + $0xc0] sm:$0xff]
    %v2038 = vld [vmem:[%s3 + $0xc8] sm:$0xff]
    %v2039 = vld [vmem:[%s3 + $0xd0] sm:$0xff]
    %v2040 = vld [vmem:[%s3 + $0xd8] sm:$0xff]
    %v2041 = vld [vmem:[%s3 + $0xe0] sm:$0xff]
    %v2042 = vld [vmem:[%s3 + $0xe8] sm:$0xff]
    %v2043 = vld [vmem:[%s3 + $0xf0] sm:$0xff]
    %v2044 = vld [vmem:[%s3 + $0xf8] sm:$0xff]
    %v2045 = vld [vmem:[%s3 + $0x100] sm:$0xff]
    %v2046 = vld [vmem:[%s3 + $0x108] sm:$0xff]
    %v2047 = vld [vmem:[%s3 + $0x110] sm:$0xff]
    %v2048 = vld [vmem:[%s3 + $0x118] sm:$0xff]
    %v2049 = vld [vmem:[%s3 + $0x120] sm:$0xff]
    %v2050 = vld [vmem:[%s3 + $0x128] sm:$0xff]
    %v2051 = vld [vmem:[%s3 + $0x130] sm:$0xff]
    %v2052 = vld [vmem:[%s3 + $0x138] sm:$0xff]
    %v2053 = vld [vmem:[%s3 + $0x140] sm:$0xff]
    %v2054 = vld [vmem:[%s3 + $0x148] sm:$0xff]
    %v2055 = vld [vmem:[%s3 + $0x150] sm:$0xff]
    %v2056 = vld [vmem:[%s3 + $0x158] sm:$0xff]
    %v2057 = vld [vmem:[%s3 + $0x160] sm:$0xff]
    %v2058 = vld [vmem:[%s3 + $0x168] sm:$0xff]
    %v2059 = vld [vmem:[%s3 + $0x170] sm:$0xff]
    %v2060 = vld [vmem:[%s3 + $0x178] sm:$0xff]
    %v2061 = vld [vmem:[%s3 + $0x180] sm:$0xff]
    %v2062 = vld [vmem:[%s3 + $0x188] sm:$0xff]
    %v2063 = vld [vmem:[%s3 + $0x190] sm:$0xff]
    %v2064 = vld [vmem:[%s3 + $0x198] sm:$0xff]
    %v2065 = vld [vmem:[%s3 + $0x1a0] sm:$0xff]
    %v2066 = vld [vmem:[%s3 + $0x1a8] sm:$0xff]
    %v2067 = vld [vmem:[%s3 + $0x1b0] sm:$0xff]
    %v2068 = vld [vmem:[%s3 + $0x1b8] sm:$0xff]
    %v2069 = vld [vmem:[%s3 + $0x1c0] sm:$0xff]
    %v2070 = vld [vmem:[%s3 + $0x1c8] sm:$0xff]
    %v2071 = vld [vmem:[%s3 + $0x1d0] sm:$0xff]
    %v2072 = vld [vmem:[%s3 + $0x1d8] sm:$0xff]
    %v2073 = vld [vmem:[%s3 + $0x1e0] sm:$0xff]
    %v2074 = vld [vmem:[%s3 + $0x1e8] sm:$0xff]
    %v2075 = vld [vmem:[%s3 + $0x1f0] sm:$0xff]
    %v2076 = vld [vmem:[%s3 + $0x1f8] sm:$0xff]
    %v2077 = vld [vmem:[%s3 + $0x200] sm:$0xff]
    %v2078 = vld [vmem:[%s3 + $0x208] sm:$0xff]
    %v2079 = vld [vmem:[%s3 + $0x210] sm:$0xff]
    %v2080 = vld [vmem:[%s3 + $0x218] sm:$0xff]
    %v2081 = vld [vmem:[%s3 + $0x220] sm:$0xff]
    %v2082 = vld [vmem:[%s3 + $0x228] sm:$0xff]
    %v2083 = vld [vmem:[%s3 + $0x230] sm:$0xff]
    %v2084 = vld [vmem:[%s3 + $0x238] sm:$0xff]
    %v2085 = vld [vmem:[%s3 + $0x240] sm:$0xff]
    %v2086 = vld [vmem:[%s3 + $0x248] sm:$0xff]
    %v2087 = vld [vmem:[%s3 + $0x250] sm:$0xff]
    %v2088 = vld [vmem:[%s3 + $0x258] sm:$0xff]
    %v2089 = vld [vmem:[%s3 + $0x260] sm:$0xff]
    %v2090 = vld [vmem:[%s3 + $0x268] sm:$0xff]
    %v2091 = vld [vmem:[%s3 + $0x270] sm:$0xff]
    %v2092 = vld [vmem:[%s3 + $0x278] sm:$0xff]
    %v2093 = vld [vmem:[%s3 + $0x280] sm:$0xff]
    %v2094 = vld [vmem:[%s3 + $0x288] sm:$0xff]
    %v2095 = vld [vmem:[%s3 + $0x290] sm:$0xff]
    %v2096 = vld [vmem:[%s3 + $0x298] sm:$0xff]
    %v2097 = vld [vmem:[%s3 + $0x2a0] sm:$0xff]
    %v2098 = vld [vmem:[%s3 + $0x2a8] sm:$0xff]
    %v2099 = vld [vmem:[%s3 + $0x2b0] sm:$0xff]
    %v2100 = vld [vmem:[%s3 + $0x2b8] sm:$0xff]
    %v2101 = vld [vmem:[%s3 + $0x2c0] sm:$0xff]
    %v2102 = vld [vmem:[%s3 + $0x2c8] sm:$0xff]
    %v2103 = vld [vmem:[%s3 + $0x2d0] sm:$0xff]
    %v2104 = vld [vmem:[%s3 + $0x2d8] sm:$0xff]
    %v2105 = vld [vmem:[%s3 + $0x2e0] sm:$0xff]
    %v2106 = vld [vmem:[%s3 + $0x2e8] sm:$0xff]
    %v2107 = vld [vmem:[%s3 + $0x2f0] sm:$0xff]
    %v2108 = vld [vmem:[%s3 + $0x2f8] sm:$0xff]
    %v2109 = vpack.c.bf16 %v1887, %v1885
    %v2110 = vpack.c.bf16 %v1888, %v1886
    %v2111 = vpack.c.bf16 %v1891, %v1889
    %v2112 = vpack.c.bf16 %v1892, %v1890
    %v2113 = vpack.c.bf16 %v1895, %v1893
    %v2114 = vpack.c.bf16 %v1896, %v1894
    %v2115 = vpack.c.bf16 %v1899, %v1897
    %v2116 = vpack.c.bf16 %v1900, %v1898
    %v2117 = vpack.c.bf16 %v1903, %v1901
    %v2118 = vpack.c.bf16 %v1904, %v1902
    %v2119 = vpack.c.bf16 %v1907, %v1905
    %v2120 = vpack.c.bf16 %v1908, %v1906
    %v2121 = vpack.c.bf16 %v1911, %v1909
    %v2122 = vpack.c.bf16 %v1912, %v1910
    %v2123 = vpack.c.bf16 %v1915, %v1913
    %v2124 = vpack.c.bf16 %v1916, %v1914
    %v2125 = vpack.c.bf16 %v1919, %v1917
    %v2126 = vpack.c.bf16 %v1920, %v1918
    %v2127 = vpack.c.bf16 %v1923, %v1921
    %v2128 = vpack.c.bf16 %v1924, %v1922
    %v2129 = vpack.c.bf16 %v1927, %v1925
    %v2130 = vpack.c.bf16 %v1928, %v1926
    %v2131 = vpack.c.bf16 %v1931, %v1929
    %v2132 = vpack.c.bf16 %v1932, %v1930
    %v2133 = vpack.c.bf16 %v1935, %v1933
    %v2134 = vpack.c.bf16 %v1936, %v1934
    %v2135 = vpack.c.bf16 %v1939, %v1937
    %v2136 = vpack.c.bf16 %v1940, %v1938
    %v2137 = vpack.c.bf16 %v1943, %v1941
    %v2138 = vpack.c.bf16 %v1944, %v1942
    %v2139 = vpack.c.bf16 %v1947, %v1945
    %v2140 = vpack.c.bf16 %v1948, %v1946
    %v2141 = vpack.c.bf16 %v1951, %v1949
    %v2142 = vpack.c.bf16 %v1952, %v1950
    %v2143 = vpack.c.bf16 %v1955, %v1953
    %v2144 = vpack.c.bf16 %v1956, %v1954
    %v2145 = vpack.c.bf16 %v1959, %v1957
    %v2146 = vpack.c.bf16 %v1960, %v1958
    %v2147 = vpack.c.bf16 %v1963, %v1961
    %v2148 = vpack.c.bf16 %v1964, %v1962
    %v2149 = vpack.c.bf16 %v1967, %v1965
    %v2150 = vpack.c.bf16 %v1968, %v1966
    %v2151 = vpack.c.bf16 %v1971, %v1969
    %v2152 = vpack.c.bf16 %v1972, %v1970
    %v2153 = vpack.c.bf16 %v1975, %v1973
    %v2154 = vpack.c.bf16 %v1976, %v1974
    %v2155 = vpack.c.bf16 %v1979, %v1977
    %v2156 = vpack.c.bf16 %v1980, %v1978
    %v2157 = vpack.c.bf16 %v1983, %v1981
    %v2158 = vpack.c.bf16 %v1984, %v1982
    %v2159 = vpack.c.bf16 %v1987, %v1985
    %v2160 = vpack.c.bf16 %v1988, %v1986
    %v2161 = vpack.c.bf16 %v1991, %v1989
    %v2162 = vpack.c.bf16 %v1992, %v1990
    %v2163 = vpack.c.bf16 %v1995, %v1993
    %v2164 = vpack.c.bf16 %v1996, %v1994
    %v2165 = vpack.c.bf16 %v1999, %v1997
    %v2166 = vpack.c.bf16 %v2000, %v1998
    %v2167 = vpack.c.bf16 %v2003, %v2001
    %v2168 = vpack.c.bf16 %v2004, %v2002
    %v2169 = vpack.c.bf16 %v2007, %v2005
    %v2170 = vpack.c.bf16 %v2008, %v2006
    %v2171 = vpack.c.bf16 %v2011, %v2009
    %v2172 = vpack.c.bf16 %v2012, %v2010
    %v2173 = vld [vmem:[%s4] sm:$0xff]
    %v2174 = vld [vmem:[%s4 + $0x8] sm:$0xff]
    %v2175 = vld [vmem:[%s4 + $0x10] sm:$0xff]
    %v2176 = vld [vmem:[%s4 + $0x18] sm:$0xff]
    %v2177 = vld [vmem:[%s4 + $0x20] sm:$0xff]
    %v2178 = vld [vmem:[%s4 + $0x28] sm:$0xff]
    %v2179 = vld [vmem:[%s4 + $0x30] sm:$0xff]
    %v2180 = vld [vmem:[%s4 + $0x38] sm:$0xff]
    %v2181 = vld [vmem:[%s4 + $0x40] sm:$0xff]
    %v2182 = vld [vmem:[%s4 + $0x48] sm:$0xff]
    %v2183 = vld [vmem:[%s4 + $0x50] sm:$0xff]
    %v2184 = vld [vmem:[%s4 + $0x58] sm:$0xff]
    %v2185 = vld [vmem:[%s4 + $0x60] sm:$0xff]
    %v2186 = vld [vmem:[%s4 + $0x68] sm:$0xff]
    %v2187 = vld [vmem:[%s4 + $0x70] sm:$0xff]
    %v2188 = vld [vmem:[%s4 + $0x78] sm:$0xff]
    %v2189 = vld [vmem:[%s4 + $0x80] sm:$0xff]
    %v2190 = vld [vmem:[%s4 + $0x88] sm:$0xff]
    %v2191 = vld [vmem:[%s4 + $0x90] sm:$0xff]
    %v2192 = vld [vmem:[%s4 + $0x98] sm:$0xff]
    %v2193 = vld [vmem:[%s4 + $0xa0] sm:$0xff]
    %v2194 = vld [vmem:[%s4 + $0xa8] sm:$0xff]
    %v2195 = vld [vmem:[%s4 + $0xb0] sm:$0xff]
    %v2196 = vld [vmem:[%s4 + $0xb8] sm:$0xff]
    %v2197 = vld [vmem:[%s4 + $0xc0] sm:$0xff]
    %v2198 = vld [vmem:[%s4 + $0xc8] sm:$0xff]
    %v2199 = vld [vmem:[%s4 + $0xd0] sm:$0xff]
    %v2200 = vld [vmem:[%s4 + $0xd8] sm:$0xff]
    %v2201 = vld [vmem:[%s4 + $0xe0] sm:$0xff]
    %v2202 = vld [vmem:[%s4 + $0xe8] sm:$0xff]
    %v2203 = vld [vmem:[%s4 + $0xf0] sm:$0xff]
    %v2204 = vld [vmem:[%s4 + $0xf8] sm:$0xff]
    %v2205 = vld [vmem:[%s4 + $0x100] sm:$0xff]
    %v2206 = vld [vmem:[%s4 + $0x108] sm:$0xff]
    %v2207 = vld [vmem:[%s4 + $0x110] sm:$0xff]
    %v2208 = vld [vmem:[%s4 + $0x118] sm:$0xff]
    %v2209 = vld [vmem:[%s4 + $0x120] sm:$0xff]
    %v2210 = vld [vmem:[%s4 + $0x128] sm:$0xff]
    %v2211 = vld [vmem:[%s4 + $0x130] sm:$0xff]
    %v2212 = vld [vmem:[%s4 + $0x138] sm:$0xff]
    %v2213 = vld [vmem:[%s4 + $0x140] sm:$0xff]
    %v2214 = vld [vmem:[%s4 + $0x148] sm:$0xff]
    %v2215 = vld [vmem:[%s4 + $0x150] sm:$0xff]
    %v2216 = vld [vmem:[%s4 + $0x158] sm:$0xff]
    %v2217 = vld [vmem:[%s4 + $0x160] sm:$0xff]
    %v2218 = vld [vmem:[%s4 + $0x168] sm:$0xff]
    %v2219 = vld [vmem:[%s4 + $0x170] sm:$0xff]
    %v2220 = vld [vmem:[%s4 + $0x178] sm:$0xff]
    %2222 = vset.pattern.permute.xlu0 0
    %2223 = vperm.xlu0 %2222, %v2173
    %v2224 = vpop.permute.xlu0 %2223
    %2227 = vset.pattern.permute.xlu0 0
    %2228 = vperm.xlu0 %2227, %v2174
    %v2229 = vpop.permute.xlu0 %2228
    %2232 = vset.pattern.permute.xlu0 0
    %2233 = vperm.xlu0 %2232, %v2175
    %v2234 = vpop.permute.xlu0 %2233
    %2237 = vset.pattern.permute.xlu0 0
    %2238 = vperm.xlu0 %2237, %v2176
    %v2239 = vpop.permute.xlu0 %2238
    %2242 = vset.pattern.permute.xlu0 0
    %2243 = vperm.xlu0 %2242, %v2177
    %v2244 = vpop.permute.xlu0 %2243
    %2247 = vset.pattern.permute.xlu0 0
    %2248 = vperm.xlu0 %2247, %v2178
    %v2249 = vpop.permute.xlu0 %2248
    %2252 = vset.pattern.permute.xlu0 0
    %2253 = vperm.xlu0 %2252, %v2179
    %v2254 = vpop.permute.xlu0 %2253
    %2257 = vset.pattern.permute.xlu0 0
    %2258 = vperm.xlu0 %2257, %v2180
    %v2259 = vpop.permute.xlu0 %2258
    %2262 = vset.pattern.permute.xlu0 0
    %2263 = vperm.xlu0 %2262, %v2181
    %v2264 = vpop.permute.xlu0 %2263
    %2267 = vset.pattern.permute.xlu0 0
    %2268 = vperm.xlu0 %2267, %v2182
    %v2269 = vpop.permute.xlu0 %2268
    %2272 = vset.pattern.permute.xlu0 0
    %2273 = vperm.xlu0 %2272, %v2183
    %v2274 = vpop.permute.xlu0 %2273
    %2277 = vset.pattern.permute.xlu0 0
    %2278 = vperm.xlu0 %2277, %v2184
    %v2279 = vpop.permute.xlu0 %2278
    %2282 = vset.pattern.permute.xlu0 0
    %2283 = vperm.xlu0 %2282, %v2185
    %v2284 = vpop.permute.xlu0 %2283
    %2287 = vset.pattern.permute.xlu0 0
    %2288 = vperm.xlu0 %2287, %v2186
    %v2289 = vpop.permute.xlu0 %2288
    %2292 = vset.pattern.permute.xlu0 0
    %2293 = vperm.xlu0 %2292, %v2187
    %v2294 = vpop.permute.xlu0 %2293
    %2297 = vset.pattern.permute.xlu0 0
    %2298 = vperm.xlu0 %2297, %v2188
    %v2299 = vpop.permute.xlu0 %2298
    %2302 = vset.pattern.permute.xlu0 0
    %2303 = vperm.xlu0 %2302, %v2189
    %v2304 = vpop.permute.xlu0 %2303
    %2307 = vset.pattern.permute.xlu0 0
    %2308 = vperm.xlu0 %2307, %v2190
    %v2309 = vpop.permute.xlu0 %2308
    %2312 = vset.pattern.permute.xlu0 0
    %2313 = vperm.xlu0 %2312, %v2191
    %v2314 = vpop.permute.xlu0 %2313
    %2317 = vset.pattern.permute.xlu0 0
    %2318 = vperm.xlu0 %2317, %v2192
    %v2319 = vpop.permute.xlu0 %2318
    %2322 = vset.pattern.permute.xlu0 0
    %2323 = vperm.xlu0 %2322, %v2193
    %v2324 = vpop.permute.xlu0 %2323
    %2327 = vset.pattern.permute.xlu0 0
    %2328 = vperm.xlu0 %2327, %v2194
    %v2329 = vpop.permute.xlu0 %2328
    %2332 = vset.pattern.permute.xlu0 0
    %2333 = vperm.xlu0 %2332, %v2195
    %v2334 = vpop.permute.xlu0 %2333
    %2337 = vset.pattern.permute.xlu0 0
    %2338 = vperm.xlu0 %2337, %v2196
    %v2339 = vpop.permute.xlu0 %2338
    %2342 = vset.pattern.permute.xlu0 0
    %2343 = vperm.xlu0 %2342, %v2197
    %v2344 = vpop.permute.xlu0 %2343
    %2347 = vset.pattern.permute.xlu0 0
    %2348 = vperm.xlu0 %2347, %v2198
    %v2349 = vpop.permute.xlu0 %2348
    %2352 = vset.pattern.permute.xlu0 0
    %2353 = vperm.xlu0 %2352, %v2199
    %v2354 = vpop.permute.xlu0 %2353
    %2357 = vset.pattern.permute.xlu0 0
    %2358 = vperm.xlu0 %2357, %v2200
    %v2359 = vpop.permute.xlu0 %2358
    %2362 = vset.pattern.permute.xlu0 0
    %2363 = vperm.xlu0 %2362, %v2201
    %v2364 = vpop.permute.xlu0 %2363
    %2367 = vset.pattern.permute.xlu0 0
    %2368 = vperm.xlu0 %2367, %v2202
    %v2369 = vpop.permute.xlu0 %2368
    %2372 = vset.pattern.permute.xlu0 0
    %2373 = vperm.xlu0 %2372, %v2203
    %v2374 = vpop.permute.xlu0 %2373
    %2377 = vset.pattern.permute.xlu0 0
    %2378 = vperm.xlu0 %2377, %v2204
    %v2379 = vpop.permute.xlu0 %2378
    %2382 = vset.pattern.permute.xlu0 0
    %2383 = vperm.xlu0 %2382, %v2205
    %v2384 = vpop.permute.xlu0 %2383
    %2387 = vset.pattern.permute.xlu0 0
    %2388 = vperm.xlu0 %2387, %v2206
    %v2389 = vpop.permute.xlu0 %2388
    %2392 = vset.pattern.permute.xlu0 0
    %2393 = vperm.xlu0 %2392, %v2207
    %v2394 = vpop.permute.xlu0 %2393
    %2397 = vset.pattern.permute.xlu0 0
    %2398 = vperm.xlu0 %2397, %v2208
    %v2399 = vpop.permute.xlu0 %2398
    %2402 = vset.pattern.permute.xlu0 0
    %2403 = vperm.xlu0 %2402, %v2209
    %v2404 = vpop.permute.xlu0 %2403
    %2407 = vset.pattern.permute.xlu0 0
    %2408 = vperm.xlu0 %2407, %v2210
    %v2409 = vpop.permute.xlu0 %2408
    %2412 = vset.pattern.permute.xlu0 0
    %2413 = vperm.xlu0 %2412, %v2211
    %v2414 = vpop.permute.xlu0 %2413
    %2417 = vset.pattern.permute.xlu0 0
    %2418 = vperm.xlu0 %2417, %v2212
    %v2419 = vpop.permute.xlu0 %2418
    %2422 = vset.pattern.permute.xlu0 0
    %2423 = vperm.xlu0 %2422, %v2213
    %v2424 = vpop.permute.xlu0 %2423
    %2427 = vset.pattern.permute.xlu0 0
    %2428 = vperm.xlu0 %2427, %v2214
    %v2429 = vpop.permute.xlu0 %2428
    %2432 = vset.pattern.permute.xlu0 0
    %2433 = vperm.xlu0 %2432, %v2215
    %v2434 = vpop.permute.xlu0 %2433
    %2437 = vset.pattern.permute.xlu0 0
    %2438 = vperm.xlu0 %2437, %v2216
    %v2439 = vpop.permute.xlu0 %2438
    %2442 = vset.pattern.permute.xlu0 0
    %2443 = vperm.xlu0 %2442, %v2217
    %v2444 = vpop.permute.xlu0 %2443
    %2447 = vset.pattern.permute.xlu0 0
    %2448 = vperm.xlu0 %2447, %v2218
    %v2449 = vpop.permute.xlu0 %2448
    %2452 = vset.pattern.permute.xlu0 0
    %2453 = vperm.xlu0 %2452, %v2219
    %v2454 = vpop.permute.xlu0 %2453
    %2457 = vset.pattern.permute.xlu0 0
    %2458 = vperm.xlu0 %2457, %v2220
    %v2459 = vpop.permute.xlu0 %2458
    %v2557 = vunpack.c.l.b16 %v2013
    %v2558 = vunpack.c.h.b16 %v2013
    %v2559 = vunpack.c.l.b16 %v2014
    %v2560 = vunpack.c.h.b16 %v2014
    %v2561 = vunpack.c.l.b16 %v2015
    %v2562 = vunpack.c.h.b16 %v2015
    %v2563 = vunpack.c.l.b16 %v2016
    %v2564 = vunpack.c.h.b16 %v2016
    %v2565 = vunpack.c.l.b16 %v2017
    %v2566 = vunpack.c.h.b16 %v2017
    %v2567 = vunpack.c.l.b16 %v2018
    %v2568 = vunpack.c.h.b16 %v2018
    %v2569 = vunpack.c.l.b16 %v2019
    %v2570 = vunpack.c.h.b16 %v2019
    %v2571 = vunpack.c.l.b16 %v2020
    %v2572 = vunpack.c.h.b16 %v2020
    %v2573 = vunpack.c.l.b16 %v2021
    %v2574 = vunpack.c.h.b16 %v2021
    %v2575 = vunpack.c.l.b16 %v2022
    %v2576 = vunpack.c.h.b16 %v2022
    %v2577 = vunpack.c.l.b16 %v2023
    %v2578 = vunpack.c.h.b16 %v2023
    %v2579 = vunpack.c.l.b16 %v2024
    %v2580 = vunpack.c.h.b16 %v2024
    %v2581 = vunpack.c.l.b16 %v2025
    %v2582 = vunpack.c.h.b16 %v2025
    %v2583 = vunpack.c.l.b16 %v2026
    %v2584 = vunpack.c.h.b16 %v2026
    %v2585 = vunpack.c.l.b16 %v2027
    %v2586 = vunpack.c.h.b16 %v2027
    %v2587 = vunpack.c.l.b16 %v2028
    %v2588 = vunpack.c.h.b16 %v2028
    %v2589 = vunpack.c.l.b16 %v2029
    %v2590 = vunpack.c.h.b16 %v2029
    %v2591 = vunpack.c.l.b16 %v2030
    %v2592 = vunpack.c.h.b16 %v2030
    %v2593 = vunpack.c.l.b16 %v2031
    %v2594 = vunpack.c.h.b16 %v2031
    %v2595 = vunpack.c.l.b16 %v2032
    %v2596 = vunpack.c.h.b16 %v2032
    %v2597 = vunpack.c.l.b16 %v2033
    %v2598 = vunpack.c.h.b16 %v2033
    %v2599 = vunpack.c.l.b16 %v2034
    %v2600 = vunpack.c.h.b16 %v2034
    %v2601 = vunpack.c.l.b16 %v2035
    %v2602 = vunpack.c.h.b16 %v2035
    %v2603 = vunpack.c.l.b16 %v2036
    %v2604 = vunpack.c.h.b16 %v2036
    %v2605 = vunpack.c.l.b16 %v2037
    %v2606 = vunpack.c.h.b16 %v2037
    %v2607 = vunpack.c.l.b16 %v2038
    %v2608 = vunpack.c.h.b16 %v2038
    %v2609 = vunpack.c.l.b16 %v2039
    %v2610 = vunpack.c.h.b16 %v2039
    %v2611 = vunpack.c.l.b16 %v2040
    %v2612 = vunpack.c.h.b16 %v2040
    %v2613 = vunpack.c.l.b16 %v2041
    %v2614 = vunpack.c.h.b16 %v2041
    %v2615 = vunpack.c.l.b16 %v2042
    %v2616 = vunpack.c.h.b16 %v2042
    %v2617 = vunpack.c.l.b16 %v2043
    %v2618 = vunpack.c.h.b16 %v2043
    %v2619 = vunpack.c.l.b16 %v2044
    %v2620 = vunpack.c.h.b16 %v2044
    %v2621 = vunpack.c.l.b16 %v2045
    %v2622 = vunpack.c.h.b16 %v2045
    %v2623 = vunpack.c.l.b16 %v2046
    %v2624 = vunpack.c.h.b16 %v2046
    %v2625 = vunpack.c.l.b16 %v2047
    %v2626 = vunpack.c.h.b16 %v2047
    %v2627 = vunpack.c.l.b16 %v2048
    %v2628 = vunpack.c.h.b16 %v2048
    %v2629 = vunpack.c.l.b16 %v2049
    %v2630 = vunpack.c.h.b16 %v2049
    %v2631 = vunpack.c.l.b16 %v2050
    %v2632 = vunpack.c.h.b16 %v2050
    %v2633 = vunpack.c.l.b16 %v2051
    %v2634 = vunpack.c.h.b16 %v2051
    %v2635 = vunpack.c.l.b16 %v2052
    %v2636 = vunpack.c.h.b16 %v2052
    %v2637 = vunpack.c.l.b16 %v2053
    %v2638 = vunpack.c.h.b16 %v2053
    %v2639 = vunpack.c.l.b16 %v2054
    %v2640 = vunpack.c.h.b16 %v2054
    %v2641 = vunpack.c.l.b16 %v2055
    %v2642 = vunpack.c.h.b16 %v2055
    %v2643 = vunpack.c.l.b16 %v2056
    %v2644 = vunpack.c.h.b16 %v2056
    %v2645 = vunpack.c.l.b16 %v2057
    %v2646 = vunpack.c.h.b16 %v2057
    %v2647 = vunpack.c.l.b16 %v2058
    %v2648 = vunpack.c.h.b16 %v2058
    %v2649 = vunpack.c.l.b16 %v2059
    %v2650 = vunpack.c.h.b16 %v2059
    %v2651 = vunpack.c.l.b16 %v2060
    %v2652 = vunpack.c.h.b16 %v2060
    %v2653 = vunpack.c.l.b16 %v2061
    %v2654 = vunpack.c.h.b16 %v2061
    %v2655 = vunpack.c.l.b16 %v2062
    %v2656 = vunpack.c.h.b16 %v2062
    %v2657 = vunpack.c.l.b16 %v2063
    %v2658 = vunpack.c.h.b16 %v2063
    %v2659 = vunpack.c.l.b16 %v2064
    %v2660 = vunpack.c.h.b16 %v2064
    %v2661 = vunpack.c.l.b16 %v2065
    %v2662 = vunpack.c.h.b16 %v2065
    %v2663 = vunpack.c.l.b16 %v2066
    %v2664 = vunpack.c.h.b16 %v2066
    %v2665 = vunpack.c.l.b16 %v2067
    %v2666 = vunpack.c.h.b16 %v2067
    %v2667 = vunpack.c.l.b16 %v2068
    %v2668 = vunpack.c.h.b16 %v2068
    %v2669 = vunpack.c.l.b16 %v2069
    %v2670 = vunpack.c.h.b16 %v2069
    %v2671 = vunpack.c.l.b16 %v2070
    %v2672 = vunpack.c.h.b16 %v2070
    %v2673 = vunpack.c.l.b16 %v2071
    %v2674 = vunpack.c.h.b16 %v2071
    %v2675 = vunpack.c.l.b16 %v2072
    %v2676 = vunpack.c.h.b16 %v2072
    %v2677 = vunpack.c.l.b16 %v2073
    %v2678 = vunpack.c.h.b16 %v2073
    %v2679 = vunpack.c.l.b16 %v2074
    %v2680 = vunpack.c.h.b16 %v2074
    %v2681 = vunpack.c.l.b16 %v2075
    %v2682 = vunpack.c.h.b16 %v2075
    %v2683 = vunpack.c.l.b16 %v2076
    %v2684 = vunpack.c.h.b16 %v2076
    %v2685 = vunpack.c.l.b16 %v2077
    %v2686 = vunpack.c.h.b16 %v2077
    %v2687 = vunpack.c.l.b16 %v2078
    %v2688 = vunpack.c.h.b16 %v2078
    %v2689 = vunpack.c.l.b16 %v2079
    %v2690 = vunpack.c.h.b16 %v2079
    %v2691 = vunpack.c.l.b16 %v2080
    %v2692 = vunpack.c.h.b16 %v2080
    %v2693 = vunpack.c.l.b16 %v2081
    %v2694 = vunpack.c.h.b16 %v2081
    %v2695 = vunpack.c.l.b16 %v2082
    %v2696 = vunpack.c.h.b16 %v2082
    %v2697 = vunpack.c.l.b16 %v2083
    %v2698 = vunpack.c.h.b16 %v2083
    %v2699 = vunpack.c.l.b16 %v2084
    %v2700 = vunpack.c.h.b16 %v2084
    %v2701 = vunpack.c.l.b16 %v2085
    %v2702 = vunpack.c.h.b16 %v2085
    %v2703 = vunpack.c.l.b16 %v2086
    %v2704 = vunpack.c.h.b16 %v2086
    %v2705 = vunpack.c.l.b16 %v2087
    %v2706 = vunpack.c.h.b16 %v2087
    %v2707 = vunpack.c.l.b16 %v2088
    %v2708 = vunpack.c.h.b16 %v2088
    %v2709 = vunpack.c.l.b16 %v2089
    %v2710 = vunpack.c.h.b16 %v2089
    %v2711 = vunpack.c.l.b16 %v2090
    %v2712 = vunpack.c.h.b16 %v2090
    %v2713 = vunpack.c.l.b16 %v2091
    %v2714 = vunpack.c.h.b16 %v2091
    %v2715 = vunpack.c.l.b16 %v2092
    %v2716 = vunpack.c.h.b16 %v2092
    %v2717 = vunpack.c.l.b16 %v2093
    %v2718 = vunpack.c.h.b16 %v2093
    %v2719 = vunpack.c.l.b16 %v2094
    %v2720 = vunpack.c.h.b16 %v2094
    %v2721 = vunpack.c.l.b16 %v2095
    %v2722 = vunpack.c.h.b16 %v2095
    %v2723 = vunpack.c.l.b16 %v2096
    %v2724 = vunpack.c.h.b16 %v2096
    %v2725 = vunpack.c.l.b16 %v2097
    %v2726 = vunpack.c.h.b16 %v2097
    %v2727 = vunpack.c.l.b16 %v2098
    %v2728 = vunpack.c.h.b16 %v2098
    %v2729 = vunpack.c.l.b16 %v2099
    %v2730 = vunpack.c.h.b16 %v2099
    %v2731 = vunpack.c.l.b16 %v2100
    %v2732 = vunpack.c.h.b16 %v2100
    %v2733 = vunpack.c.l.b16 %v2101
    %v2734 = vunpack.c.h.b16 %v2101
    %v2735 = vunpack.c.l.b16 %v2102
    %v2736 = vunpack.c.h.b16 %v2102
    %v2737 = vunpack.c.l.b16 %v2103
    %v2738 = vunpack.c.h.b16 %v2103
    %v2739 = vunpack.c.l.b16 %v2104
    %v2740 = vunpack.c.h.b16 %v2104
    %v2741 = vunpack.c.l.b16 %v2105
    %v2742 = vunpack.c.h.b16 %v2105
    %v2743 = vunpack.c.l.b16 %v2106
    %v2744 = vunpack.c.h.b16 %v2106
    %v2745 = vunpack.c.l.b16 %v2107
    %v2746 = vunpack.c.h.b16 %v2107
    %v2747 = vunpack.c.l.b16 %v2108
    %v2748 = vunpack.c.h.b16 %v2108
    %v2749 = vpack.c.b16 %v2561, %v2557
    %v2750 = vpack.c.b16 %v2562, %v2558
    %v2751 = vpack.c.b16 %v2563, %v2559
    %v2752 = vpack.c.b16 %v2564, %v2560
    %v2753 = vpack.c.b16 %v2569, %v2565
    %v2754 = vpack.c.b16 %v2570, %v2566
    %v2755 = vpack.c.b16 %v2571, %v2567
    %v2756 = vpack.c.b16 %v2572, %v2568
    %v2757 = vpack.c.b16 %v2577, %v2573
    %v2758 = vpack.c.b16 %v2578, %v2574
    %v2759 = vpack.c.b16 %v2579, %v2575
    %v2760 = vpack.c.b16 %v2580, %v2576
    %v2761 = vpack.c.b16 %v2585, %v2581
    %v2762 = vpack.c.b16 %v2586, %v2582
    %v2763 = vpack.c.b16 %v2587, %v2583
    %v2764 = vpack.c.b16 %v2588, %v2584
    %v2765 = vpack.c.b16 %v2593, %v2589
    %v2766 = vpack.c.b16 %v2594, %v2590
    %v2767 = vpack.c.b16 %v2595, %v2591
    %v2768 = vpack.c.b16 %v2596, %v2592
    %v2769 = vpack.c.b16 %v2601, %v2597
    %v2770 = vpack.c.b16 %v2602, %v2598
    %v2771 = vpack.c.b16 %v2603, %v2599
    %v2772 = vpack.c.b16 %v2604, %v2600
    %v2773 = vpack.c.b16 %v2609, %v2605
    %v2774 = vpack.c.b16 %v2610, %v2606
    %v2775 = vpack.c.b16 %v2611, %v2607
    %v2776 = vpack.c.b16 %v2612, %v2608
    %v2777 = vpack.c.b16 %v2617, %v2613
    %v2778 = vpack.c.b16 %v2618, %v2614
    %v2779 = vpack.c.b16 %v2619, %v2615
    %v2780 = vpack.c.b16 %v2620, %v2616
    %v2781 = vpack.c.b16 %v2625, %v2621
    %v2782 = vpack.c.b16 %v2626, %v2622
    %v2783 = vpack.c.b16 %v2627, %v2623
    %v2784 = vpack.c.b16 %v2628, %v2624
    %v2785 = vpack.c.b16 %v2633, %v2629
    %v2786 = vpack.c.b16 %v2634, %v2630
    %v2787 = vpack.c.b16 %v2635, %v2631
    %v2788 = vpack.c.b16 %v2636, %v2632
    %v2789 = vpack.c.b16 %v2641, %v2637
    %v2790 = vpack.c.b16 %v2642, %v2638
    %v2791 = vpack.c.b16 %v2643, %v2639
    %v2792 = vpack.c.b16 %v2644, %v2640
    %v2793 = vpack.c.b16 %v2649, %v2645
    %v2794 = vpack.c.b16 %v2650, %v2646
    %v2795 = vpack.c.b16 %v2651, %v2647
    %v2796 = vpack.c.b16 %v2652, %v2648
    %v2797 = vpack.c.b16 %v2657, %v2653
    %v2798 = vpack.c.b16 %v2658, %v2654
    %v2799 = vpack.c.b16 %v2659, %v2655
    %v2800 = vpack.c.b16 %v2660, %v2656
    %v2801 = vpack.c.b16 %v2665, %v2661
    %v2802 = vpack.c.b16 %v2666, %v2662
    %v2803 = vpack.c.b16 %v2667, %v2663
    %v2804 = vpack.c.b16 %v2668, %v2664
    %v2805 = vpack.c.b16 %v2673, %v2669
    %v2806 = vpack.c.b16 %v2674, %v2670
    %v2807 = vpack.c.b16 %v2675, %v2671
    %v2808 = vpack.c.b16 %v2676, %v2672
    %v2809 = vpack.c.b16 %v2681, %v2677
    %v2810 = vpack.c.b16 %v2682, %v2678
    %v2811 = vpack.c.b16 %v2683, %v2679
    %v2812 = vpack.c.b16 %v2684, %v2680
    %v2813 = vpack.c.b16 %v2689, %v2685
    %v2814 = vpack.c.b16 %v2690, %v2686
    %v2815 = vpack.c.b16 %v2691, %v2687
    %v2816 = vpack.c.b16 %v2692, %v2688
    %v2817 = vpack.c.b16 %v2697, %v2693
    %v2818 = vpack.c.b16 %v2698, %v2694
    %v2819 = vpack.c.b16 %v2699, %v2695
    %v2820 = vpack.c.b16 %v2700, %v2696
    %v2821 = vpack.c.b16 %v2705, %v2701
    %v2822 = vpack.c.b16 %v2706, %v2702
    %v2823 = vpack.c.b16 %v2707, %v2703
    %v2824 = vpack.c.b16 %v2708, %v2704
    %v2825 = vpack.c.b16 %v2713, %v2709
    %v2826 = vpack.c.b16 %v2714, %v2710
    %v2827 = vpack.c.b16 %v2715, %v2711
    %v2828 = vpack.c.b16 %v2716, %v2712
    %v2829 = vpack.c.b16 %v2721, %v2717
    %v2830 = vpack.c.b16 %v2722, %v2718
    %v2831 = vpack.c.b16 %v2723, %v2719
    %v2832 = vpack.c.b16 %v2724, %v2720
    %v2833 = vpack.c.b16 %v2729, %v2725
    %v2834 = vpack.c.b16 %v2730, %v2726
    %v2835 = vpack.c.b16 %v2731, %v2727
    %v2836 = vpack.c.b16 %v2732, %v2728
    %v2837 = vpack.c.b16 %v2737, %v2733
    %v2838 = vpack.c.b16 %v2738, %v2734
    %v2839 = vpack.c.b16 %v2739, %v2735
    %v2840 = vpack.c.b16 %v2740, %v2736
    %v2841 = vpack.c.b16 %v2745, %v2741
    %v2842 = vpack.c.b16 %v2746, %v2742
    %v2843 = vpack.c.b16 %v2747, %v2743
    %v2844 = vpack.c.b16 %v2748, %v2744
    %2941 = vmatprep.subr.bf16.mxu0 %v2110
    %2942 = vmatpush1.bf16.msra.mxu0 %v2109
    %2943 = vmatprep.subr.bf16.mxu0 %v2112
    %2944 = vmatpush1.bf16.msra.mxu0 %v2111
    %2945 = vmatprep.subr.bf16.mxu0 %v2114
    %2946 = vmatpush1.bf16.msra.mxu0 %v2113
    %2947 = vmatprep.subr.bf16.mxu0 %v2116
    %2948 = vmatpush1.bf16.msra.mxu0 %v2115
    %2949 = vmatprep.subr.bf16.mxu0 %v2118
    %2950 = vmatpush1.bf16.msra.mxu0 %v2117
    %2951 = vmatprep.subr.bf16.mxu0 %v2120
    %2952 = vmatpush1.bf16.msra.mxu0 %v2119
    %2953 = vmatprep.subr.bf16.mxu0 %v2122
    %2954 = vmatpush1.bf16.msra.mxu0 %v2121
    %2955 = vmatprep.subr.bf16.mxu0 %v2124
    %2956 = vmatpush1.bf16.msra.mxu0 %v2123
    %2957 = vmatprep.subr.bf16.mxu0 %v2126
    %2958 = vmatpush1.bf16.msra.mxu0 %v2125
    %2959 = vmatprep.subr.bf16.mxu0 %v2128
    %2960 = vmatpush1.bf16.msra.mxu0 %v2127
    %2961 = vmatprep.subr.bf16.mxu0 %v2130
    %2962 = vmatpush1.bf16.msra.mxu0 %v2129
    %2963 = vmatprep.subr.bf16.mxu0 %v2132
    %2964 = vmatpush1.bf16.msra.mxu0 %v2131
    %2965 = vmatprep.subr.bf16.mxu0 %v2134
    %2966 = vmatpush1.bf16.msra.mxu0 %v2133
    %2967 = vmatprep.subr.bf16.mxu0 %v2136
    %2968 = vmatpush1.bf16.msra.mxu0 %v2135
    %2969 = vmatprep.subr.bf16.mxu0 %v2138
    %2970 = vmatpush1.bf16.msra.mxu0 %v2137
    %2971 = vmatprep.subr.bf16.mxu0 %v2140
    %2972 = vmatpush1.bf16.msra.mxu0 %v2139
    %2973 = vmatprep.mubr.bf16.mxu0 %v2750
    %2974 = vmatmul.mubr.bf16.gmra.mrb[0].mxu0 %v2749
    %v2975 = vpop.f32.mrb[0].mxu0
    %v2976 = vadd.f32 %v2224, %v2975
    %v2977 = vpop.f32.mrb[0].mxu0
    %v2978 = vadd.f32 %v2224, %v2977
    %v2979 = vpop.f32.mrb[0].mxu0
    %v2980 = vadd.f32 %v2229, %v2979
    %v2981 = vpop.f32.mrb[0].mxu0
    %v2982 = vadd.f32 %v2229, %v2981
    %2983 = vmatprep.mubr.bf16.mxu0 %v2754
    %2984 = vmatmul.mubr.bf16.gmra.mrb[0].mxu0 %v2753
    %v2985 = vpop.f32.mrb[0].mxu0
    %v2986 = vadd.f32 %v2234, %v2985
    %v2987 = vpop.f32.mrb[0].mxu0
    %v2988 = vadd.f32 %v2234, %v2987
    %v2989 = vpop.f32.mrb[0].mxu0
    %v2990 = vadd.f32 %v2239, %v2989
    %v2991 = vpop.f32.mrb[0].mxu0
    %v2992 = vadd.f32 %v2239, %v2991
    %2993 = vmatprep.mubr.bf16.mxu0 %v2758
    %2994 = vmatmul.mubr.bf16.gmra.mrb[0].mxu0 %v2757
    %v2995 = vpop.f32.mrb[0].mxu0
    %v2996 = vadd.f32 %v2244, %v2995
    %v2997 = vpop.f32.mrb[0].mxu0
    %v2998 = vadd.f32 %v2244, %v2997
    %v2999 = vpop.f32.mrb[0].mxu0
    %v3000 = vadd.f32 %v2249, %v2999
    %v3001 = vpop.f32.mrb[0].mxu0
    %v3002 = vadd.f32 %v2249, %v3001
    %3003 = vmatprep.mubr.bf16.mxu0 %v2762
    %3004 = vmatmul.mubr.bf16.gmra.mrb[0].mxu0 %v2761
    %v3005 = vpop.f32.mrb[0].mxu0
    %v3006 = vadd.f32 %v2254, %v3005
    %v3007 = vpop.f32.mrb[0].mxu0
    %v3008 = vadd.f32 %v2254, %v3007
    %v3009 = vpop.f32.mrb[0].mxu0
    %v3010 = vadd.f32 %v2259, %v3009
    %v3011 = vpop.f32.mrb[0].mxu0
    %v3012 = vadd.f32 %v2259, %v3011
    %3013 = vmatprep.mubr.bf16.mxu0 %v2766
    %3014 = vmatmul.mubr.bf16.gmra.mrb[0].mxu0 %v2765
    %v3015 = vpop.f32.mrb[0].mxu0
    %v3016 = vadd.f32 %v2264, %v3015
    %v3017 = vpop.f32.mrb[0].mxu0
    %v3018 = vadd.f32 %v2264, %v3017
    %v3019 = vpop.f32.mrb[0].mxu0
    %v3020 = vadd.f32 %v2269, %v3019
    %v3021 = vpop.f32.mrb[0].mxu0
    %v3022 = vadd.f32 %v2269, %v3021
    %3023 = vmatprep.mubr.bf16.mxu0 %v2770
    %3024 = vmatmul.mubr.bf16.gmra.mrb[0].mxu0 %v2769
    %v3025 = vpop.f32.mrb[0].mxu0
    %v3026 = vadd.f32 %v2274, %v3025
    %v3027 = vpop.f32.mrb[0].mxu0
    %v3028 = vadd.f32 %v2274, %v3027
    %v3029 = vpop.f32.mrb[0].mxu0
    %v3030 = vadd.f32 %v2279, %v3029
    %v3031 = vpop.f32.mrb[0].mxu0
    %v3032 = vadd.f32 %v2279, %v3031
    %3033 = vmatprep.mubr.bf16.mxu0 %v2774
    %3034 = vmatmul.mubr.bf16.gmra.mrb[0].mxu0 %v2773
    %v3035 = vpop.f32.mrb[0].mxu0
    %v3036 = vadd.f32 %v2284, %v3035
    %v3037 = vpop.f32.mrb[0].mxu0
    %v3038 = vadd.f32 %v2284, %v3037
    %v3039 = vpop.f32.mrb[0].mxu0
    %v3040 = vadd.f32 %v2289, %v3039
    %v3041 = vpop.f32.mrb[0].mxu0
    %v3042 = vadd.f32 %v2289, %v3041
    %3043 = vmatprep.mubr.bf16.mxu0 %v2778
    %3044 = vmatmul.mubr.bf16.gmra.mrb[0].mxu0 %v2777
    %v3045 = vpop.f32.mrb[0].mxu0
    %v3046 = vadd.f32 %v2294, %v3045
    %v3047 = vpop.f32.mrb[0].mxu0
    %v3048 = vadd.f32 %v2294, %v3047
    %v3049 = vpop.f32.mrb[0].mxu0
    %v3050 = vadd.f32 %v2299, %v3049
    %v3051 = vpop.f32.mrb[0].mxu0
    %v3052 = vadd.f32 %v2299, %v3051
    %3053 = vmatprep.mubr.bf16.mxu0 %v2782
    %3054 = vmatmul.mubr.bf16.gmra.mrb[0].mxu0 %v2781
    %v3055 = vpop.f32.mrb[0].mxu0
    %v3056 = vadd.f32 %v2304, %v3055
    %v3057 = vpop.f32.mrb[0].mxu0
    %v3058 = vadd.f32 %v2304, %v3057
    %v3059 = vpop.f32.mrb[0].mxu0
    %v3060 = vadd.f32 %v2309, %v3059
    %v3061 = vpop.f32.mrb[0].mxu0
    %v3062 = vadd.f32 %v2309, %v3061
    %3063 = vmatprep.mubr.bf16.mxu0 %v2786
    %3064 = vmatmul.mubr.bf16.gmra.mrb[0].mxu0 %v2785
    %v3065 = vpop.f32.mrb[0].mxu0
    %v3066 = vadd.f32 %v2314, %v3065
    %v3067 = vpop.f32.mrb[0].mxu0
    %v3068 = vadd.f32 %v2314, %v3067
    %v3069 = vpop.f32.mrb[0].mxu0
    %v3070 = vadd.f32 %v2319, %v3069
    %v3071 = vpop.f32.mrb[0].mxu0
    %v3072 = vadd.f32 %v2319, %v3071
    %3073 = vmatprep.mubr.bf16.mxu0 %v2790
    %3074 = vmatmul.mubr.bf16.gmra.mrb[0].mxu0 %v2789
    %v3075 = vpop.f32.mrb[0].mxu0
    %v3076 = vadd.f32 %v2324, %v3075
    %v3077 = vpop.f32.mrb[0].mxu0
    %v3078 = vadd.f32 %v2324, %v3077
    %v3079 = vpop.f32.mrb[0].mxu0
    %v3080 = vadd.f32 %v2329, %v3079
    %v3081 = vpop.f32.mrb[0].mxu0
    %v3082 = vadd.f32 %v2329, %v3081
    %3083 = vmatprep.mubr.bf16.mxu0 %v2794
    %3084 = vmatmul.mubr.bf16.gmra.mrb[0].mxu0 %v2793
    %v3085 = vpop.f32.mrb[0].mxu0
    %v3086 = vadd.f32 %v2334, %v3085
    %v3087 = vpop.f32.mrb[0].mxu0
    %v3088 = vadd.f32 %v2334, %v3087
    %v3089 = vpop.f32.mrb[0].mxu0
    %v3090 = vadd.f32 %v2339, %v3089
    %v3091 = vpop.f32.mrb[0].mxu0
    %v3092 = vadd.f32 %v2339, %v3091
    %3093 = vmatprep.mubr.bf16.mxu0 %v2798
    %3094 = vmatmul.mubr.bf16.gmra.mrb[0].mxu0 %v2797
    %v3095 = vpop.f32.mrb[0].mxu0
    %v3096 = vadd.f32 %v2344, %v3095
    %v3097 = vpop.f32.mrb[0].mxu0
    %v3098 = vadd.f32 %v2344, %v3097
    %v3099 = vpop.f32.mrb[0].mxu0
    %v3100 = vadd.f32 %v2349, %v3099
    %v3101 = vpop.f32.mrb[0].mxu0
    %v3102 = vadd.f32 %v2349, %v3101
    %3103 = vmatprep.mubr.bf16.mxu0 %v2802
    %3104 = vmatmul.mubr.bf16.gmra.mrb[0].mxu0 %v2801
    %v3105 = vpop.f32.mrb[0].mxu0
    %v3106 = vadd.f32 %v2354, %v3105
    %v3107 = vpop.f32.mrb[0].mxu0
    %v3108 = vadd.f32 %v2354, %v3107
    %v3109 = vpop.f32.mrb[0].mxu0
    %v3110 = vadd.f32 %v2359, %v3109
    %v3111 = vpop.f32.mrb[0].mxu0
    %v3112 = vadd.f32 %v2359, %v3111
    %3113 = vmatprep.mubr.bf16.mxu0 %v2806
    %3114 = vmatmul.mubr.bf16.gmra.mrb[0].mxu0 %v2805
    %v3115 = vpop.f32.mrb[0].mxu0
    %v3116 = vadd.f32 %v2364, %v3115
    %v3117 = vpop.f32.mrb[0].mxu0
    %v3118 = vadd.f32 %v2364, %v3117
    %v3119 = vpop.f32.mrb[0].mxu0
    %v3120 = vadd.f32 %v2369, %v3119
    %v3121 = vpop.f32.mrb[0].mxu0
    %v3122 = vadd.f32 %v2369, %v3121
    %3123 = vmatprep.mubr.bf16.mxu0 %v2810
    %3124 = vmatmul.mubr.bf16.gmra.mrb[0].mxu0 %v2809
    %v3125 = vpop.f32.mrb[0].mxu0
    %v3126 = vadd.f32 %v2374, %v3125
    %v3127 = vpop.f32.mrb[0].mxu0
    %v3128 = vadd.f32 %v2374, %v3127
    %v3129 = vpop.f32.mrb[0].mxu0
    %v3130 = vadd.f32 %v2379, %v3129
    %v3131 = vpop.f32.mrb[0].mxu0
    %v3132 = vadd.f32 %v2379, %v3131
    %3133 = vmatprep.mubr.bf16.mxu0 %v2814
    %3134 = vmatmul.mubr.bf16.gmra.mrb[0].mxu0 %v2813
    %v3135 = vpop.f32.mrb[0].mxu0
    %v3136 = vadd.f32 %v2384, %v3135
    %v3137 = vpop.f32.mrb[0].mxu0
    %v3138 = vadd.f32 %v2384, %v3137
    %v3139 = vpop.f32.mrb[0].mxu0
    %v3140 = vadd.f32 %v2389, %v3139
    %v3141 = vpop.f32.mrb[0].mxu0
    %v3142 = vadd.f32 %v2389, %v3141
    %3143 = vmatprep.mubr.bf16.mxu0 %v2818
    %3144 = vmatmul.mubr.bf16.gmra.mrb[0].mxu0 %v2817
    %v3145 = vpop.f32.mrb[0].mxu0
    %v3146 = vadd.f32 %v2394, %v3145
    %v3147 = vpop.f32.mrb[0].mxu0
    %v3148 = vadd.f32 %v2394, %v3147
    %v3149 = vpop.f32.mrb[0].mxu0
    %v3150 = vadd.f32 %v2399, %v3149
    %v3151 = vpop.f32.mrb[0].mxu0
    %v3152 = vadd.f32 %v2399, %v3151
    %3153 = vmatprep.mubr.bf16.mxu0 %v2822
    %3154 = vmatmul.mubr.bf16.gmra.mrb[0].mxu0 %v2821
    %v3155 = vpop.f32.mrb[0].mxu0
    %v3156 = vadd.f32 %v2404, %v3155
    %v3157 = vpop.f32.mrb[0].mxu0
    %v3158 = vadd.f32 %v2404, %v3157
    %v3159 = vpop.f32.mrb[0].mxu0
    %v3160 = vadd.f32 %v2409, %v3159
    %v3161 = vpop.f32.mrb[0].mxu0
    %v3162 = vadd.f32 %v2409, %v3161
    %3163 = vmatprep.mubr.bf16.mxu0 %v2826
    %3164 = vmatmul.mubr.bf16.gmra.mrb[0].mxu0 %v2825
    %v3165 = vpop.f32.mrb[0].mxu0
    %v3166 = vadd.f32 %v2414, %v3165
    %v3167 = vpop.f32.mrb[0].mxu0
    %v3168 = vadd.f32 %v2414, %v3167
    %v3169 = vpop.f32.mrb[0].mxu0
    %v3170 = vadd.f32 %v2419, %v3169
    %v3171 = vpop.f32.mrb[0].mxu0
    %v3172 = vadd.f32 %v2419, %v3171
    %3173 = vmatprep.mubr.bf16.mxu0 %v2830
    %3174 = vmatmul.mubr.bf16.gmra.mrb[0].mxu0 %v2829
    %v3175 = vpop.f32.mrb[0].mxu0
    %v3176 = vadd.f32 %v2424, %v3175
    %v3177 = vpop.f32.mrb[0].mxu0
    %v3178 = vadd.f32 %v2424, %v3177
    %v3179 = vpop.f32.mrb[0].mxu0
    %v3180 = vadd.f32 %v2429, %v3179
    %v3181 = vpop.f32.mrb[0].mxu0
    %v3182 = vadd.f32 %v2429, %v3181
    %3183 = vmatprep.mubr.bf16.mxu0 %v2834
    %3184 = vmatmul.mubr.bf16.gmra.mrb[0].mxu0 %v2833
    %v3185 = vpop.f32.mrb[0].mxu0
    %v3186 = vadd.f32 %v2434, %v3185
    %v3187 = vpop.f32.mrb[0].mxu0
    %v3188 = vadd.f32 %v2434, %v3187
    %v3189 = vpop.f32.mrb[0].mxu0
    %v3190 = vadd.f32 %v2439, %v3189
    %v3191 = vpop.f32.mrb[0].mxu0
    %v3192 = vadd.f32 %v2439, %v3191
    %3193 = vmatprep.mubr.bf16.mxu0 %v2838
    %3194 = vmatmul.mubr.bf16.gmra.mrb[0].mxu0 %v2837
    %v3195 = vpop.f32.mrb[0].mxu0
    %v3196 = vadd.f32 %v2444, %v3195
    %v3197 = vpop.f32.mrb[0].mxu0
    %v3198 = vadd.f32 %v2444, %v3197
    %v3199 = vpop.f32.mrb[0].mxu0
    %v3200 = vadd.f32 %v2449, %v3199
    %v3201 = vpop.f32.mrb[0].mxu0
    %v3202 = vadd.f32 %v2449, %v3201
    %3203 = vmatprep.mubr.bf16.mxu0 %v2842
    %3204 = vmatmul.mubr.bf16.gmra.mrb[0].mxu0 %v2841
    %v3205 = vpop.f32.mrb[0].mxu0
    %v3206 = vadd.f32 %v2454, %v3205
    %v3207 = vpop.f32.mrb[0].mxu0
    %v3208 = vadd.f32 %v2454, %v3207
    %v3209 = vpop.f32.mrb[0].mxu0
    %v3210 = vadd.f32 %v2459, %v3209
    %v3211 = vpop.f32.mrb[0].mxu0
    %v3212 = vadd.f32 %v2459, %v3211
    %3213 = vdwg.mxu0
    %3214 = vmatprep.subr.bf16.mxu0 %v2142
    %3215 = vmatpush1.bf16.msra.mxu0 %v2141
    %3216 = vmatprep.subr.bf16.mxu0 %v2144
    %3217 = vmatpush1.bf16.msra.mxu0 %v2143
    %3218 = vmatprep.subr.bf16.mxu0 %v2146
    %3219 = vmatpush1.bf16.msra.mxu0 %v2145
    %3220 = vmatprep.subr.bf16.mxu0 %v2148
    %3221 = vmatpush1.bf16.msra.mxu0 %v2147
    %3222 = vmatprep.subr.bf16.mxu0 %v2150
    %3223 = vmatpush1.bf16.msra.mxu0 %v2149
    %3224 = vmatprep.subr.bf16.mxu0 %v2152
    %3225 = vmatpush1.bf16.msra.mxu0 %v2151
    %3226 = vmatprep.subr.bf16.mxu0 %v2154
    %3227 = vmatpush1.bf16.msra.mxu0 %v2153
    %3228 = vmatprep.subr.bf16.mxu0 %v2156
    %3229 = vmatpush1.bf16.msra.mxu0 %v2155
    %3230 = vmatprep.subr.bf16.mxu0 %v2158
    %3231 = vmatpush1.bf16.msra.mxu0 %v2157
    %3232 = vmatprep.subr.bf16.mxu0 %v2160
    %3233 = vmatpush1.bf16.msra.mxu0 %v2159
    %3234 = vmatprep.subr.bf16.mxu0 %v2162
    %3235 = vmatpush1.bf16.msra.mxu0 %v2161
    %3236 = vmatprep.subr.bf16.mxu0 %v2164
    %3237 = vmatpush1.bf16.msra.mxu0 %v2163
    %3238 = vmatprep.subr.bf16.mxu0 %v2166
    %3239 = vmatpush1.bf16.msra.mxu0 %v2165
    %3240 = vmatprep.subr.bf16.mxu0 %v2168
    %3241 = vmatpush1.bf16.msra.mxu0 %v2167
    %3242 = vmatprep.subr.bf16.mxu0 %v2170
    %3243 = vmatpush1.bf16.msra.mxu0 %v2169
    %3244 = vmatprep.subr.bf16.mxu0 %v2172
    %3245 = vmatpush1.bf16.msra.mxu0 %v2171
    %3246 = vmatprep.mubr.bf16.mxu0 %v2752
    %3247 = vmatmul.mubr.bf16.gmra.mrb[0].mxu0 %v2751
    %v3248 = vpop.f32.mrb[0].mxu0
    %v3249 = vadd.f32 %v2976, %v3248
    %v3250 = vpop.f32.mrb[0].mxu0
    %v3251 = vadd.f32 %v2978, %v3250
    %v3252 = vpop.f32.mrb[0].mxu0
    %v3253 = vadd.f32 %v2980, %v3252
    %v3254 = vpop.f32.mrb[0].mxu0
    %v3255 = vadd.f32 %v2982, %v3254
    %3256 = vmatprep.mubr.bf16.mxu0 %v2756
    %3257 = vmatmul.mubr.bf16.gmra.mrb[0].mxu0 %v2755
    %v3258 = vpop.f32.mrb[0].mxu0
    %v3259 = vadd.f32 %v2986, %v3258
    %v3260 = vpop.f32.mrb[0].mxu0
    %v3261 = vadd.f32 %v2988, %v3260
    %v3262 = vpop.f32.mrb[0].mxu0
    %v3263 = vadd.f32 %v2990, %v3262
    %v3264 = vpop.f32.mrb[0].mxu0
    %v3265 = vadd.f32 %v2992, %v3264
    %3266 = vmatprep.mubr.bf16.mxu0 %v2760
    %3267 = vmatmul.mubr.bf16.gmra.mrb[0].mxu0 %v2759
    %v3268 = vpop.f32.mrb[0].mxu0
    %v3269 = vadd.f32 %v2996, %v3268
    %v3270 = vpop.f32.mrb[0].mxu0
    %v3271 = vadd.f32 %v2998, %v3270
    %v3272 = vpop.f32.mrb[0].mxu0
    %v3273 = vadd.f32 %v3000, %v3272
    %v3274 = vpop.f32.mrb[0].mxu0
    %v3275 = vadd.f32 %v3002, %v3274
    %3276 = vmatprep.mubr.bf16.mxu0 %v2764
    %3277 = vmatmul.mubr.bf16.gmra.mrb[0].mxu0 %v2763
    %v3278 = vpop.f32.mrb[0].mxu0
    %v3279 = vadd.f32 %v3006, %v3278
    %v3280 = vpop.f32.mrb[0].mxu0
    %v3281 = vadd.f32 %v3008, %v3280
    %v3282 = vpop.f32.mrb[0].mxu0
    %v3283 = vadd.f32 %v3010, %v3282
    %v3284 = vpop.f32.mrb[0].mxu0
    %v3285 = vadd.f32 %v3012, %v3284
    %3286 = vmatprep.mubr.bf16.mxu0 %v2768
    %3287 = vmatmul.mubr.bf16.gmra.mrb[0].mxu0 %v2767
    %v3288 = vpop.f32.mrb[0].mxu0
    %v3289 = vadd.f32 %v3016, %v3288
    %v3290 = vpop.f32.mrb[0].mxu0
    %v3291 = vadd.f32 %v3018, %v3290
    %v3292 = vpop.f32.mrb[0].mxu0
    %v3293 = vadd.f32 %v3020, %v3292
    %v3294 = vpop.f32.mrb[0].mxu0
    %v3295 = vadd.f32 %v3022, %v3294
    %3296 = vmatprep.mubr.bf16.mxu0 %v2772
    %3297 = vmatmul.mubr.bf16.gmra.mrb[0].mxu0 %v2771
    %v3298 = vpop.f32.mrb[0].mxu0
    %v3299 = vadd.f32 %v3026, %v3298
    %v3300 = vpop.f32.mrb[0].mxu0
    %v3301 = vadd.f32 %v3028, %v3300
    %v3302 = vpop.f32.mrb[0].mxu0
    %v3303 = vadd.f32 %v3030, %v3302
    %v3304 = vpop.f32.mrb[0].mxu0
    %v3305 = vadd.f32 %v3032, %v3304
    %3306 = vmatprep.mubr.bf16.mxu0 %v2776
    %3307 = vmatmul.mubr.bf16.gmra.mrb[0].mxu0 %v2775
    %v3308 = vpop.f32.mrb[0].mxu0
    %v3309 = vadd.f32 %v3036, %v3308
    %v3310 = vpop.f32.mrb[0].mxu0
    %v3311 = vadd.f32 %v3038, %v3310
    %v3312 = vpop.f32.mrb[0].mxu0
    %v3313 = vadd.f32 %v3040, %v3312
    %v3314 = vpop.f32.mrb[0].mxu0
    %v3315 = vadd.f32 %v3042, %v3314
    %3316 = vmatprep.mubr.bf16.mxu0 %v2780
    %3317 = vmatmul.mubr.bf16.gmra.mrb[0].mxu0 %v2779
    %v3318 = vpop.f32.mrb[0].mxu0
    %v3319 = vadd.f32 %v3046, %v3318
    %v3320 = vpop.f32.mrb[0].mxu0
    %v3321 = vadd.f32 %v3048, %v3320
    %v3322 = vpop.f32.mrb[0].mxu0
    %v3323 = vadd.f32 %v3050, %v3322
    %v3324 = vpop.f32.mrb[0].mxu0
    %v3325 = vadd.f32 %v3052, %v3324
    %3326 = vmatprep.mubr.bf16.mxu0 %v2784
    %3327 = vmatmul.mubr.bf16.gmra.mrb[0].mxu0 %v2783
    %v3328 = vpop.f32.mrb[0].mxu0
    %v3329 = vadd.f32 %v3056, %v3328
    %v3330 = vpop.f32.mrb[0].mxu0
    %v3331 = vadd.f32 %v3058, %v3330
    %v3332 = vpop.f32.mrb[0].mxu0
    %v3333 = vadd.f32 %v3060, %v3332
    %v3334 = vpop.f32.mrb[0].mxu0
    %v3335 = vadd.f32 %v3062, %v3334
    %3336 = vmatprep.mubr.bf16.mxu0 %v2788
    %3337 = vmatmul.mubr.bf16.gmra.mrb[0].mxu0 %v2787
    %v3338 = vpop.f32.mrb[0].mxu0
    %v3339 = vadd.f32 %v3066, %v3338
    %v3340 = vpop.f32.mrb[0].mxu0
    %v3341 = vadd.f32 %v3068, %v3340
    %v3342 = vpop.f32.mrb[0].mxu0
    %v3343 = vadd.f32 %v3070, %v3342
    %v3344 = vpop.f32.mrb[0].mxu0
    %v3345 = vadd.f32 %v3072, %v3344
    %3346 = vmatprep.mubr.bf16.mxu0 %v2792
    %3347 = vmatmul.mubr.bf16.gmra.mrb[0].mxu0 %v2791
    %v3348 = vpop.f32.mrb[0].mxu0
    %v3349 = vadd.f32 %v3076, %v3348
    %v3350 = vpop.f32.mrb[0].mxu0
    %v3351 = vadd.f32 %v3078, %v3350
    %v3352 = vpop.f32.mrb[0].mxu0
    %v3353 = vadd.f32 %v3080, %v3352
    %v3354 = vpop.f32.mrb[0].mxu0
    %v3355 = vadd.f32 %v3082, %v3354
    %3356 = vmatprep.mubr.bf16.mxu0 %v2796
    %3357 = vmatmul.mubr.bf16.gmra.mrb[0].mxu0 %v2795
    %v3358 = vpop.f32.mrb[0].mxu0
    %v3359 = vadd.f32 %v3086, %v3358
    %v3360 = vpop.f32.mrb[0].mxu0
    %v3361 = vadd.f32 %v3088, %v3360
    %v3362 = vpop.f32.mrb[0].mxu0
    %v3363 = vadd.f32 %v3090, %v3362
    %v3364 = vpop.f32.mrb[0].mxu0
    %v3365 = vadd.f32 %v3092, %v3364
    %3366 = vmatprep.mubr.bf16.mxu0 %v2800
    %3367 = vmatmul.mubr.bf16.gmra.mrb[0].mxu0 %v2799
    %v3368 = vpop.f32.mrb[0].mxu0
    %v3369 = vadd.f32 %v3096, %v3368
    %v3370 = vpop.f32.mrb[0].mxu0
    %v3371 = vadd.f32 %v3098, %v3370
    %v3372 = vpop.f32.mrb[0].mxu0
    %v3373 = vadd.f32 %v3100, %v3372
    %v3374 = vpop.f32.mrb[0].mxu0
    %v3375 = vadd.f32 %v3102, %v3374
    %3376 = vmatprep.mubr.bf16.mxu0 %v2804
    %3377 = vmatmul.mubr.bf16.gmra.mrb[0].mxu0 %v2803
    %v3378 = vpop.f32.mrb[0].mxu0
    %v3379 = vadd.f32 %v3106, %v3378
    %v3380 = vpop.f32.mrb[0].mxu0
    %v3381 = vadd.f32 %v3108, %v3380
    %v3382 = vpop.f32.mrb[0].mxu0
    %v3383 = vadd.f32 %v3110, %v3382
    %v3384 = vpop.f32.mrb[0].mxu0
    %v3385 = vadd.f32 %v3112, %v3384
    %3386 = vmatprep.mubr.bf16.mxu0 %v2808
    %3387 = vmatmul.mubr.bf16.gmra.mrb[0].mxu0 %v2807
    %v3388 = vpop.f32.mrb[0].mxu0
    %v3389 = vadd.f32 %v3116, %v3388
    %v3390 = vpop.f32.mrb[0].mxu0
    %v3391 = vadd.f32 %v3118, %v3390
    %v3392 = vpop.f32.mrb[0].mxu0
    %v3393 = vadd.f32 %v3120, %v3392
    %v3394 = vpop.f32.mrb[0].mxu0
    %v3395 = vadd.f32 %v3122, %v3394
    %3396 = vmatprep.mubr.bf16.mxu0 %v2812
    %3397 = vmatmul.mubr.bf16.gmra.mrb[0].mxu0 %v2811
    %v3398 = vpop.f32.mrb[0].mxu0
    %v3399 = vadd.f32 %v3126, %v3398
    %v3400 = vpop.f32.mrb[0].mxu0
    %v3401 = vadd.f32 %v3128, %v3400
    %v3402 = vpop.f32.mrb[0].mxu0
    %v3403 = vadd.f32 %v3130, %v3402
    %v3404 = vpop.f32.mrb[0].mxu0
    %v3405 = vadd.f32 %v3132, %v3404
    %3406 = vmatprep.mubr.bf16.mxu0 %v2816
    %3407 = vmatmul.mubr.bf16.gmra.mrb[0].mxu0 %v2815
    %v3408 = vpop.f32.mrb[0].mxu0
    %v3409 = vadd.f32 %v3136, %v3408
    %v3410 = vpop.f32.mrb[0].mxu0
    %v3411 = vadd.f32 %v3138, %v3410
    %v3412 = vpop.f32.mrb[0].mxu0
    %v3413 = vadd.f32 %v3140, %v3412
    %v3414 = vpop.f32.mrb[0].mxu0
    %v3415 = vadd.f32 %v3142, %v3414
    %3416 = vmatprep.mubr.bf16.mxu0 %v2820
    %3417 = vmatmul.mubr.bf16.gmra.mrb[0].mxu0 %v2819
    %v3418 = vpop.f32.mrb[0].mxu0
    %v3419 = vadd.f32 %v3146, %v3418
    %v3420 = vpop.f32.mrb[0].mxu0
    %v3421 = vadd.f32 %v3148, %v3420
    %v3422 = vpop.f32.mrb[0].mxu0
    %v3423 = vadd.f32 %v3150, %v3422
    %v3424 = vpop.f32.mrb[0].mxu0
    %v3425 = vadd.f32 %v3152, %v3424
    %3426 = vmatprep.mubr.bf16.mxu0 %v2824
    %3427 = vmatmul.mubr.bf16.gmra.mrb[0].mxu0 %v2823
    %v3428 = vpop.f32.mrb[0].mxu0
    %v3429 = vadd.f32 %v3156, %v3428
    %v3430 = vpop.f32.mrb[0].mxu0
    %v3431 = vadd.f32 %v3158, %v3430
    %v3432 = vpop.f32.mrb[0].mxu0
    %v3433 = vadd.f32 %v3160, %v3432
    %v3434 = vpop.f32.mrb[0].mxu0
    %v3435 = vadd.f32 %v3162, %v3434
    %3436 = vmatprep.mubr.bf16.mxu0 %v2828
    %3437 = vmatmul.mubr.bf16.gmra.mrb[0].mxu0 %v2827
    %v3438 = vpop.f32.mrb[0].mxu0
    %v3439 = vadd.f32 %v3166, %v3438
    %v3440 = vpop.f32.mrb[0].mxu0
    %v3441 = vadd.f32 %v3168, %v3440
    %v3442 = vpop.f32.mrb[0].mxu0
    %v3443 = vadd.f32 %v3170, %v3442
    %v3444 = vpop.f32.mrb[0].mxu0
    %v3445 = vadd.f32 %v3172, %v3444
    %3446 = vmatprep.mubr.bf16.mxu0 %v2832
    %3447 = vmatmul.mubr.bf16.gmra.mrb[0].mxu0 %v2831
    %v3448 = vpop.f32.mrb[0].mxu0
    %v3449 = vadd.f32 %v3176, %v3448
    %v3450 = vpop.f32.mrb[0].mxu0
    %v3451 = vadd.f32 %v3178, %v3450
    %v3452 = vpop.f32.mrb[0].mxu0
    %v3453 = vadd.f32 %v3180, %v3452
    %v3454 = vpop.f32.mrb[0].mxu0
    %v3455 = vadd.f32 %v3182, %v3454
    %3456 = vmatprep.mubr.bf16.mxu0 %v2836
    %3457 = vmatmul.mubr.bf16.gmra.mrb[0].mxu0 %v2835
    %v3458 = vpop.f32.mrb[0].mxu0
    %v3459 = vadd.f32 %v3186, %v3458
    %v3460 = vpop.f32.mrb[0].mxu0
    %v3461 = vadd.f32 %v3188, %v3460
    %v3462 = vpop.f32.mrb[0].mxu0
    %v3463 = vadd.f32 %v3190, %v3462
    %v3464 = vpop.f32.mrb[0].mxu0
    %v3465 = vadd.f32 %v3192, %v3464
    %3466 = vmatprep.mubr.bf16.mxu0 %v2840
    %3467 = vmatmul.mubr.bf16.gmra.mrb[0].mxu0 %v2839
    %v3468 = vpop.f32.mrb[0].mxu0
    %v3469 = vadd.f32 %v3196, %v3468
    %v3470 = vpop.f32.mrb[0].mxu0
    %v3471 = vadd.f32 %v3198, %v3470
    %v3472 = vpop.f32.mrb[0].mxu0
    %v3473 = vadd.f32 %v3200, %v3472
    %v3474 = vpop.f32.mrb[0].mxu0
    %v3475 = vadd.f32 %v3202, %v3474
    %3476 = vmatprep.mubr.bf16.mxu0 %v2844
    %3477 = vmatmul.mubr.bf16.gmra.mrb[0].mxu0 %v2843
    %v3478 = vpop.f32.mrb[0].mxu0
    %v3479 = vadd.f32 %v3206, %v3478
    %v3480 = vpop.f32.mrb[0].mxu0
    %v3481 = vadd.f32 %v3208, %v3480
    %v3482 = vpop.f32.mrb[0].mxu0
    %v3483 = vadd.f32 %v3210, %v3482
    %v3484 = vpop.f32.mrb[0].mxu0
    %v3485 = vadd.f32 %v3212, %v3484
    %3486 = vdwg.mxu0
    %v3487 = vxor.u32 %v3249, 2147483648
    %v3488 = vxor.u32 %v3251, 2147483648
    %v3489 = vxor.u32 %v3253, 2147483648
    %v3490 = vxor.u32 %v3255, 2147483648
    %v3491 = vxor.u32 %v3259, 2147483648
    %v3492 = vxor.u32 %v3261, 2147483648
    %v3493 = vxor.u32 %v3263, 2147483648
    %v3494 = vxor.u32 %v3265, 2147483648
    %v3495 = vxor.u32 %v3269, 2147483648
    %v3496 = vxor.u32 %v3271, 2147483648
    %v3497 = vxor.u32 %v3273, 2147483648
    %v3498 = vxor.u32 %v3275, 2147483648
    %v3499 = vxor.u32 %v3279, 2147483648
    %v3500 = vxor.u32 %v3281, 2147483648
    %v3501 = vxor.u32 %v3283, 2147483648
    %v3502 = vxor.u32 %v3285, 2147483648
    %v3503 = vxor.u32 %v3289, 2147483648
    %v3504 = vxor.u32 %v3291, 2147483648
    %v3505 = vxor.u32 %v3293, 2147483648
    %v3506 = vxor.u32 %v3295, 2147483648
    %v3507 = vxor.u32 %v3299, 2147483648
    %v3508 = vxor.u32 %v3301, 2147483648
    %v3509 = vxor.u32 %v3303, 2147483648
    %v3510 = vxor.u32 %v3305, 2147483648
    %v3511 = vxor.u32 %v3309, 2147483648
    %v3512 = vxor.u32 %v3311, 2147483648
    %v3513 = vxor.u32 %v3313, 2147483648
    %v3514 = vxor.u32 %v3315, 2147483648
    %v3515 = vxor.u32 %v3319, 2147483648
    %v3516 = vxor.u32 %v3321, 2147483648
    %v3517 = vxor.u32 %v3323, 2147483648
    %v3518 = vxor.u32 %v3325, 2147483648
    %v3519 = vxor.u32 %v3329, 2147483648
    %v3520 = vxor.u32 %v3331, 2147483648
    %v3521 = vxor.u32 %v3333, 2147483648
    %v3522 = vxor.u32 %v3335, 2147483648
    %v3523 = vxor.u32 %v3339, 2147483648
    %v3524 = vxor.u32 %v3341, 2147483648
    %v3525 = vxor.u32 %v3343, 2147483648
    %v3526 = vxor.u32 %v3345, 2147483648
    %v3527 = vxor.u32 %v3349, 2147483648
    %v3528 = vxor.u32 %v3351, 2147483648
    %v3529 = vxor.u32 %v3353, 2147483648
    %v3530 = vxor.u32 %v3355, 2147483648
    %v3531 = vxor.u32 %v3359, 2147483648
    %v3532 = vxor.u32 %v3361, 2147483648
    %v3533 = vxor.u32 %v3363, 2147483648
    %v3534 = vxor.u32 %v3365, 2147483648
    %v3535 = vxor.u32 %v3369, 2147483648
    %v3536 = vxor.u32 %v3371, 2147483648
    %v3537 = vxor.u32 %v3373, 2147483648
    %v3538 = vxor.u32 %v3375, 2147483648
    %v3539 = vxor.u32 %v3379, 2147483648
    %v3540 = vxor.u32 %v3381, 2147483648
    %v3541 = vxor.u32 %v3383, 2147483648
    %v3542 = vxor.u32 %v3385, 2147483648
    %v3543 = vxor.u32 %v3389, 2147483648
    %v3544 = vxor.u32 %v3391, 2147483648
    %v3545 = vxor.u32 %v3393, 2147483648
    %v3546 = vxor.u32 %v3395, 2147483648
    %v3547 = vxor.u32 %v3399, 2147483648
    %v3548 = vxor.u32 %v3401, 2147483648
    %v3549 = vxor.u32 %v3403, 2147483648
    %v3550 = vxor.u32 %v3405, 2147483648
    %v3551 = vxor.u32 %v3409, 2147483648
    %v3552 = vxor.u32 %v3411, 2147483648
    %v3553 = vxor.u32 %v3413, 2147483648
    %v3554 = vxor.u32 %v3415, 2147483648
    %v3555 = vxor.u32 %v3419, 2147483648
    %v3556 = vxor.u32 %v3421, 2147483648
    %v3557 = vxor.u32 %v3423, 2147483648
    %v3558 = vxor.u32 %v3425, 2147483648
    %v3559 = vxor.u32 %v3429, 2147483648
    %v3560 = vxor.u32 %v3431, 2147483648
    %v3561 = vxor.u32 %v3433, 2147483648
    %v3562 = vxor.u32 %v3435, 2147483648
    %v3563 = vxor.u32 %v3439, 2147483648
    %v3564 = vxor.u32 %v3441, 2147483648
    %v3565 = vxor.u32 %v3443, 2147483648
    %v3566 = vxor.u32 %v3445, 2147483648
    %v3567 = vxor.u32 %v3449, 2147483648
    %v3568 = vxor.u32 %v3451, 2147483648
    %v3569 = vxor.u32 %v3453, 2147483648
    %v3570 = vxor.u32 %v3455, 2147483648
    %v3571 = vxor.u32 %v3459, 2147483648
    %v3572 = vxor.u32 %v3461, 2147483648
    %v3573 = vxor.u32 %v3463, 2147483648
    %v3574 = vxor.u32 %v3465, 2147483648
    %v3575 = vxor.u32 %v3469, 2147483648
    %v3576 = vxor.u32 %v3471, 2147483648
    %v3577 = vxor.u32 %v3473, 2147483648
    %v3578 = vxor.u32 %v3475, 2147483648
    %v3579 = vxor.u32 %v3479, 2147483648
    %v3580 = vxor.u32 %v3481, 2147483648
    %v3581 = vxor.u32 %v3483, 2147483648
    %v3582 = vxor.u32 %v3485, 2147483648
    %v3583 = vmul.f32 %v3487, 1.442695
    %v3584 = vpow.pop %v3583
    %v3585 = vmul.f32 %v3488, 1.442695
    %v3586 = vpow.pop %v3585
    %v3587 = vmul.f32 %v3489, 1.442695
    %v3588 = vpow.pop %v3587
    %v3589 = vmul.f32 %v3490, 1.442695
    %v3590 = vpow.pop %v3589
    %v3591 = vmul.f32 %v3491, 1.442695
    %v3592 = vpow.pop %v3591
    %v3593 = vmul.f32 %v3492, 1.442695
    %v3594 = vpow.pop %v3593
    %v3595 = vmul.f32 %v3493, 1.442695
    %v3596 = vpow.pop %v3595
    %v3597 = vmul.f32 %v3494, 1.442695
    %v3598 = vpow.pop %v3597
    %v3599 = vmul.f32 %v3495, 1.442695
    %v3600 = vpow.pop %v3599
    %v3601 = vmul.f32 %v3496, 1.442695
    %v3602 = vpow.pop %v3601
    %v3603 = vmul.f32 %v3497, 1.442695
    %v3604 = vpow.pop %v3603
    %v3605 = vmul.f32 %v3498, 1.442695
    %v3606 = vpow.pop %v3605
    %v3607 = vmul.f32 %v3499, 1.442695
    %v3608 = vpow.pop %v3607
    %v3609 = vmul.f32 %v3500, 1.442695
    %v3610 = vpow.pop %v3609
    %v3611 = vmul.f32 %v3501, 1.442695
    %v3612 = vpow.pop %v3611
    %v3613 = vmul.f32 %v3502, 1.442695
    %v3614 = vpow.pop %v3613
    %v3615 = vmul.f32 %v3503, 1.442695
    %v3616 = vpow.pop %v3615
    %v3617 = vmul.f32 %v3504, 1.442695
    %v3618 = vpow.pop %v3617
    %v3619 = vmul.f32 %v3505, 1.442695
    %v3620 = vpow.pop %v3619
    %v3621 = vmul.f32 %v3506, 1.442695
    %v3622 = vpow.pop %v3621
    %v3623 = vmul.f32 %v3507, 1.442695
    %v3624 = vpow.pop %v3623
    %v3625 = vmul.f32 %v3508, 1.442695
    %v3626 = vpow.pop %v3625
    %v3627 = vmul.f32 %v3509, 1.442695
    %v3628 = vpow.pop %v3627
    %v3629 = vmul.f32 %v3510, 1.442695
    %v3630 = vpow.pop %v3629
    %v3631 = vmul.f32 %v3511, 1.442695
    %v3632 = vpow.pop %v3631
    %v3633 = vmul.f32 %v3512, 1.442695
    %v3634 = vpow.pop %v3633
    %v3635 = vmul.f32 %v3513, 1.442695
    %v3636 = vpow.pop %v3635
    %v3637 = vmul.f32 %v3514, 1.442695
    %v3638 = vpow.pop %v3637
    %v3639 = vmul.f32 %v3515, 1.442695
    %v3640 = vpow.pop %v3639
    %v3641 = vmul.f32 %v3516, 1.442695
    %v3642 = vpow.pop %v3641
    %v3643 = vmul.f32 %v3517, 1.442695
    %v3644 = vpow.pop %v3643
    %v3645 = vmul.f32 %v3518, 1.442695
    %v3646 = vpow.pop %v3645
    %v3647 = vmul.f32 %v3519, 1.442695
    %v3648 = vpow.pop %v3647
    %v3649 = vmul.f32 %v3520, 1.442695
    %v3650 = vpow.pop %v3649
    %v3651 = vmul.f32 %v3521, 1.442695
    %v3652 = vpow.pop %v3651
    %v3653 = vmul.f32 %v3522, 1.442695
    %v3654 = vpow.pop %v3653
    %v3655 = vmul.f32 %v3523, 1.442695
    %v3656 = vpow.pop %v3655
    %v3657 = vmul.f32 %v3524, 1.442695
    %v3658 = vpow.pop %v3657
    %v3659 = vmul.f32 %v3525, 1.442695
    %v3660 = vpow.pop %v3659
    %v3661 = vmul.f32 %v3526, 1.442695
    %v3662 = vpow.pop %v3661
    %v3663 = vmul.f32 %v3527, 1.442695
    %v3664 = vpow.pop %v3663
    %v3665 = vmul.f32 %v3528, 1.442695
    %v3666 = vpow.pop %v3665
    %v3667 = vmul.f32 %v3529, 1.442695
    %v3668 = vpow.pop %v3667
    %v3669 = vmul.f32 %v3530, 1.442695
    %v3670 = vpow.pop %v3669
    %v3671 = vmul.f32 %v3531, 1.442695
    %v3672 = vpow.pop %v3671
    %v3673 = vmul.f32 %v3532, 1.442695
    %v3674 = vpow.pop %v3673
    %v3675 = vmul.f32 %v3533, 1.442695
    %v3676 = vpow.pop %v3675
    %v3677 = vmul.f32 %v3534, 1.442695
    %v3678 = vpow.pop %v3677
    %v3679 = vmul.f32 %v3535, 1.442695
    %v3680 = vpow.pop %v3679
    %v3681 = vmul.f32 %v3536, 1.442695
    %v3682 = vpow.pop %v3681
    %v3683 = vmul.f32 %v3537, 1.442695
    %v3684 = vpow.pop %v3683
    %v3685 = vmul.f32 %v3538, 1.442695
    %v3686 = vpow.pop %v3685
    %v3687 = vmul.f32 %v3539, 1.442695
    %v3688 = vpow.pop %v3687
    %v3689 = vmul.f32 %v3540, 1.442695
    %v3690 = vpow.pop %v3689
    %v3691 = vmul.f32 %v3541, 1.442695
    %v3692 = vpow.pop %v3691
    %v3693 = vmul.f32 %v3542, 1.442695
    %v3694 = vpow.pop %v3693
    %v3695 = vmul.f32 %v3543, 1.442695
    %v3696 = vpow.pop %v3695
    %v3697 = vmul.f32 %v3544, 1.442695
    %v3698 = vpow.pop %v3697
    %v3699 = vmul.f32 %v3545, 1.442695
    %v3700 = vpow.pop %v3699
    %v3701 = vmul.f32 %v3546, 1.442695
    %v3702 = vpow.pop %v3701
    %v3703 = vmul.f32 %v3547, 1.442695
    %v3704 = vpow.pop %v3703
    %v3705 = vmul.f32 %v3548, 1.442695
    %v3706 = vpow.pop %v3705
    %v3707 = vmul.f32 %v3549, 1.442695
    %v3708 = vpow.pop %v3707
    %v3709 = vmul.f32 %v3550, 1.442695
    %v3710 = vpow.pop %v3709
    %v3711 = vmul.f32 %v3551, 1.442695
    %v3712 = vpow.pop %v3711
    %v3713 = vmul.f32 %v3552, 1.442695
    %v3714 = vpow.pop %v3713
    %v3715 = vmul.f32 %v3553, 1.442695
    %v3716 = vpow.pop %v3715
    %v3717 = vmul.f32 %v3554, 1.442695
    %v3718 = vpow.pop %v3717
    %v3719 = vmul.f32 %v3555, 1.442695
    %v3720 = vpow.pop %v3719
    %v3721 = vmul.f32 %v3556, 1.442695
    %v3722 = vpow.pop %v3721
    %v3723 = vmul.f32 %v3557, 1.442695
    %v3724 = vpow.pop %v3723
    %v3725 = vmul.f32 %v3558, 1.442695
    %v3726 = vpow.pop %v3725
    %v3727 = vmul.f32 %v3559, 1.442695
    %v3728 = vpow.pop %v3727
    %v3729 = vmul.f32 %v3560, 1.442695
    %v3730 = vpow.pop %v3729
    %v3731 = vmul.f32 %v3561, 1.442695
    %v3732 = vpow.pop %v3731
    %v3733 = vmul.f32 %v3562, 1.442695
    %v3734 = vpow.pop %v3733
    %v3735 = vmul.f32 %v3563, 1.442695
    %v3736 = vpow.pop %v3735
    %v3737 = vmul.f32 %v3564, 1.442695
    %v3738 = vpow.pop %v3737
    %v3739 = vmul.f32 %v3565, 1.442695
    %v3740 = vpow.pop %v3739
    %v3741 = vmul.f32 %v3566, 1.442695
    %v3742 = vpow.pop %v3741
    %v3743 = vmul.f32 %v3567, 1.442695
    %v3744 = vpow.pop %v3743
    %v3745 = vmul.f32 %v3568, 1.442695
    %v3746 = vpow.pop %v3745
    %v3747 = vmul.f32 %v3569, 1.442695
    %v3748 = vpow.pop %v3747
    %v3749 = vmul.f32 %v3570, 1.442695
    %v3750 = vpow.pop %v3749
    %v3751 = vmul.f32 %v3571, 1.442695
    %v3752 = vpow.pop %v3751
    %v3753 = vmul.f32 %v3572, 1.442695
    %v3754 = vpow.pop %v3753
    %v3755 = vmul.f32 %v3573, 1.442695
    %v3756 = vpow.pop %v3755
    %v3757 = vmul.f32 %v3574, 1.442695
    %v3758 = vpow.pop %v3757
    %v3759 = vmul.f32 %v3575, 1.442695
    %v3760 = vpow.pop %v3759
    %v3761 = vmul.f32 %v3576, 1.442695
    %v3762 = vpow.pop %v3761
    %v3763 = vmul.f32 %v3577, 1.442695
    %v3764 = vpow.pop %v3763
    %v3765 = vmul.f32 %v3578, 1.442695
    %v3766 = vpow.pop %v3765
    %v3767 = vmul.f32 %v3579, 1.442695
    %v3768 = vpow.pop %v3767
    %v3769 = vmul.f32 %v3580, 1.442695
    %v3770 = vpow.pop %v3769
    %v3771 = vmul.f32 %v3581, 1.442695
    %v3772 = vpow.pop %v3771
    %v3773 = vmul.f32 %v3582, 1.442695
    %v3774 = vpow.pop %v3773
    %v3775 = vadd.f32 %v3584, 1.0
    %v3776 = vadd.f32 %v3586, 1.0
    %v3777 = vadd.f32 %v3588, 1.0
    %v3778 = vadd.f32 %v3590, 1.0
    %v3779 = vadd.f32 %v3592, 1.0
    %v3780 = vadd.f32 %v3594, 1.0
    %v3781 = vadd.f32 %v3596, 1.0
    %v3782 = vadd.f32 %v3598, 1.0
    %v3783 = vadd.f32 %v3600, 1.0
    %v3784 = vadd.f32 %v3602, 1.0
    %v3785 = vadd.f32 %v3604, 1.0
    %v3786 = vadd.f32 %v3606, 1.0
    %v3787 = vadd.f32 %v3608, 1.0
    %v3788 = vadd.f32 %v3610, 1.0
    %v3789 = vadd.f32 %v3612, 1.0
    %v3790 = vadd.f32 %v3614, 1.0
    %v3791 = vadd.f32 %v3616, 1.0
    %v3792 = vadd.f32 %v3618, 1.0
    %v3793 = vadd.f32 %v3620, 1.0
    %v3794 = vadd.f32 %v3622, 1.0
    %v3795 = vadd.f32 %v3624, 1.0
    %v3796 = vadd.f32 %v3626, 1.0
    %v3797 = vadd.f32 %v3628, 1.0
    %v3798 = vadd.f32 %v3630, 1.0
    %v3799 = vadd.f32 %v3632, 1.0
    %v3800 = vadd.f32 %v3634, 1.0
    %v3801 = vadd.f32 %v3636, 1.0
    %v3802 = vadd.f32 %v3638, 1.0
    %v3803 = vadd.f32 %v3640, 1.0
    %v3804 = vadd.f32 %v3642, 1.0
    %v3805 = vadd.f32 %v3644, 1.0
    %v3806 = vadd.f32 %v3646, 1.0
    %v3807 = vadd.f32 %v3648, 1.0
    %v3808 = vadd.f32 %v3650, 1.0
    %v3809 = vadd.f32 %v3652, 1.0
    %v3810 = vadd.f32 %v3654, 1.0
    %v3811 = vadd.f32 %v3656, 1.0
    %v3812 = vadd.f32 %v3658, 1.0
    %v3813 = vadd.f32 %v3660, 1.0
    %v3814 = vadd.f32 %v3662, 1.0
    %v3815 = vadd.f32 %v3664, 1.0
    %v3816 = vadd.f32 %v3666, 1.0
    %v3817 = vadd.f32 %v3668, 1.0
    %v3818 = vadd.f32 %v3670, 1.0
    %v3819 = vadd.f32 %v3672, 1.0
    %v3820 = vadd.f32 %v3674, 1.0
    %v3821 = vadd.f32 %v3676, 1.0
    %v3822 = vadd.f32 %v3678, 1.0
    %v3823 = vadd.f32 %v3680, 1.0
    %v3824 = vadd.f32 %v3682, 1.0
    %v3825 = vadd.f32 %v3684, 1.0
    %v3826 = vadd.f32 %v3686, 1.0
    %v3827 = vadd.f32 %v3688, 1.0
    %v3828 = vadd.f32 %v3690, 1.0
    %v3829 = vadd.f32 %v3692, 1.0
    %v3830 = vadd.f32 %v3694, 1.0
    %v3831 = vadd.f32 %v3696, 1.0
    %v3832 = vadd.f32 %v3698, 1.0
    %v3833 = vadd.f32 %v3700, 1.0
    %v3834 = vadd.f32 %v3702, 1.0
    %v3835 = vadd.f32 %v3704, 1.0
    %v3836 = vadd.f32 %v3706, 1.0
    %v3837 = vadd.f32 %v3708, 1.0
    %v3838 = vadd.f32 %v3710, 1.0
    %v3839 = vadd.f32 %v3712, 1.0
    %v3840 = vadd.f32 %v3714, 1.0
    %v3841 = vadd.f32 %v3716, 1.0
    %v3842 = vadd.f32 %v3718, 1.0
    %v3843 = vadd.f32 %v3720, 1.0
    %v3844 = vadd.f32 %v3722, 1.0
    %v3845 = vadd.f32 %v3724, 1.0
    %v3846 = vadd.f32 %v3726, 1.0
    %v3847 = vadd.f32 %v3728, 1.0
    %v3848 = vadd.f32 %v3730, 1.0
    %v3849 = vadd.f32 %v3732, 1.0
    %v3850 = vadd.f32 %v3734, 1.0
    %v3851 = vadd.f32 %v3736, 1.0
    %v3852 = vadd.f32 %v3738, 1.0
    %v3853 = vadd.f32 %v3740, 1.0
    %v3854 = vadd.f32 %v3742, 1.0
    %v3855 = vadd.f32 %v3744, 1.0
    %v3856 = vadd.f32 %v3746, 1.0
    %v3857 = vadd.f32 %v3748, 1.0
    %v3858 = vadd.f32 %v3750, 1.0
    %v3859 = vadd.f32 %v3752, 1.0
    %v3860 = vadd.f32 %v3754, 1.0
    %v3861 = vadd.f32 %v3756, 1.0
    %v3862 = vadd.f32 %v3758, 1.0
    %v3863 = vadd.f32 %v3760, 1.0
    %v3864 = vadd.f32 %v3762, 1.0
    %v3865 = vadd.f32 %v3764, 1.0
    %v3866 = vadd.f32 %v3766, 1.0
    %v3867 = vadd.f32 %v3768, 1.0
    %v3868 = vadd.f32 %v3770, 1.0
    %v3869 = vadd.f32 %v3772, 1.0
    %v3870 = vadd.f32 %v3774, 1.0
    %v3871 = vrcp.pop %v3775
    %v3872 = vmul.f32 1.0, %v3871
    %v3873 = vrcp.pop %v3776
    %v3874 = vmul.f32 1.0, %v3873
    %v3875 = vrcp.pop %v3777
    %v3876 = vmul.f32 1.0, %v3875
    %v3877 = vrcp.pop %v3778
    %v3878 = vmul.f32 1.0, %v3877
    %v3879 = vrcp.pop %v3779
    %v3880 = vmul.f32 1.0, %v3879
    %v3881 = vrcp.pop %v3780
    %v3882 = vmul.f32 1.0, %v3881
    %v3883 = vrcp.pop %v3781
    %v3884 = vmul.f32 1.0, %v3883
    %v3885 = vrcp.pop %v3782
    %v3886 = vmul.f32 1.0, %v3885
    %v3887 = vrcp.pop %v3783
    %v3888 = vmul.f32 1.0, %v3887
    %v3889 = vrcp.pop %v3784
    %v3890 = vmul.f32 1.0, %v3889
    %v3891 = vrcp.pop %v3785
    %v3892 = vmul.f32 1.0, %v3891
    %v3893 = vrcp.pop %v3786
    %v3894 = vmul.f32 1.0, %v3893
    %v3895 = vrcp.pop %v3787
    %v3896 = vmul.f32 1.0, %v3895
    %v3897 = vrcp.pop %v3788
    %v3898 = vmul.f32 1.0, %v3897
    %v3899 = vrcp.pop %v3789
    %v3900 = vmul.f32 1.0, %v3899
    %v3901 = vrcp.pop %v3790
    %v3902 = vmul.f32 1.0, %v3901
    %v3903 = vrcp.pop %v3791
    %v3904 = vmul.f32 1.0, %v3903
    %v3905 = vrcp.pop %v3792
    %v3906 = vmul.f32 1.0, %v3905
    %v3907 = vrcp.pop %v3793
    %v3908 = vmul.f32 1.0, %v3907
    %v3909 = vrcp.pop %v3794
    %v3910 = vmul.f32 1.0, %v3909
    %v3911 = vrcp.pop %v3795
    %v3912 = vmul.f32 1.0, %v3911
    %v3913 = vrcp.pop %v3796
    %v3914 = vmul.f32 1.0, %v3913
    %v3915 = vrcp.pop %v3797
    %v3916 = vmul.f32 1.0, %v3915
    %v3917 = vrcp.pop %v3798
    %v3918 = vmul.f32 1.0, %v3917
    %v3919 = vrcp.pop %v3799
    %v3920 = vmul.f32 1.0, %v3919
    %v3921 = vrcp.pop %v3800
    %v3922 = vmul.f32 1.0, %v3921
    %v3923 = vrcp.pop %v3801
    %v3924 = vmul.f32 1.0, %v3923
    %v3925 = vrcp.pop %v3802
    %v3926 = vmul.f32 1.0, %v3925
    %v3927 = vrcp.pop %v3803
    %v3928 = vmul.f32 1.0, %v3927
    %v3929 = vrcp.pop %v3804
    %v3930 = vmul.f32 1.0, %v3929
    %v3931 = vrcp.pop %v3805
    %v3932 = vmul.f32 1.0, %v3931
    %v3933 = vrcp.pop %v3806
    %v3934 = vmul.f32 1.0, %v3933
    %v3935 = vrcp.pop %v3807
    %v3936 = vmul.f32 1.0, %v3935
    %v3937 = vrcp.pop %v3808
    %v3938 = vmul.f32 1.0, %v3937
    %v3939 = vrcp.pop %v3809
    %v3940 = vmul.f32 1.0, %v3939
    %v3941 = vrcp.pop %v3810
    %v3942 = vmul.f32 1.0, %v3941
    %v3943 = vrcp.pop %v3811
    %v3944 = vmul.f32 1.0, %v3943
    %v3945 = vrcp.pop %v3812
    %v3946 = vmul.f32 1.0, %v3945
    %v3947 = vrcp.pop %v3813
    %v3948 = vmul.f32 1.0, %v3947
    %v3949 = vrcp.pop %v3814
    %v3950 = vmul.f32 1.0, %v3949
    %v3951 = vrcp.pop %v3815
    %v3952 = vmul.f32 1.0, %v3951
    %v3953 = vrcp.pop %v3816
    %v3954 = vmul.f32 1.0, %v3953
    %v3955 = vrcp.pop %v3817
    %v3956 = vmul.f32 1.0, %v3955
    %v3957 = vrcp.pop %v3818
    %v3958 = vmul.f32 1.0, %v3957
    %v3959 = vrcp.pop %v3819
    %v3960 = vmul.f32 1.0, %v3959
    %v3961 = vrcp.pop %v3820
    %v3962 = vmul.f32 1.0, %v3961
    %v3963 = vrcp.pop %v3821
    %v3964 = vmul.f32 1.0, %v3963
    %v3965 = vrcp.pop %v3822
    %v3966 = vmul.f32 1.0, %v3965
    %v3967 = vrcp.pop %v3823
    %v3968 = vmul.f32 1.0, %v3967
    %v3969 = vrcp.pop %v3824
    %v3970 = vmul.f32 1.0, %v3969
    %v3971 = vrcp.pop %v3825
    %v3972 = vmul.f32 1.0, %v3971
    %v3973 = vrcp.pop %v3826
    %v3974 = vmul.f32 1.0, %v3973
    %v3975 = vrcp.pop %v3827
    %v3976 = vmul.f32 1.0, %v3975
    %v3977 = vrcp.pop %v3828
    %v3978 = vmul.f32 1.0, %v3977
    %v3979 = vrcp.pop %v3829
    %v3980 = vmul.f32 1.0, %v3979
    %v3981 = vrcp.pop %v3830
    %v3982 = vmul.f32 1.0, %v3981
    %v3983 = vrcp.pop %v3831
    %v3984 = vmul.f32 1.0, %v3983
    %v3985 = vrcp.pop %v3832
    %v3986 = vmul.f32 1.0, %v3985
    %v3987 = vrcp.pop %v3833
    %v3988 = vmul.f32 1.0, %v3987
    %v3989 = vrcp.pop %v3834
    %v3990 = vmul.f32 1.0, %v3989
    %v3991 = vrcp.pop %v3835
    %v3992 = vmul.f32 1.0, %v3991
    %v3993 = vrcp.pop %v3836
    %v3994 = vmul.f32 1.0, %v3993
    %v3995 = vrcp.pop %v3837
    %v3996 = vmul.f32 1.0, %v3995
    %v3997 = vrcp.pop %v3838
    %v3998 = vmul.f32 1.0, %v3997
    %v3999 = vrcp.pop %v3839
    %v4000 = vmul.f32 1.0, %v3999
    %v4001 = vrcp.pop %v3840
    %v4002 = vmul.f32 1.0, %v4001
    %v4003 = vrcp.pop %v3841
    %v4004 = vmul.f32 1.0, %v4003
    %v4005 = vrcp.pop %v3842
    %v4006 = vmul.f32 1.0, %v4005
    %v4007 = vrcp.pop %v3843
    %v4008 = vmul.f32 1.0, %v4007
    %v4009 = vrcp.pop %v3844
    %v4010 = vmul.f32 1.0, %v4009
    %v4011 = vrcp.pop %v3845
    %v4012 = vmul.f32 1.0, %v4011
    %v4013 = vrcp.pop %v3846
    %v4014 = vmul.f32 1.0, %v4013
    %v4015 = vrcp.pop %v3847
    %v4016 = vmul.f32 1.0, %v4015
    %v4017 = vrcp.pop %v3848
    %v4018 = vmul.f32 1.0, %v4017
    %v4019 = vrcp.pop %v3849
    %v4020 = vmul.f32 1.0, %v4019
    %v4021 = vrcp.pop %v3850
    %v4022 = vmul.f32 1.0, %v4021
    %v4023 = vrcp.pop %v3851
    %v4024 = vmul.f32 1.0, %v4023
    %v4025 = vrcp.pop %v3852
    %v4026 = vmul.f32 1.0, %v4025
    %v4027 = vrcp.pop %v3853
    %v4028 = vmul.f32 1.0, %v4027
    %v4029 = vrcp.pop %v3854
    %v4030 = vmul.f32 1.0, %v4029
    %v4031 = vrcp.pop %v3855
    %v4032 = vmul.f32 1.0, %v4031
    %v4033 = vrcp.pop %v3856
    %v4034 = vmul.f32 1.0, %v4033
    %v4035 = vrcp.pop %v3857
    %v4036 = vmul.f32 1.0, %v4035
    %v4037 = vrcp.pop %v3858
    %v4038 = vmul.f32 1.0, %v4037
    %v4039 = vrcp.pop %v3859
    %v4040 = vmul.f32 1.0, %v4039
    %v4041 = vrcp.pop %v3860
    %v4042 = vmul.f32 1.0, %v4041
    %v4043 = vrcp.pop %v3861
    %v4044 = vmul.f32 1.0, %v4043
    %v4045 = vrcp.pop %v3862
    %v4046 = vmul.f32 1.0, %v4045
    %v4047 = vrcp.pop %v3863
    %v4048 = vmul.f32 1.0, %v4047
    %v4049 = vrcp.pop %v3864
    %v4050 = vmul.f32 1.0, %v4049
    %v4051 = vrcp.pop %v3865
    %v4052 = vmul.f32 1.0, %v4051
    %v4053 = vrcp.pop %v3866
    %v4054 = vmul.f32 1.0, %v4053
    %v4055 = vrcp.pop %v3867
    %v4056 = vmul.f32 1.0, %v4055
    %v4057 = vrcp.pop %v3868
    %v4058 = vmul.f32 1.0, %v4057
    %v4059 = vrcp.pop %v3869
    %v4060 = vmul.f32 1.0, %v4059
    %v4061 = vrcp.pop %v3870
    %v4062 = vmul.f32 1.0, %v4061
    %v4063 = vmul.f32 %v3249, %v3872
    %v4064 = vmul.f32 %v3251, %v3874
    %v4065 = vmul.f32 %v3253, %v3876
    %v4066 = vmul.f32 %v3255, %v3878
    %v4067 = vmul.f32 %v3259, %v3880
    %v4068 = vmul.f32 %v3261, %v3882
    %v4069 = vmul.f32 %v3263, %v3884
    %v4070 = vmul.f32 %v3265, %v3886
    %v4071 = vmul.f32 %v3269, %v3888
    %v4072 = vmul.f32 %v3271, %v3890
    %v4073 = vmul.f32 %v3273, %v3892
    %v4074 = vmul.f32 %v3275, %v3894
    %v4075 = vmul.f32 %v3279, %v3896
    %v4076 = vmul.f32 %v3281, %v3898
    %v4077 = vmul.f32 %v3283, %v3900
    %v4078 = vmul.f32 %v3285, %v3902
    %v4079 = vmul.f32 %v3289, %v3904
    %v4080 = vmul.f32 %v3291, %v3906
    %v4081 = vmul.f32 %v3293, %v3908
    %v4082 = vmul.f32 %v3295, %v3910
    %v4083 = vmul.f32 %v3299, %v3912
    %v4084 = vmul.f32 %v3301, %v3914
    %v4085 = vmul.f32 %v3303, %v3916
    %v4086 = vmul.f32 %v3305, %v3918
    %v4087 = vmul.f32 %v3309, %v3920
    %v4088 = vmul.f32 %v3311, %v3922
    %v4089 = vmul.f32 %v3313, %v3924
    %v4090 = vmul.f32 %v3315, %v3926
    %v4091 = vmul.f32 %v3319, %v3928
    %v4092 = vmul.f32 %v3321, %v3930
    %v4093 = vmul.f32 %v3323, %v3932
    %v4094 = vmul.f32 %v3325, %v3934
    %v4095 = vmul.f32 %v3329, %v3936
    %v4096 = vmul.f32 %v3331, %v3938
    %v4097 = vmul.f32 %v3333, %v3940
    %v4098 = vmul.f32 %v3335, %v3942
    %v4099 = vmul.f32 %v3339, %v3944
    %v4100 = vmul.f32 %v3341, %v3946
    %v4101 = vmul.f32 %v3343, %v3948
    %v4102 = vmul.f32 %v3345, %v3950
    %v4103 = vmul.f32 %v3349, %v3952
    %v4104 = vmul.f32 %v3351, %v3954
    %v4105 = vmul.f32 %v3353, %v3956
    %v4106 = vmul.f32 %v3355, %v3958
    %v4107 = vmul.f32 %v3359, %v3960
    %v4108 = vmul.f32 %v3361, %v3962
    %v4109 = vmul.f32 %v3363, %v3964
    %v4110 = vmul.f32 %v3365, %v3966
    %v4111 = vmul.f32 %v3369, %v3968
    %v4112 = vmul.f32 %v3371, %v3970
    %v4113 = vmul.f32 %v3373, %v3972
    %v4114 = vmul.f32 %v3375, %v3974
    %v4115 = vmul.f32 %v3379, %v3976
    %v4116 = vmul.f32 %v3381, %v3978
    %v4117 = vmul.f32 %v3383, %v3980
    %v4118 = vmul.f32 %v3385, %v3982
    %v4119 = vmul.f32 %v3389, %v3984
    %v4120 = vmul.f32 %v3391, %v3986
    %v4121 = vmul.f32 %v3393, %v3988
    %v4122 = vmul.f32 %v3395, %v3990
    %v4123 = vmul.f32 %v3399, %v3992
    %v4124 = vmul.f32 %v3401, %v3994
    %v4125 = vmul.f32 %v3403, %v3996
    %v4126 = vmul.f32 %v3405, %v3998
    %v4127 = vmul.f32 %v3409, %v4000
    %v4128 = vmul.f32 %v3411, %v4002
    %v4129 = vmul.f32 %v3413, %v4004
    %v4130 = vmul.f32 %v3415, %v4006
    %v4131 = vmul.f32 %v3419, %v4008
    %v4132 = vmul.f32 %v3421, %v4010
    %v4133 = vmul.f32 %v3423, %v4012
    %v4134 = vmul.f32 %v3425, %v4014
    %v4135 = vmul.f32 %v3429, %v4016
    %v4136 = vmul.f32 %v3431, %v4018
    %v4137 = vmul.f32 %v3433, %v4020
    %v4138 = vmul.f32 %v3435, %v4022
    %v4139 = vmul.f32 %v3439, %v4024
    %v4140 = vmul.f32 %v3441, %v4026
    %v4141 = vmul.f32 %v3443, %v4028
    %v4142 = vmul.f32 %v3445, %v4030
    %v4143 = vmul.f32 %v3449, %v4032
    %v4144 = vmul.f32 %v3451, %v4034
    %v4145 = vmul.f32 %v3453, %v4036
    %v4146 = vmul.f32 %v3455, %v4038
    %v4147 = vmul.f32 %v3459, %v4040
    %v4148 = vmul.f32 %v3461, %v4042
    %v4149 = vmul.f32 %v3463, %v4044
    %v4150 = vmul.f32 %v3465, %v4046
    %v4151 = vmul.f32 %v3469, %v4048
    %v4152 = vmul.f32 %v3471, %v4050
    %v4153 = vmul.f32 %v3473, %v4052
    %v4154 = vmul.f32 %v3475, %v4054
    %v4155 = vmul.f32 %v3479, %v4056
    %v4156 = vmul.f32 %v3481, %v4058
    %v4157 = vmul.f32 %v3483, %v4060
    %v4158 = vmul.f32 %v3485, %v4062
    %v4159 = vld [vmem:[%s5] sm:$0xff]
    %v4160 = vld [vmem:[%s5 + $0x8] sm:$0xf]
    %v4161 = vld [vmem:[%s5 + $0xc] sm:$0xff]
    %v4162 = vld [vmem:[%s5 + $0x14] sm:$0xf]
    %v4163 = vld [vmem:[%s5 + $0x18] sm:$0xff]
    %v4164 = vld [vmem:[%s5 + $0x20] sm:$0xf]
    %v4165 = vld [vmem:[%s5 + $0x24] sm:$0xff]
    %v4166 = vld [vmem:[%s5 + $0x2c] sm:$0xf]
    %v4167 = vld [vmem:[%s5 + $0x30] sm:$0xff]
    %v4168 = vld [vmem:[%s5 + $0x38] sm:$0xf]
    %v4169 = vld [vmem:[%s5 + $0x3c] sm:$0xff]
    %v4170 = vld [vmem:[%s5 + $0x44] sm:$0xf]
    %v4171 = vld [vmem:[%s5 + $0x48] sm:$0xff]
    %v4172 = vld [vmem:[%s5 + $0x50] sm:$0xf]
    %v4173 = vld [vmem:[%s5 + $0x54] sm:$0xff]
    %v4174 = vld [vmem:[%s5 + $0x5c] sm:$0xf]
    %v4175 = vld [vmem:[%s5 + $0x60] sm:$0xff]
    %v4176 = vld [vmem:[%s5 + $0x68] sm:$0xf]
    %v4177 = vld [vmem:[%s5 + $0x6c] sm:$0xff]
    %v4178 = vld [vmem:[%s5 + $0x74] sm:$0xf]
    %v4179 = vld [vmem:[%s5 + $0x78] sm:$0xff]
    %v4180 = vld [vmem:[%s5 + $0x80] sm:$0xf]
    %v4181 = vld [vmem:[%s5 + $0x84] sm:$0xff]
    %v4182 = vld [vmem:[%s5 + $0x8c] sm:$0xf]
    %v4183 = vld [vmem:[%s5 + $0x90] sm:$0xff]
    %v4184 = vld [vmem:[%s5 + $0x98] sm:$0xf]
    %v4185 = vld [vmem:[%s5 + $0x9c] sm:$0xff]
    %v4186 = vld [vmem:[%s5 + $0xa4] sm:$0xf]
    %v4187 = vld [vmem:[%s5 + $0xa8] sm:$0xff]
    %v4188 = vld [vmem:[%s5 + $0xb0] sm:$0xf]
    %v4189 = vld [vmem:[%s5 + $0xb4] sm:$0xff]
    %v4190 = vld [vmem:[%s5 + $0xbc] sm:$0xf]
    %v4191 = vld [vmem:[%s5 + $0xc0] sm:$0xff]
    %v4192 = vld [vmem:[%s5 + $0xc8] sm:$0xf]
    %v4193 = vld [vmem:[%s5 + $0xcc] sm:$0xff]
    %v4194 = vld [vmem:[%s5 + $0xd4] sm:$0xf]
    %v4195 = vld [vmem:[%s5 + $0xd8] sm:$0xff]
    %v4196 = vld [vmem:[%s5 + $0xe0] sm:$0xf]
    %v4197 = vld [vmem:[%s5 + $0xe4] sm:$0xff]
    %v4198 = vld [vmem:[%s5 + $0xec] sm:$0xf]
    %v4199 = vld [vmem:[%s5 + $0xf0] sm:$0xff]
    %v4200 = vld [vmem:[%s5 + $0xf8] sm:$0xf]
    %v4201 = vld [vmem:[%s5 + $0xfc] sm:$0xff]
    %v4202 = vld [vmem:[%s5 + $0x104] sm:$0xf]
    %v4203 = vld [vmem:[%s5 + $0x108] sm:$0xff]
    %v4204 = vld [vmem:[%s5 + $0x110] sm:$0xf]
    %v4205 = vld [vmem:[%s5 + $0x114] sm:$0xff]
    %v4206 = vld [vmem:[%s5 + $0x11c] sm:$0xf]
    %v4207 = vld [vmem:[%s5 + $0x120] sm:$0xff]
    %v4208 = vld [vmem:[%s5 + $0x128] sm:$0xf]
    %v4209 = vld [vmem:[%s5 + $0x12c] sm:$0xff]
    %v4210 = vld [vmem:[%s5 + $0x134] sm:$0xf]
    %v4211 = vld [vmem:[%s5 + $0x138] sm:$0xff]
    %v4212 = vld [vmem:[%s5 + $0x140] sm:$0xf]
    %v4213 = vld [vmem:[%s5 + $0x144] sm:$0xff]
    %v4214 = vld [vmem:[%s5 + $0x14c] sm:$0xf]
    %v4215 = vld [vmem:[%s5 + $0x150] sm:$0xff]
    %v4216 = vld [vmem:[%s5 + $0x158] sm:$0xf]
    %v4217 = vld [vmem:[%s5 + $0x15c] sm:$0xff]
    %v4218 = vld [vmem:[%s5 + $0x164] sm:$0xf]
    %v4219 = vld [vmem:[%s5 + $0x168] sm:$0xff]
    %v4220 = vld [vmem:[%s5 + $0x170] sm:$0xf]
    %v4221 = vld [vmem:[%s5 + $0x174] sm:$0xff]
    %v4222 = vld [vmem:[%s5 + $0x17c] sm:$0xf]
    %v4223 = vpack.c.bf16 %v4065, %v4063
    %v4224 = vpack.c.bf16 %v4066, %v4064
    %v4225 = vpack.c.bf16 %v4069, %v4067
    %v4226 = vpack.c.bf16 %v4070, %v4068
    %v4227 = vpack.c.bf16 %v4073, %v4071
    %v4228 = vpack.c.bf16 %v4074, %v4072
    %v4229 = vpack.c.bf16 %v4077, %v4075
    %v4230 = vpack.c.bf16 %v4078, %v4076
    %v4231 = vpack.c.bf16 %v4081, %v4079
    %v4232 = vpack.c.bf16 %v4082, %v4080
    %v4233 = vpack.c.bf16 %v4085, %v4083
    %v4234 = vpack.c.bf16 %v4086, %v4084
    %v4235 = vpack.c.bf16 %v4089, %v4087
    %v4236 = vpack.c.bf16 %v4090, %v4088
    %v4237 = vpack.c.bf16 %v4093, %v4091
    %v4238 = vpack.c.bf16 %v4094, %v4092
    %v4239 = vpack.c.bf16 %v4097, %v4095
    %v4240 = vpack.c.bf16 %v4098, %v4096
    %v4241 = vpack.c.bf16 %v4101, %v4099
    %v4242 = vpack.c.bf16 %v4102, %v4100
    %v4243 = vpack.c.bf16 %v4105, %v4103
    %v4244 = vpack.c.bf16 %v4106, %v4104
    %v4245 = vpack.c.bf16 %v4109, %v4107
    %v4246 = vpack.c.bf16 %v4110, %v4108
    %v4247 = vpack.c.bf16 %v4113, %v4111
    %v4248 = vpack.c.bf16 %v4114, %v4112
    %v4249 = vpack.c.bf16 %v4117, %v4115
    %v4250 = vpack.c.bf16 %v4118, %v4116
    %v4251 = vpack.c.bf16 %v4121, %v4119
    %v4252 = vpack.c.bf16 %v4122, %v4120
    %v4253 = vpack.c.bf16 %v4125, %v4123
    %v4254 = vpack.c.bf16 %v4126, %v4124
    %v4255 = vpack.c.bf16 %v4129, %v4127
    %v4256 = vpack.c.bf16 %v4130, %v4128
    %v4257 = vpack.c.bf16 %v4133, %v4131
    %v4258 = vpack.c.bf16 %v4134, %v4132
    %v4259 = vpack.c.bf16 %v4137, %v4135
    %v4260 = vpack.c.bf16 %v4138, %v4136
    %v4261 = vpack.c.bf16 %v4141, %v4139
    %v4262 = vpack.c.bf16 %v4142, %v4140
    %v4263 = vpack.c.bf16 %v4145, %v4143
    %v4264 = vpack.c.bf16 %v4146, %v4144
    %v4265 = vpack.c.bf16 %v4149, %v4147
    %v4266 = vpack.c.bf16 %v4150, %v4148
    %v4267 = vpack.c.bf16 %v4153, %v4151
    %v4268 = vpack.c.bf16 %v4154, %v4152
    %v4269 = vpack.c.bf16 %v4157, %v4155
    %v4270 = vpack.c.bf16 %v4158, %v4156
    %v4271 = vld [vmem:[%s6] sm:$0xff]
    %v4272 = vld [vmem:[%s6 + $0x8] sm:$0xff]
    %v4273 = vld [vmem:[%s6 + $0x10] sm:$0xff]
    %v4274 = vld [vmem:[%s6 + $0x18] sm:$0xff]
    %v4275 = vld [vmem:[%s6 + $0x20] sm:$0xff]
    %v4276 = vld [vmem:[%s6 + $0x28] sm:$0xff]
    %v4277 = vld [vmem:[%s6 + $0x30] sm:$0xff]
    %v4278 = vld [vmem:[%s6 + $0x38] sm:$0xff]
    %v4279 = vld [vmem:[%s6 + $0x40] sm:$0xff]
    %v4280 = vld [vmem:[%s6 + $0x48] sm:$0xff]
    %v4281 = vld [vmem:[%s6 + $0x50] sm:$0xff]
    %v4282 = vld [vmem:[%s6 + $0x58] sm:$0xff]
    %v4283 = vld [vmem:[%s6 + $0x60] sm:$0xff]
    %v4284 = vld [vmem:[%s6 + $0x68] sm:$0xff]
    %v4285 = vld [vmem:[%s6 + $0x70] sm:$0xff]
    %v4286 = vld [vmem:[%s6 + $0x78] sm:$0xff]
    %v4287 = vld [vmem:[%s6 + $0x80] sm:$0xff]
    %v4288 = vld [vmem:[%s6 + $0x88] sm:$0xff]
    %v4289 = vld [vmem:[%s6 + $0x90] sm:$0xff]
    %v4290 = vld [vmem:[%s6 + $0x98] sm:$0xff]
    %v4291 = vld [vmem:[%s6 + $0xa0] sm:$0xff]
    %v4292 = vld [vmem:[%s6 + $0xa8] sm:$0xff]
    %v4293 = vld [vmem:[%s6 + $0xb0] sm:$0xff]
    %v4294 = vld [vmem:[%s6 + $0xb8] sm:$0xff]
    %v4295 = vld [vmem:[%s6 + $0xc0] sm:$0xff]
    %v4296 = vld [vmem:[%s6 + $0xc8] sm:$0xff]
    %v4297 = vld [vmem:[%s6 + $0xd0] sm:$0xff]
    %v4298 = vld [vmem:[%s6 + $0xd8] sm:$0xff]
    %v4299 = vld [vmem:[%s6 + $0xe0] sm:$0xff]
    %v4300 = vld [vmem:[%s6 + $0xe8] sm:$0xff]
    %v4301 = vld [vmem:[%s6 + $0xf0] sm:$0xff]
    %v4302 = vld [vmem:[%s6 + $0xf8] sm:$0xff]
    %4304 = vset.pattern.permute.xlu0 0
    %4305 = vperm.xlu0 %4304, %v4271
    %v4306 = vpop.permute.xlu0 %4305
    %4309 = vset.pattern.permute.xlu0 0
    %4310 = vperm.xlu0 %4309, %v4272
    %v4311 = vpop.permute.xlu0 %4310
    %4314 = vset.pattern.permute.xlu0 0
    %4315 = vperm.xlu0 %4314, %v4273
    %v4316 = vpop.permute.xlu0 %4315
    %4319 = vset.pattern.permute.xlu0 0
    %4320 = vperm.xlu0 %4319, %v4274
    %v4321 = vpop.permute.xlu0 %4320
    %4324 = vset.pattern.permute.xlu0 0
    %4325 = vperm.xlu0 %4324, %v4275
    %v4326 = vpop.permute.xlu0 %4325
    %4329 = vset.pattern.permute.xlu0 0
    %4330 = vperm.xlu0 %4329, %v4276
    %v4331 = vpop.permute.xlu0 %4330
    %4334 = vset.pattern.permute.xlu0 0
    %4335 = vperm.xlu0 %4334, %v4277
    %v4336 = vpop.permute.xlu0 %4335
    %4339 = vset.pattern.permute.xlu0 0
    %4340 = vperm.xlu0 %4339, %v4278
    %v4341 = vpop.permute.xlu0 %4340
    %4344 = vset.pattern.permute.xlu0 0
    %4345 = vperm.xlu0 %4344, %v4279
    %v4346 = vpop.permute.xlu0 %4345
    %4349 = vset.pattern.permute.xlu0 0
    %4350 = vperm.xlu0 %4349, %v4280
    %v4351 = vpop.permute.xlu0 %4350
    %4354 = vset.pattern.permute.xlu0 0
    %4355 = vperm.xlu0 %4354, %v4281
    %v4356 = vpop.permute.xlu0 %4355
    %4359 = vset.pattern.permute.xlu0 0
    %4360 = vperm.xlu0 %4359, %v4282
    %v4361 = vpop.permute.xlu0 %4360
    %4364 = vset.pattern.permute.xlu0 0
    %4365 = vperm.xlu0 %4364, %v4283
    %v4366 = vpop.permute.xlu0 %4365
    %4369 = vset.pattern.permute.xlu0 0
    %4370 = vperm.xlu0 %4369, %v4284
    %v4371 = vpop.permute.xlu0 %4370
    %4374 = vset.pattern.permute.xlu0 0
    %4375 = vperm.xlu0 %4374, %v4285
    %v4376 = vpop.permute.xlu0 %4375
    %4379 = vset.pattern.permute.xlu0 0
    %4380 = vperm.xlu0 %4379, %v4286
    %v4381 = vpop.permute.xlu0 %4380
    %4384 = vset.pattern.permute.xlu0 0
    %4385 = vperm.xlu0 %4384, %v4287
    %v4386 = vpop.permute.xlu0 %4385
    %4389 = vset.pattern.permute.xlu0 0
    %4390 = vperm.xlu0 %4389, %v4288
    %v4391 = vpop.permute.xlu0 %4390
    %4394 = vset.pattern.permute.xlu0 0
    %4395 = vperm.xlu0 %4394, %v4289
    %v4396 = vpop.permute.xlu0 %4395
    %4399 = vset.pattern.permute.xlu0 0
    %4400 = vperm.xlu0 %4399, %v4290
    %v4401 = vpop.permute.xlu0 %4400
    %4404 = vset.pattern.permute.xlu0 0
    %4405 = vperm.xlu0 %4404, %v4291
    %v4406 = vpop.permute.xlu0 %4405
    %4409 = vset.pattern.permute.xlu0 0
    %4410 = vperm.xlu0 %4409, %v4292
    %v4411 = vpop.permute.xlu0 %4410
    %4414 = vset.pattern.permute.xlu0 0
    %4415 = vperm.xlu0 %4414, %v4293
    %v4416 = vpop.permute.xlu0 %4415
    %4419 = vset.pattern.permute.xlu0 0
    %4420 = vperm.xlu0 %4419, %v4294
    %v4421 = vpop.permute.xlu0 %4420
    %4424 = vset.pattern.permute.xlu0 0
    %4425 = vperm.xlu0 %4424, %v4295
    %v4426 = vpop.permute.xlu0 %4425
    %4429 = vset.pattern.permute.xlu0 0
    %4430 = vperm.xlu0 %4429, %v4296
    %v4431 = vpop.permute.xlu0 %4430
    %4434 = vset.pattern.permute.xlu0 0
    %4435 = vperm.xlu0 %4434, %v4297
    %v4436 = vpop.permute.xlu0 %4435
    %4439 = vset.pattern.permute.xlu0 0
    %4440 = vperm.xlu0 %4439, %v4298
    %v4441 = vpop.permute.xlu0 %4440
    %4444 = vset.pattern.permute.xlu0 0
    %4445 = vperm.xlu0 %4444, %v4299
    %v4446 = vpop.permute.xlu0 %4445
    %4449 = vset.pattern.permute.xlu0 0
    %4450 = vperm.xlu0 %4449, %v4300
    %v4451 = vpop.permute.xlu0 %4450
    %4454 = vset.pattern.permute.xlu0 0
    %4455 = vperm.xlu0 %4454, %v4301
    %v4456 = vpop.permute.xlu0 %4455
    %4459 = vset.pattern.permute.xlu0 0
    %4460 = vperm.xlu0 %4459, %v4302
    %v4461 = vpop.permute.xlu0 %4460
    %v4527 = vunpack.c.l.b16 %v4159
    %v4528 = vunpack.c.h.b16 %v4159
    %v4529 = vunpack.c.l.b16 %v4160
    %v4530 = vunpack.c.l.b16 %v4161
    %v4531 = vunpack.c.h.b16 %v4161
    %v4532 = vunpack.c.l.b16 %v4162
    %v4533 = vunpack.c.l.b16 %v4163
    %v4534 = vunpack.c.h.b16 %v4163
    %v4535 = vunpack.c.l.b16 %v4164
    %v4536 = vunpack.c.l.b16 %v4165
    %v4537 = vunpack.c.h.b16 %v4165
    %v4538 = vunpack.c.l.b16 %v4166
    %v4539 = vunpack.c.l.b16 %v4167
    %v4540 = vunpack.c.h.b16 %v4167
    %v4541 = vunpack.c.l.b16 %v4168
    %v4542 = vunpack.c.l.b16 %v4169
    %v4543 = vunpack.c.h.b16 %v4169
    %v4544 = vunpack.c.l.b16 %v4170
    %v4545 = vunpack.c.l.b16 %v4171
    %v4546 = vunpack.c.h.b16 %v4171
    %v4547 = vunpack.c.l.b16 %v4172
    %v4548 = vunpack.c.l.b16 %v4173
    %v4549 = vunpack.c.h.b16 %v4173
    %v4550 = vunpack.c.l.b16 %v4174
    %v4551 = vunpack.c.l.b16 %v4175
    %v4552 = vunpack.c.h.b16 %v4175
    %v4553 = vunpack.c.l.b16 %v4176
    %v4554 = vunpack.c.l.b16 %v4177
    %v4555 = vunpack.c.h.b16 %v4177
    %v4556 = vunpack.c.l.b16 %v4178
    %v4557 = vunpack.c.l.b16 %v4179
    %v4558 = vunpack.c.h.b16 %v4179
    %v4559 = vunpack.c.l.b16 %v4180
    %v4560 = vunpack.c.l.b16 %v4181
    %v4561 = vunpack.c.h.b16 %v4181
    %v4562 = vunpack.c.l.b16 %v4182
    %v4563 = vunpack.c.l.b16 %v4183
    %v4564 = vunpack.c.h.b16 %v4183
    %v4565 = vunpack.c.l.b16 %v4184
    %v4566 = vunpack.c.l.b16 %v4185
    %v4567 = vunpack.c.h.b16 %v4185
    %v4568 = vunpack.c.l.b16 %v4186
    %v4569 = vunpack.c.l.b16 %v4187
    %v4570 = vunpack.c.h.b16 %v4187
    %v4571 = vunpack.c.l.b16 %v4188
    %v4572 = vunpack.c.l.b16 %v4189
    %v4573 = vunpack.c.h.b16 %v4189
    %v4574 = vunpack.c.l.b16 %v4190
    %v4575 = vunpack.c.l.b16 %v4191
    %v4576 = vunpack.c.h.b16 %v4191
    %v4577 = vunpack.c.l.b16 %v4192
    %v4578 = vunpack.c.l.b16 %v4193
    %v4579 = vunpack.c.h.b16 %v4193
    %v4580 = vunpack.c.l.b16 %v4194
    %v4581 = vunpack.c.l.b16 %v4195
    %v4582 = vunpack.c.h.b16 %v4195
    %v4583 = vunpack.c.l.b16 %v4196
    %v4584 = vunpack.c.l.b16 %v4197
    %v4585 = vunpack.c.h.b16 %v4197
    %v4586 = vunpack.c.l.b16 %v4198
    %v4587 = vunpack.c.l.b16 %v4199
    %v4588 = vunpack.c.h.b16 %v4199
    %v4589 = vunpack.c.l.b16 %v4200
    %v4590 = vunpack.c.l.b16 %v4201
    %v4591 = vunpack.c.h.b16 %v4201
    %v4592 = vunpack.c.l.b16 %v4202
    %v4593 = vunpack.c.l.b16 %v4203
    %v4594 = vunpack.c.h.b16 %v4203
    %v4595 = vunpack.c.l.b16 %v4204
    %v4596 = vunpack.c.l.b16 %v4205
    %v4597 = vunpack.c.h.b16 %v4205
    %v4598 = vunpack.c.l.b16 %v4206
    %v4599 = vunpack.c.l.b16 %v4207
    %v4600 = vunpack.c.h.b16 %v4207
    %v4601 = vunpack.c.l.b16 %v4208
    %v4602 = vunpack.c.l.b16 %v4209
    %v4603 = vunpack.c.h.b16 %v4209
    %v4604 = vunpack.c.l.b16 %v4210
    %v4605 = vunpack.c.l.b16 %v4211
    %v4606 = vunpack.c.h.b16 %v4211
    %v4607 = vunpack.c.l.b16 %v4212
    %v4608 = vunpack.c.l.b16 %v4213
    %v4609 = vunpack.c.h.b16 %v4213
    %v4610 = vunpack.c.l.b16 %v4214
    %v4611 = vunpack.c.l.b16 %v4215
    %v4612 = vunpack.c.h.b16 %v4215
    %v4613 = vunpack.c.l.b16 %v4216
    %v4614 = vunpack.c.l.b16 %v4217
    %v4615 = vunpack.c.h.b16 %v4217
    %v4616 = vunpack.c.l.b16 %v4218
    %v4617 = vunpack.c.l.b16 %v4219
    %v4618 = vunpack.c.h.b16 %v4219
    %v4619 = vunpack.c.l.b16 %v4220
    %v4620 = vunpack.c.l.b16 %v4221
    %v4621 = vunpack.c.h.b16 %v4221
    %v4622 = vunpack.c.l.b16 %v4222
    %v4623 = vpack.c.b16 %v4530, %v4527
    %v4624 = vpack.c.b16 %v4531, %v4528
    %v4625 = vpack.c.b16 %v4532, %v4529
    %v4626 = vpack.c.b16 %v4536, %v4533
    %v4627 = vpack.c.b16 %v4537, %v4534
    %v4628 = vpack.c.b16 %v4538, %v4535
    %v4629 = vpack.c.b16 %v4542, %v4539
    %v4630 = vpack.c.b16 %v4543, %v4540
    %v4631 = vpack.c.b16 %v4544, %v4541
    %v4632 = vpack.c.b16 %v4548, %v4545
    %v4633 = vpack.c.b16 %v4549, %v4546
    %v4634 = vpack.c.b16 %v4550, %v4547
    %v4635 = vpack.c.b16 %v4554, %v4551
    %v4636 = vpack.c.b16 %v4555, %v4552
    %v4637 = vpack.c.b16 %v4556, %v4553
    %v4638 = vpack.c.b16 %v4560, %v4557
    %v4639 = vpack.c.b16 %v4561, %v4558
    %v4640 = vpack.c.b16 %v4562, %v4559
    %v4641 = vpack.c.b16 %v4566, %v4563
    %v4642 = vpack.c.b16 %v4567, %v4564
    %v4643 = vpack.c.b16 %v4568, %v4565
    %v4644 = vpack.c.b16 %v4572, %v4569
    %v4645 = vpack.c.b16 %v4573, %v4570
    %v4646 = vpack.c.b16 %v4574, %v4571
    %v4647 = vpack.c.b16 %v4578, %v4575
    %v4648 = vpack.c.b16 %v4579, %v4576
    %v4649 = vpack.c.b16 %v4580, %v4577
    %v4650 = vpack.c.b16 %v4584, %v4581
    %v4651 = vpack.c.b16 %v4585, %v4582
    %v4652 = vpack.c.b16 %v4586, %v4583
    %v4653 = vpack.c.b16 %v4590, %v4587
    %v4654 = vpack.c.b16 %v4591, %v4588
    %v4655 = vpack.c.b16 %v4592, %v4589
    %v4656 = vpack.c.b16 %v4596, %v4593
    %v4657 = vpack.c.b16 %v4597, %v4594
    %v4658 = vpack.c.b16 %v4598, %v4595
    %v4659 = vpack.c.b16 %v4602, %v4599
    %v4660 = vpack.c.b16 %v4603, %v4600
    %v4661 = vpack.c.b16 %v4604, %v4601
    %v4662 = vpack.c.b16 %v4608, %v4605
    %v4663 = vpack.c.b16 %v4609, %v4606
    %v4664 = vpack.c.b16 %v4610, %v4607
    %v4665 = vpack.c.b16 %v4614, %v4611
    %v4666 = vpack.c.b16 %v4615, %v4612
    %v4667 = vpack.c.b16 %v4616, %v4613
    %v4668 = vpack.c.b16 %v4620, %v4617
    %v4669 = vpack.c.b16 %v4621, %v4618
    %v4670 = vpack.c.b16 %v4622, %v4619
    %4719 = vmatprep.subr.bf16.mxu0 %v4224
    %4720 = vmatpush1.bf16.msra.mxu0 %v4223
    %4721 = vmatprep.subr.bf16.mxu0 %v4226
    %4722 = vmatpush1.bf16.msra.mxu0 %v4225
    %4723 = vmatprep.subr.bf16.mxu0 %v4228
    %4724 = vmatpush1.bf16.msra.mxu0 %v4227
    %4725 = vmatprep.subr.bf16.mxu0 %v4230
    %4726 = vmatpush1.bf16.msra.mxu0 %v4229
    %4727 = vmatprep.subr.bf16.mxu0 %v4232
    %4728 = vmatpush1.bf16.msra.mxu0 %v4231
    %4729 = vmatprep.subr.bf16.mxu0 %v4234
    %4730 = vmatpush1.bf16.msra.mxu0 %v4233
    %4731 = vmatprep.subr.bf16.mxu0 %v4236
    %4732 = vmatpush1.bf16.msra.mxu0 %v4235
    %4733 = vmatprep.subr.bf16.mxu0 %v4238
    %4734 = vmatpush1.bf16.msra.mxu0 %v4237
    %4735 = vmatprep.subr.bf16.mxu0 %v4240
    %4736 = vmatpush1.bf16.msra.mxu0 %v4239
    %4737 = vmatprep.subr.bf16.mxu0 %v4242
    %4738 = vmatpush1.bf16.msra.mxu0 %v4241
    %4739 = vmatprep.subr.bf16.mxu0 %v4244
    %4740 = vmatpush1.bf16.msra.mxu0 %v4243
    %4741 = vmatprep.subr.bf16.mxu0 %v4246
    %4742 = vmatpush1.bf16.msra.mxu0 %v4245
    %4743 = vmatprep.subr.bf16.mxu0 %v4248
    %4744 = vmatpush1.bf16.msra.mxu0 %v4247
    %4745 = vmatprep.subr.bf16.mxu0 %v4250
    %4746 = vmatpush1.bf16.msra.mxu0 %v4249
    %4747 = vmatprep.subr.bf16.mxu0 %v4252
    %4748 = vmatpush1.bf16.msra.mxu0 %v4251
    %4749 = vmatprep.subr.bf16.mxu0 %v4254
    %4750 = vmatpush1.bf16.msra.mxu0 %v4253
    %4751 = vmatprep.mubr.bf16.mxu0 %v4624
    %4752 = vmatmul.mubr.bf16.gmra.mrb[0].mxu0 %v4623
    %v4753 = vpop.f32.mrb[0].mxu0
    %v4754 = vadd.f32 %v4306, %v4753
    %v4755 = vpop.f32.mrb[0].mxu0
    %v4756 = vadd.f32 %v4306, %v4755
    %v4757 = vpop.f32.mrb[0].mxu0
    %v4758 = vadd.f32 %v4311, %v4757
    %v4759 = vpop.f32.mrb[0].mxu0
    %v4760 = vadd.f32 %v4311, %v4759
    %4761 = vmatprep.mubr.bf16.mxu0 %v4627
    %4762 = vmatmul.mubr.bf16.gmra.mrb[0].mxu0 %v4626
    %v4763 = vpop.f32.mrb[0].mxu0
    %v4764 = vadd.f32 %v4316, %v4763
    %v4765 = vpop.f32.mrb[0].mxu0
    %v4766 = vadd.f32 %v4316, %v4765
    %v4767 = vpop.f32.mrb[0].mxu0
    %v4768 = vadd.f32 %v4321, %v4767
    %v4769 = vpop.f32.mrb[0].mxu0
    %v4770 = vadd.f32 %v4321, %v4769
    %4771 = vmatprep.mubr.bf16.mxu0 %v4630
    %4772 = vmatmul.mubr.bf16.gmra.mrb[0].mxu0 %v4629
    %v4773 = vpop.f32.mrb[0].mxu0
    %v4774 = vadd.f32 %v4326, %v4773
    %v4775 = vpop.f32.mrb[0].mxu0
    %v4776 = vadd.f32 %v4326, %v4775
    %v4777 = vpop.f32.mrb[0].mxu0
    %v4778 = vadd.f32 %v4331, %v4777
    %v4779 = vpop.f32.mrb[0].mxu0
    %v4780 = vadd.f32 %v4331, %v4779
    %4781 = vmatprep.mubr.bf16.mxu0 %v4633
    %4782 = vmatmul.mubr.bf16.gmra.mrb[0].mxu0 %v4632
    %v4783 = vpop.f32.mrb[0].mxu0
    %v4784 = vadd.f32 %v4336, %v4783
    %v4785 = vpop.f32.mrb[0].mxu0
    %v4786 = vadd.f32 %v4336, %v4785
    %v4787 = vpop.f32.mrb[0].mxu0
    %v4788 = vadd.f32 %v4341, %v4787
    %v4789 = vpop.f32.mrb[0].mxu0
    %v4790 = vadd.f32 %v4341, %v4789
    %4791 = vmatprep.mubr.bf16.mxu0 %v4636
    %4792 = vmatmul.mubr.bf16.gmra.mrb[0].mxu0 %v4635
    %v4793 = vpop.f32.mrb[0].mxu0
    %v4794 = vadd.f32 %v4346, %v4793
    %v4795 = vpop.f32.mrb[0].mxu0
    %v4796 = vadd.f32 %v4346, %v4795
    %v4797 = vpop.f32.mrb[0].mxu0
    %v4798 = vadd.f32 %v4351, %v4797
    %v4799 = vpop.f32.mrb[0].mxu0
    %v4800 = vadd.f32 %v4351, %v4799
    %4801 = vmatprep.mubr.bf16.mxu0 %v4639
    %4802 = vmatmul.mubr.bf16.gmra.mrb[0].mxu0 %v4638
    %v4803 = vpop.f32.mrb[0].mxu0
    %v4804 = vadd.f32 %v4356, %v4803
    %v4805 = vpop.f32.mrb[0].mxu0
    %v4806 = vadd.f32 %v4356, %v4805
    %v4807 = vpop.f32.mrb[0].mxu0
    %v4808 = vadd.f32 %v4361, %v4807
    %v4809 = vpop.f32.mrb[0].mxu0
    %v4810 = vadd.f32 %v4361, %v4809
    %4811 = vmatprep.mubr.bf16.mxu0 %v4642
    %4812 = vmatmul.mubr.bf16.gmra.mrb[0].mxu0 %v4641
    %v4813 = vpop.f32.mrb[0].mxu0
    %v4814 = vadd.f32 %v4366, %v4813
    %v4815 = vpop.f32.mrb[0].mxu0
    %v4816 = vadd.f32 %v4366, %v4815
    %v4817 = vpop.f32.mrb[0].mxu0
    %v4818 = vadd.f32 %v4371, %v4817
    %v4819 = vpop.f32.mrb[0].mxu0
    %v4820 = vadd.f32 %v4371, %v4819
    %4821 = vmatprep.mubr.bf16.mxu0 %v4645
    %4822 = vmatmul.mubr.bf16.gmra.mrb[0].mxu0 %v4644
    %v4823 = vpop.f32.mrb[0].mxu0
    %v4824 = vadd.f32 %v4376, %v4823
    %v4825 = vpop.f32.mrb[0].mxu0
    %v4826 = vadd.f32 %v4376, %v4825
    %v4827 = vpop.f32.mrb[0].mxu0
    %v4828 = vadd.f32 %v4381, %v4827
    %v4829 = vpop.f32.mrb[0].mxu0
    %v4830 = vadd.f32 %v4381, %v4829
    %4831 = vmatprep.mubr.bf16.mxu0 %v4648
    %4832 = vmatmul.mubr.bf16.gmra.mrb[0].mxu0 %v4647
    %v4833 = vpop.f32.mrb[0].mxu0
    %v4834 = vadd.f32 %v4386, %v4833
    %v4835 = vpop.f32.mrb[0].mxu0
    %v4836 = vadd.f32 %v4386, %v4835
    %v4837 = vpop.f32.mrb[0].mxu0
    %v4838 = vadd.f32 %v4391, %v4837
    %v4839 = vpop.f32.mrb[0].mxu0
    %v4840 = vadd.f32 %v4391, %v4839
    %4841 = vmatprep.mubr.bf16.mxu0 %v4651
    %4842 = vmatmul.mubr.bf16.gmra.mrb[0].mxu0 %v4650
    %v4843 = vpop.f32.mrb[0].mxu0
    %v4844 = vadd.f32 %v4396, %v4843
    %v4845 = vpop.f32.mrb[0].mxu0
    %v4846 = vadd.f32 %v4396, %v4845
    %v4847 = vpop.f32.mrb[0].mxu0
    %v4848 = vadd.f32 %v4401, %v4847
    %v4849 = vpop.f32.mrb[0].mxu0
    %v4850 = vadd.f32 %v4401, %v4849
    %4851 = vmatprep.mubr.bf16.mxu0 %v4654
    %4852 = vmatmul.mubr.bf16.gmra.mrb[0].mxu0 %v4653
    %v4853 = vpop.f32.mrb[0].mxu0
    %v4854 = vadd.f32 %v4406, %v4853
    %v4855 = vpop.f32.mrb[0].mxu0
    %v4856 = vadd.f32 %v4406, %v4855
    %v4857 = vpop.f32.mrb[0].mxu0
    %v4858 = vadd.f32 %v4411, %v4857
    %v4859 = vpop.f32.mrb[0].mxu0
    %v4860 = vadd.f32 %v4411, %v4859
    %4861 = vmatprep.mubr.bf16.mxu0 %v4657
    %4862 = vmatmul.mubr.bf16.gmra.mrb[0].mxu0 %v4656
    %v4863 = vpop.f32.mrb[0].mxu0
    %v4864 = vadd.f32 %v4416, %v4863
    %v4865 = vpop.f32.mrb[0].mxu0
    %v4866 = vadd.f32 %v4416, %v4865
    %v4867 = vpop.f32.mrb[0].mxu0
    %v4868 = vadd.f32 %v4421, %v4867
    %v4869 = vpop.f32.mrb[0].mxu0
    %v4870 = vadd.f32 %v4421, %v4869
    %4871 = vmatprep.mubr.bf16.mxu0 %v4660
    %4872 = vmatmul.mubr.bf16.gmra.mrb[0].mxu0 %v4659
    %v4873 = vpop.f32.mrb[0].mxu0
    %v4874 = vadd.f32 %v4426, %v4873
    %v4875 = vpop.f32.mrb[0].mxu0
    %v4876 = vadd.f32 %v4426, %v4875
    %v4877 = vpop.f32.mrb[0].mxu0
    %v4878 = vadd.f32 %v4431, %v4877
    %v4879 = vpop.f32.mrb[0].mxu0
    %v4880 = vadd.f32 %v4431, %v4879
    %4881 = vmatprep.mubr.bf16.mxu0 %v4663
    %4882 = vmatmul.mubr.bf16.gmra.mrb[0].mxu0 %v4662
    %v4883 = vpop.f32.mrb[0].mxu0
    %v4884 = vadd.f32 %v4436, %v4883
    %v4885 = vpop.f32.mrb[0].mxu0
    %v4886 = vadd.f32 %v4436, %v4885
    %v4887 = vpop.f32.mrb[0].mxu0
    %v4888 = vadd.f32 %v4441, %v4887
    %v4889 = vpop.f32.mrb[0].mxu0
    %v4890 = vadd.f32 %v4441, %v4889
    %4891 = vmatprep.mubr.bf16.mxu0 %v4666
    %4892 = vmatmul.mubr.bf16.gmra.mrb[0].mxu0 %v4665
    %v4893 = vpop.f32.mrb[0].mxu0
    %v4894 = vadd.f32 %v4446, %v4893
    %v4895 = vpop.f32.mrb[0].mxu0
    %v4896 = vadd.f32 %v4446, %v4895
    %v4897 = vpop.f32.mrb[0].mxu0
    %v4898 = vadd.f32 %v4451, %v4897
    %v4899 = vpop.f32.mrb[0].mxu0
    %v4900 = vadd.f32 %v4451, %v4899
    %4901 = vmatprep.mubr.bf16.mxu0 %v4669
    %4902 = vmatmul.mubr.bf16.gmra.mrb[0].mxu0 %v4668
    %v4903 = vpop.f32.mrb[0].mxu0
    %v4904 = vadd.f32 %v4456, %v4903
    %v4905 = vpop.f32.mrb[0].mxu0
    %v4906 = vadd.f32 %v4456, %v4905
    %v4907 = vpop.f32.mrb[0].mxu0
    %v4908 = vadd.f32 %v4461, %v4907
    %v4909 = vpop.f32.mrb[0].mxu0
    %v4910 = vadd.f32 %v4461, %v4909
    %4911 = vdwg.mxu0
    %4912 = vmatprep.subr.bf16.mxu0 %v4256
    %4913 = vmatpush1.bf16.msra.mxu0 %v4255
    %4914 = vmatprep.subr.bf16.mxu0 %v4258
    %4915 = vmatpush1.bf16.msra.mxu0 %v4257
    %4916 = vmatprep.subr.bf16.mxu0 %v4260
    %4917 = vmatpush1.bf16.msra.mxu0 %v4259
    %4918 = vmatprep.subr.bf16.mxu0 %v4262
    %4919 = vmatpush1.bf16.msra.mxu0 %v4261
    %4920 = vmatprep.subr.bf16.mxu0 %v4264
    %4921 = vmatpush1.bf16.msra.mxu0 %v4263
    %4922 = vmatprep.subr.bf16.mxu0 %v4266
    %4923 = vmatpush1.bf16.msra.mxu0 %v4265
    %4924 = vmatprep.subr.bf16.mxu0 %v4268
    %4925 = vmatpush1.bf16.msra.mxu0 %v4267
    %4926 = vmatprep.subr.bf16.mxu0 %v4270
    %4927 = vmatpush1.bf16.msra.mxu0 %v4269
    %4928 = vmatprep.subr.bf16.mxu0 0
    %4929 = vmatpush1.bf16.msra.mxu0 0
    %4930 = vmatprep.subr.bf16.mxu0 0
    %4931 = vmatpush1.bf16.msra.mxu0 0
    %4932 = vmatprep.subr.bf16.mxu0 0
    %4933 = vmatpush1.bf16.msra.mxu0 0
    %4934 = vmatprep.subr.bf16.mxu0 0
    %4935 = vmatpush1.bf16.msra.mxu0 0
    %4936 = vmatprep.subr.bf16.mxu0 0
    %4937 = vmatpush1.bf16.msra.mxu0 0
    %4938 = vmatprep.subr.bf16.mxu0 0
    %4939 = vmatpush1.bf16.msra.mxu0 0
    %4940 = vmatprep.subr.bf16.mxu0 0
    %4941 = vmatpush1.bf16.msra.mxu0 0
    %4942 = vmatprep.subr.bf16.mxu0 0
    %4943 = vmatpush1.bf16.msra.mxu0 0
    %4944 = vmatprep.mubr.bf16.mxu0 0
    %4945 = vmatmul.mubr.bf16.gmra.mrb[0].mxu0 %v4625
    %v4946 = vpop.f32.mrb[0].mxu0
    %v4947 = vadd.f32 %v4754, %v4946
    %v4948 = vpop.f32.mrb[0].mxu0
    %v4949 = vadd.f32 %v4756, %v4948
    %v4950 = vpop.f32.mrb[0].mxu0
    %v4951 = vadd.f32 %v4758, %v4950
    %v4952 = vpop.f32.mrb[0].mxu0
    %v4953 = vadd.f32 %v4760, %v4952
    %4954 = vmatprep.mubr.bf16.mxu0 0
    %4955 = vmatmul.mubr.bf16.gmra.mrb[0].mxu0 %v4628
    %v4956 = vpop.f32.mrb[0].mxu0
    %v4957 = vadd.f32 %v4764, %v4956
    %v4958 = vpop.f32.mrb[0].mxu0
    %v4959 = vadd.f32 %v4766, %v4958
    %v4960 = vpop.f32.mrb[0].mxu0
    %v4961 = vadd.f32 %v4768, %v4960
    %v4962 = vpop.f32.mrb[0].mxu0
    %v4963 = vadd.f32 %v4770, %v4962
    %4964 = vmatprep.mubr.bf16.mxu0 0
    %4965 = vmatmul.mubr.bf16.gmra.mrb[0].mxu0 %v4631
    %v4966 = vpop.f32.mrb[0].mxu0
    %v4967 = vadd.f32 %v4774, %v4966
    %v4968 = vpop.f32.mrb[0].mxu0
    %v4969 = vadd.f32 %v4776, %v4968
    %v4970 = vpop.f32.mrb[0].mxu0
    %v4971 = vadd.f32 %v4778, %v4970
    %v4972 = vpop.f32.mrb[0].mxu0
    %v4973 = vadd.f32 %v4780, %v4972
    %4974 = vmatprep.mubr.bf16.mxu0 0
    %4975 = vmatmul.mubr.bf16.gmra.mrb[0].mxu0 %v4634
    %v4976 = vpop.f32.mrb[0].mxu0
    %v4977 = vadd.f32 %v4784, %v4976
    %v4978 = vpop.f32.mrb[0].mxu0
    %v4979 = vadd.f32 %v4786, %v4978
    %v4980 = vpop.f32.mrb[0].mxu0
    %v4981 = vadd.f32 %v4788, %v4980
    %v4982 = vpop.f32.mrb[0].mxu0
    %v4983 = vadd.f32 %v4790, %v4982
    %4984 = vmatprep.mubr.bf16.mxu0 0
    %4985 = vmatmul.mubr.bf16.gmra.mrb[0].mxu0 %v4637
    %v4986 = vpop.f32.mrb[0].mxu0
    %v4987 = vadd.f32 %v4794, %v4986
    %v4988 = vpop.f32.mrb[0].mxu0
    %v4989 = vadd.f32 %v4796, %v4988
    %v4990 = vpop.f32.mrb[0].mxu0
    %v4991 = vadd.f32 %v4798, %v4990
    %v4992 = vpop.f32.mrb[0].mxu0
    %v4993 = vadd.f32 %v4800, %v4992
    %4994 = vmatprep.mubr.bf16.mxu0 0
    %4995 = vmatmul.mubr.bf16.gmra.mrb[0].mxu0 %v4640
    %v4996 = vpop.f32.mrb[0].mxu0
    %v4997 = vadd.f32 %v4804, %v4996
    %v4998 = vpop.f32.mrb[0].mxu0
    %v4999 = vadd.f32 %v4806, %v4998
    %v5000 = vpop.f32.mrb[0].mxu0
    %v5001 = vadd.f32 %v4808, %v5000
    %v5002 = vpop.f32.mrb[0].mxu0
    %v5003 = vadd.f32 %v4810, %v5002
    %5004 = vmatprep.mubr.bf16.mxu0 0
    %5005 = vmatmul.mubr.bf16.gmra.mrb[0].mxu0 %v4643
    %v5006 = vpop.f32.mrb[0].mxu0
    %v5007 = vadd.f32 %v4814, %v5006
    %v5008 = vpop.f32.mrb[0].mxu0
    %v5009 = vadd.f32 %v4816, %v5008
    %v5010 = vpop.f32.mrb[0].mxu0
    %v5011 = vadd.f32 %v4818, %v5010
    %v5012 = vpop.f32.mrb[0].mxu0
    %v5013 = vadd.f32 %v4820, %v5012
    %5014 = vmatprep.mubr.bf16.mxu0 0
    %5015 = vmatmul.mubr.bf16.gmra.mrb[0].mxu0 %v4646
    %v5016 = vpop.f32.mrb[0].mxu0
    %v5017 = vadd.f32 %v4824, %v5016
    %v5018 = vpop.f32.mrb[0].mxu0
    %v5019 = vadd.f32 %v4826, %v5018
    %v5020 = vpop.f32.mrb[0].mxu0
    %v5021 = vadd.f32 %v4828, %v5020
    %v5022 = vpop.f32.mrb[0].mxu0
    %v5023 = vadd.f32 %v4830, %v5022
    %5024 = vmatprep.mubr.bf16.mxu0 0
    %5025 = vmatmul.mubr.bf16.gmra.mrb[0].mxu0 %v4649
    %v5026 = vpop.f32.mrb[0].mxu0
    %v5027 = vadd.f32 %v4834, %v5026
    %v5028 = vpop.f32.mrb[0].mxu0
    %v5029 = vadd.f32 %v4836, %v5028
    %v5030 = vpop.f32.mrb[0].mxu0
    %v5031 = vadd.f32 %v4838, %v5030
    %v5032 = vpop.f32.mrb[0].mxu0
    %v5033 = vadd.f32 %v4840, %v5032
    %5034 = vmatprep.mubr.bf16.mxu0 0
    %5035 = vmatmul.mubr.bf16.gmra.mrb[0].mxu0 %v4652
    %v5036 = vpop.f32.mrb[0].mxu0
    %v5037 = vadd.f32 %v4844, %v5036
    %v5038 = vpop.f32.mrb[0].mxu0
    %v5039 = vadd.f32 %v4846, %v5038
    %v5040 = vpop.f32.mrb[0].mxu0
    %v5041 = vadd.f32 %v4848, %v5040
    %v5042 = vpop.f32.mrb[0].mxu0
    %v5043 = vadd.f32 %v4850, %v5042
    %5044 = vmatprep.mubr.bf16.mxu0 0
    %5045 = vmatmul.mubr.bf16.gmra.mrb[0].mxu0 %v4655
    %v5046 = vpop.f32.mrb[0].mxu0
    %v5047 = vadd.f32 %v4854, %v5046
    %v5048 = vpop.f32.mrb[0].mxu0
    %v5049 = vadd.f32 %v4856, %v5048
    %v5050 = vpop.f32.mrb[0].mxu0
    %v5051 = vadd.f32 %v4858, %v5050
    %v5052 = vpop.f32.mrb[0].mxu0
    %v5053 = vadd.f32 %v4860, %v5052
    %5054 = vmatprep.mubr.bf16.mxu0 0
    %5055 = vmatmul.mubr.bf16.gmra.mrb[0].mxu0 %v4658
    %v5056 = vpop.f32.mrb[0].mxu0
    %v5057 = vadd.f32 %v4864, %v5056
    %v5058 = vpop.f32.mrb[0].mxu0
    %v5059 = vadd.f32 %v4866, %v5058
    %v5060 = vpop.f32.mrb[0].mxu0
    %v5061 = vadd.f32 %v4868, %v5060
    %v5062 = vpop.f32.mrb[0].mxu0
    %v5063 = vadd.f32 %v4870, %v5062
    %5064 = vmatprep.mubr.bf16.mxu0 0
    %5065 = vmatmul.mubr.bf16.gmra.mrb[0].mxu0 %v4661
    %v5066 = vpop.f32.mrb[0].mxu0
    %v5067 = vadd.f32 %v4874, %v5066
    %v5068 = vpop.f32.mrb[0].mxu0
    %v5069 = vadd.f32 %v4876, %v5068
    %v5070 = vpop.f32.mrb[0].mxu0
    %v5071 = vadd.f32 %v4878, %v5070
    %v5072 = vpop.f32.mrb[0].mxu0
    %v5073 = vadd.f32 %v4880, %v5072
    %5074 = vmatprep.mubr.bf16.mxu0 0
    %5075 = vmatmul.mubr.bf16.gmra.mrb[0].mxu0 %v4664
    %v5076 = vpop.f32.mrb[0].mxu0
    %v5077 = vadd.f32 %v4884, %v5076
    %v5078 = vpop.f32.mrb[0].mxu0
    %v5079 = vadd.f32 %v4886, %v5078
    %v5080 = vpop.f32.mrb[0].mxu0
    %v5081 = vadd.f32 %v4888, %v5080
    %v5082 = vpop.f32.mrb[0].mxu0
    %v5083 = vadd.f32 %v4890, %v5082
    %5084 = vmatprep.mubr.bf16.mxu0 0
    %5085 = vmatmul.mubr.bf16.gmra.mrb[0].mxu0 %v4667
    %v5086 = vpop.f32.mrb[0].mxu0
    %v5087 = vadd.f32 %v4894, %v5086
    %v5088 = vpop.f32.mrb[0].mxu0
    %v5089 = vadd.f32 %v4896, %v5088
    %v5090 = vpop.f32.mrb[0].mxu0
    %v5091 = vadd.f32 %v4898, %v5090
    %v5092 = vpop.f32.mrb[0].mxu0
    %v5093 = vadd.f32 %v4900, %v5092
    %5094 = vmatprep.mubr.bf16.mxu0 0
    %5095 = vmatmul.mubr.bf16.gmra.mrb[0].mxu0 %v4670
    %v5096 = vpop.f32.mrb[0].mxu0
    %v5097 = vadd.f32 %v4904, %v5096
    %v5098 = vpop.f32.mrb[0].mxu0
    %v5099 = vadd.f32 %v4906, %v5098
    %v5100 = vpop.f32.mrb[0].mxu0
    %v5101 = vadd.f32 %v4908, %v5100
    %v5102 = vpop.f32.mrb[0].mxu0
    %v5103 = vadd.f32 %v4910, %v5102
    %5104 = vdwg.mxu0
    %v5105 = vxor.u32 %v4947, 2147483648
    %v5106 = vxor.u32 %v4949, 2147483648
    %v5107 = vxor.u32 %v4951, 2147483648
    %v5108 = vxor.u32 %v4953, 2147483648
    %v5109 = vxor.u32 %v4957, 2147483648
    %v5110 = vxor.u32 %v4959, 2147483648
    %v5111 = vxor.u32 %v4961, 2147483648
    %v5112 = vxor.u32 %v4963, 2147483648
    %v5113 = vxor.u32 %v4967, 2147483648
    %v5114 = vxor.u32 %v4969, 2147483648
    %v5115 = vxor.u32 %v4971, 2147483648
    %v5116 = vxor.u32 %v4973, 2147483648
    %v5117 = vxor.u32 %v4977, 2147483648
    %v5118 = vxor.u32 %v4979, 2147483648
    %v5119 = vxor.u32 %v4981, 2147483648
    %v5120 = vxor.u32 %v4983, 2147483648
    %v5121 = vxor.u32 %v4987, 2147483648
    %v5122 = vxor.u32 %v4989, 2147483648
    %v5123 = vxor.u32 %v4991, 2147483648
    %v5124 = vxor.u32 %v4993, 2147483648
    %v5125 = vxor.u32 %v4997, 2147483648
    %v5126 = vxor.u32 %v4999, 2147483648
    %v5127 = vxor.u32 %v5001, 2147483648
    %v5128 = vxor.u32 %v5003, 2147483648
    %v5129 = vxor.u32 %v5007, 2147483648
    %v5130 = vxor.u32 %v5009, 2147483648
    %v5131 = vxor.u32 %v5011, 2147483648
    %v5132 = vxor.u32 %v5013, 2147483648
    %v5133 = vxor.u32 %v5017, 2147483648
    %v5134 = vxor.u32 %v5019, 2147483648
    %v5135 = vxor.u32 %v5021, 2147483648
    %v5136 = vxor.u32 %v5023, 2147483648
    %v5137 = vxor.u32 %v5027, 2147483648
    %v5138 = vxor.u32 %v5029, 2147483648
    %v5139 = vxor.u32 %v5031, 2147483648
    %v5140 = vxor.u32 %v5033, 2147483648
    %v5141 = vxor.u32 %v5037, 2147483648
    %v5142 = vxor.u32 %v5039, 2147483648
    %v5143 = vxor.u32 %v5041, 2147483648
    %v5144 = vxor.u32 %v5043, 2147483648
    %v5145 = vxor.u32 %v5047, 2147483648
    %v5146 = vxor.u32 %v5049, 2147483648
    %v5147 = vxor.u32 %v5051, 2147483648
    %v5148 = vxor.u32 %v5053, 2147483648
    %v5149 = vxor.u32 %v5057, 2147483648
    %v5150 = vxor.u32 %v5059, 2147483648
    %v5151 = vxor.u32 %v5061, 2147483648
    %v5152 = vxor.u32 %v5063, 2147483648
    %v5153 = vxor.u32 %v5067, 2147483648
    %v5154 = vxor.u32 %v5069, 2147483648
    %v5155 = vxor.u32 %v5071, 2147483648
    %v5156 = vxor.u32 %v5073, 2147483648
    %v5157 = vxor.u32 %v5077, 2147483648
    %v5158 = vxor.u32 %v5079, 2147483648
    %v5159 = vxor.u32 %v5081, 2147483648
    %v5160 = vxor.u32 %v5083, 2147483648
    %v5161 = vxor.u32 %v5087, 2147483648
    %v5162 = vxor.u32 %v5089, 2147483648
    %v5163 = vxor.u32 %v5091, 2147483648
    %v5164 = vxor.u32 %v5093, 2147483648
    %v5165 = vxor.u32 %v5097, 2147483648
    %v5166 = vxor.u32 %v5099, 2147483648
    %v5167 = vxor.u32 %v5101, 2147483648
    %v5168 = vxor.u32 %v5103, 2147483648
    %v5169 = vmul.f32 %v5105, 1.442695
    %v5170 = vpow.pop %v5169
    %v5171 = vmul.f32 %v5106, 1.442695
    %v5172 = vpow.pop %v5171
    %v5173 = vmul.f32 %v5107, 1.442695
    %v5174 = vpow.pop %v5173
    %v5175 = vmul.f32 %v5108, 1.442695
    %v5176 = vpow.pop %v5175
    %v5177 = vmul.f32 %v5109, 1.442695
    %v5178 = vpow.pop %v5177
    %v5179 = vmul.f32 %v5110, 1.442695
    %v5180 = vpow.pop %v5179
    %v5181 = vmul.f32 %v5111, 1.442695
    %v5182 = vpow.pop %v5181
    %v5183 = vmul.f32 %v5112, 1.442695
    %v5184 = vpow.pop %v5183
    %v5185 = vmul.f32 %v5113, 1.442695
    %v5186 = vpow.pop %v5185
    %v5187 = vmul.f32 %v5114, 1.442695
    %v5188 = vpow.pop %v5187
    %v5189 = vmul.f32 %v5115, 1.442695
    %v5190 = vpow.pop %v5189
    %v5191 = vmul.f32 %v5116, 1.442695
    %v5192 = vpow.pop %v5191
    %v5193 = vmul.f32 %v5117, 1.442695
    %v5194 = vpow.pop %v5193
    %v5195 = vmul.f32 %v5118, 1.442695
    %v5196 = vpow.pop %v5195
    %v5197 = vmul.f32 %v5119, 1.442695
    %v5198 = vpow.pop %v5197
    %v5199 = vmul.f32 %v5120, 1.442695
    %v5200 = vpow.pop %v5199
    %v5201 = vmul.f32 %v5121, 1.442695
    %v5202 = vpow.pop %v5201
    %v5203 = vmul.f32 %v5122, 1.442695
    %v5204 = vpow.pop %v5203
    %v5205 = vmul.f32 %v5123, 1.442695
    %v5206 = vpow.pop %v5205
    %v5207 = vmul.f32 %v5124, 1.442695
    %v5208 = vpow.pop %v5207
    %v5209 = vmul.f32 %v5125, 1.442695
    %v5210 = vpow.pop %v5209
    %v5211 = vmul.f32 %v5126, 1.442695
    %v5212 = vpow.pop %v5211
    %v5213 = vmul.f32 %v5127, 1.442695
    %v5214 = vpow.pop %v5213
    %v5215 = vmul.f32 %v5128, 1.442695
    %v5216 = vpow.pop %v5215
    %v5217 = vmul.f32 %v5129, 1.442695
    %v5218 = vpow.pop %v5217
    %v5219 = vmul.f32 %v5130, 1.442695
    %v5220 = vpow.pop %v5219
    %v5221 = vmul.f32 %v5131, 1.442695
    %v5222 = vpow.pop %v5221
    %v5223 = vmul.f32 %v5132, 1.442695
    %v5224 = vpow.pop %v5223
    %v5225 = vmul.f32 %v5133, 1.442695
    %v5226 = vpow.pop %v5225
    %v5227 = vmul.f32 %v5134, 1.442695
    %v5228 = vpow.pop %v5227
    %v5229 = vmul.f32 %v5135, 1.442695
    %v5230 = vpow.pop %v5229
    %v5231 = vmul.f32 %v5136, 1.442695
    %v5232 = vpow.pop %v5231
    %v5233 = vmul.f32 %v5137, 1.442695
    %v5234 = vpow.pop %v5233
    %v5235 = vmul.f32 %v5138, 1.442695
    %v5236 = vpow.pop %v5235
    %v5237 = vmul.f32 %v5139, 1.442695
    %v5238 = vpow.pop %v5237
    %v5239 = vmul.f32 %v5140, 1.442695
    %v5240 = vpow.pop %v5239
    %v5241 = vmul.f32 %v5141, 1.442695
    %v5242 = vpow.pop %v5241
    %v5243 = vmul.f32 %v5142, 1.442695
    %v5244 = vpow.pop %v5243
    %v5245 = vmul.f32 %v5143, 1.442695
    %v5246 = vpow.pop %v5245
    %v5247 = vmul.f32 %v5144, 1.442695
    %v5248 = vpow.pop %v5247
    %v5249 = vmul.f32 %v5145, 1.442695
    %v5250 = vpow.pop %v5249
    %v5251 = vmul.f32 %v5146, 1.442695
    %v5252 = vpow.pop %v5251
    %v5253 = vmul.f32 %v5147, 1.442695
    %v5254 = vpow.pop %v5253
    %v5255 = vmul.f32 %v5148, 1.442695
    %v5256 = vpow.pop %v5255
    %v5257 = vmul.f32 %v5149, 1.442695
    %v5258 = vpow.pop %v5257
    %v5259 = vmul.f32 %v5150, 1.442695
    %v5260 = vpow.pop %v5259
    %v5261 = vmul.f32 %v5151, 1.442695
    %v5262 = vpow.pop %v5261
    %v5263 = vmul.f32 %v5152, 1.442695
    %v5264 = vpow.pop %v5263
    %v5265 = vmul.f32 %v5153, 1.442695
    %v5266 = vpow.pop %v5265
    %v5267 = vmul.f32 %v5154, 1.442695
    %v5268 = vpow.pop %v5267
    %v5269 = vmul.f32 %v5155, 1.442695
    %v5270 = vpow.pop %v5269
    %v5271 = vmul.f32 %v5156, 1.442695
    %v5272 = vpow.pop %v5271
    %v5273 = vmul.f32 %v5157, 1.442695
    %v5274 = vpow.pop %v5273
    %v5275 = vmul.f32 %v5158, 1.442695
    %v5276 = vpow.pop %v5275
    %v5277 = vmul.f32 %v5159, 1.442695
    %v5278 = vpow.pop %v5277
    %v5279 = vmul.f32 %v5160, 1.442695
    %v5280 = vpow.pop %v5279
    %v5281 = vmul.f32 %v5161, 1.442695
    %v5282 = vpow.pop %v5281
    %v5283 = vmul.f32 %v5162, 1.442695
    %v5284 = vpow.pop %v5283
    %v5285 = vmul.f32 %v5163, 1.442695
    %v5286 = vpow.pop %v5285
    %v5287 = vmul.f32 %v5164, 1.442695
    %v5288 = vpow.pop %v5287
    %v5289 = vmul.f32 %v5165, 1.442695
    %v5290 = vpow.pop %v5289
    %v5291 = vmul.f32 %v5166, 1.442695
    %v5292 = vpow.pop %v5291
    %v5293 = vmul.f32 %v5167, 1.442695
    %v5294 = vpow.pop %v5293
    %v5295 = vmul.f32 %v5168, 1.442695
    %v5296 = vpow.pop %v5295
    %v5297 = vadd.f32 %v5170, 1.0
    %v5298 = vadd.f32 %v5172, 1.0
    %v5299 = vadd.f32 %v5174, 1.0
    %v5300 = vadd.f32 %v5176, 1.0
    %v5301 = vadd.f32 %v5178, 1.0
    %v5302 = vadd.f32 %v5180, 1.0
    %v5303 = vadd.f32 %v5182, 1.0
    %v5304 = vadd.f32 %v5184, 1.0
    %v5305 = vadd.f32 %v5186, 1.0
    %v5306 = vadd.f32 %v5188, 1.0
    %v5307 = vadd.f32 %v5190, 1.0
    %v5308 = vadd.f32 %v5192, 1.0
    %v5309 = vadd.f32 %v5194, 1.0
    %v5310 = vadd.f32 %v5196, 1.0
    %v5311 = vadd.f32 %v5198, 1.0
    %v5312 = vadd.f32 %v5200, 1.0
    %v5313 = vadd.f32 %v5202, 1.0
    %v5314 = vadd.f32 %v5204, 1.0
    %v5315 = vadd.f32 %v5206, 1.0
    %v5316 = vadd.f32 %v5208, 1.0
    %v5317 = vadd.f32 %v5210, 1.0
    %v5318 = vadd.f32 %v5212, 1.0
    %v5319 = vadd.f32 %v5214, 1.0
    %v5320 = vadd.f32 %v5216, 1.0
    %v5321 = vadd.f32 %v5218, 1.0
    %v5322 = vadd.f32 %v5220, 1.0
    %v5323 = vadd.f32 %v5222, 1.0
    %v5324 = vadd.f32 %v5224, 1.0
    %v5325 = vadd.f32 %v5226, 1.0
    %v5326 = vadd.f32 %v5228, 1.0
    %v5327 = vadd.f32 %v5230, 1.0
    %v5328 = vadd.f32 %v5232, 1.0
    %v5329 = vadd.f32 %v5234, 1.0
    %v5330 = vadd.f32 %v5236, 1.0
    %v5331 = vadd.f32 %v5238, 1.0
    %v5332 = vadd.f32 %v5240, 1.0
    %v5333 = vadd.f32 %v5242, 1.0
    %v5334 = vadd.f32 %v5244, 1.0
    %v5335 = vadd.f32 %v5246, 1.0
    %v5336 = vadd.f32 %v5248, 1.0
    %v5337 = vadd.f32 %v5250, 1.0
    %v5338 = vadd.f32 %v5252, 1.0
    %v5339 = vadd.f32 %v5254, 1.0
    %v5340 = vadd.f32 %v5256, 1.0
    %v5341 = vadd.f32 %v5258, 1.0
    %v5342 = vadd.f32 %v5260, 1.0
    %v5343 = vadd.f32 %v5262, 1.0
    %v5344 = vadd.f32 %v5264, 1.0
    %v5345 = vadd.f32 %v5266, 1.0
    %v5346 = vadd.f32 %v5268, 1.0
    %v5347 = vadd.f32 %v5270, 1.0
    %v5348 = vadd.f32 %v5272, 1.0
    %v5349 = vadd.f32 %v5274, 1.0
    %v5350 = vadd.f32 %v5276, 1.0
    %v5351 = vadd.f32 %v5278, 1.0
    %v5352 = vadd.f32 %v5280, 1.0
    %v5353 = vadd.f32 %v5282, 1.0
    %v5354 = vadd.f32 %v5284, 1.0
    %v5355 = vadd.f32 %v5286, 1.0
    %v5356 = vadd.f32 %v5288, 1.0
    %v5357 = vadd.f32 %v5290, 1.0
    %v5358 = vadd.f32 %v5292, 1.0
    %v5359 = vadd.f32 %v5294, 1.0
    %v5360 = vadd.f32 %v5296, 1.0
    %v5361 = vrcp.pop %v5297
    %v5362 = vmul.f32 1.0, %v5361
    %v5363 = vrcp.pop %v5298
    %v5364 = vmul.f32 1.0, %v5363
    %v5365 = vrcp.pop %v5299
    %v5366 = vmul.f32 1.0, %v5365
    %v5367 = vrcp.pop %v5300
    %v5368 = vmul.f32 1.0, %v5367
    %v5369 = vrcp.pop %v5301
    %v5370 = vmul.f32 1.0, %v5369
    %v5371 = vrcp.pop %v5302
    %v5372 = vmul.f32 1.0, %v5371
    %v5373 = vrcp.pop %v5303
    %v5374 = vmul.f32 1.0, %v5373
    %v5375 = vrcp.pop %v5304
    %v5376 = vmul.f32 1.0, %v5375
    %v5377 = vrcp.pop %v5305
    %v5378 = vmul.f32 1.0, %v5377
    %v5379 = vrcp.pop %v5306
    %v5380 = vmul.f32 1.0, %v5379
    %v5381 = vrcp.pop %v5307
    %v5382 = vmul.f32 1.0, %v5381
    %v5383 = vrcp.pop %v5308
    %v5384 = vmul.f32 1.0, %v5383
    %v5385 = vrcp.pop %v5309
    %v5386 = vmul.f32 1.0, %v5385
    %v5387 = vrcp.pop %v5310
    %v5388 = vmul.f32 1.0, %v5387
    %v5389 = vrcp.pop %v5311
    %v5390 = vmul.f32 1.0, %v5389
    %v5391 = vrcp.pop %v5312
    %v5392 = vmul.f32 1.0, %v5391
    %v5393 = vrcp.pop %v5313
    %v5394 = vmul.f32 1.0, %v5393
    %v5395 = vrcp.pop %v5314
    %v5396 = vmul.f32 1.0, %v5395
    %v5397 = vrcp.pop %v5315
    %v5398 = vmul.f32 1.0, %v5397
    %v5399 = vrcp.pop %v5316
    %v5400 = vmul.f32 1.0, %v5399
    %v5401 = vrcp.pop %v5317
    %v5402 = vmul.f32 1.0, %v5401
    %v5403 = vrcp.pop %v5318
    %v5404 = vmul.f32 1.0, %v5403
    %v5405 = vrcp.pop %v5319
    %v5406 = vmul.f32 1.0, %v5405
    %v5407 = vrcp.pop %v5320
    %v5408 = vmul.f32 1.0, %v5407
    %v5409 = vrcp.pop %v5321
    %v5410 = vmul.f32 1.0, %v5409
    %v5411 = vrcp.pop %v5322
    %v5412 = vmul.f32 1.0, %v5411
    %v5413 = vrcp.pop %v5323
    %v5414 = vmul.f32 1.0, %v5413
    %v5415 = vrcp.pop %v5324
    %v5416 = vmul.f32 1.0, %v5415
    %v5417 = vrcp.pop %v5325
    %v5418 = vmul.f32 1.0, %v5417
    %v5419 = vrcp.pop %v5326
    %v5420 = vmul.f32 1.0, %v5419
    %v5421 = vrcp.pop %v5327
    %v5422 = vmul.f32 1.0, %v5421
    %v5423 = vrcp.pop %v5328
    %v5424 = vmul.f32 1.0, %v5423
    %v5425 = vrcp.pop %v5329
    %v5426 = vmul.f32 1.0, %v5425
    %v5427 = vrcp.pop %v5330
    %v5428 = vmul.f32 1.0, %v5427
    %v5429 = vrcp.pop %v5331
    %v5430 = vmul.f32 1.0, %v5429
    %v5431 = vrcp.pop %v5332
    %v5432 = vmul.f32 1.0, %v5431
    %v5433 = vrcp.pop %v5333
    %v5434 = vmul.f32 1.0, %v5433
    %v5435 = vrcp.pop %v5334
    %v5436 = vmul.f32 1.0, %v5435
    %v5437 = vrcp.pop %v5335
    %v5438 = vmul.f32 1.0, %v5437
    %v5439 = vrcp.pop %v5336
    %v5440 = vmul.f32 1.0, %v5439
    %v5441 = vrcp.pop %v5337
    %v5442 = vmul.f32 1.0, %v5441
    %v5443 = vrcp.pop %v5338
    %v5444 = vmul.f32 1.0, %v5443
    %v5445 = vrcp.pop %v5339
    %v5446 = vmul.f32 1.0, %v5445
    %v5447 = vrcp.pop %v5340
    %v5448 = vmul.f32 1.0, %v5447
    %v5449 = vrcp.pop %v5341
    %v5450 = vmul.f32 1.0, %v5449
    %v5451 = vrcp.pop %v5342
    %v5452 = vmul.f32 1.0, %v5451
    %v5453 = vrcp.pop %v5343
    %v5454 = vmul.f32 1.0, %v5453
    %v5455 = vrcp.pop %v5344
    %v5456 = vmul.f32 1.0, %v5455
    %v5457 = vrcp.pop %v5345
    %v5458 = vmul.f32 1.0, %v5457
    %v5459 = vrcp.pop %v5346
    %v5460 = vmul.f32 1.0, %v5459
    %v5461 = vrcp.pop %v5347
    %v5462 = vmul.f32 1.0, %v5461
    %v5463 = vrcp.pop %v5348
    %v5464 = vmul.f32 1.0, %v5463
    %v5465 = vrcp.pop %v5349
    %v5466 = vmul.f32 1.0, %v5465
    %v5467 = vrcp.pop %v5350
    %v5468 = vmul.f32 1.0, %v5467
    %v5469 = vrcp.pop %v5351
    %v5470 = vmul.f32 1.0, %v5469
    %v5471 = vrcp.pop %v5352
    %v5472 = vmul.f32 1.0, %v5471
    %v5473 = vrcp.pop %v5353
    %v5474 = vmul.f32 1.0, %v5473
    %v5475 = vrcp.pop %v5354
    %v5476 = vmul.f32 1.0, %v5475
    %v5477 = vrcp.pop %v5355
    %v5478 = vmul.f32 1.0, %v5477
    %v5479 = vrcp.pop %v5356
    %v5480 = vmul.f32 1.0, %v5479
    %v5481 = vrcp.pop %v5357
    %v5482 = vmul.f32 1.0, %v5481
    %v5483 = vrcp.pop %v5358
    %v5484 = vmul.f32 1.0, %v5483
    %v5485 = vrcp.pop %v5359
    %v5486 = vmul.f32 1.0, %v5485
    %v5487 = vrcp.pop %v5360
    %v5488 = vmul.f32 1.0, %v5487
    %v5489 = vmul.f32 %v4947, %v5362
    %v5490 = vmul.f32 %v4949, %v5364
    %v5491 = vmul.f32 %v4951, %v5366
    %v5492 = vmul.f32 %v4953, %v5368
    %v5493 = vmul.f32 %v4957, %v5370
    %v5494 = vmul.f32 %v4959, %v5372
    %v5495 = vmul.f32 %v4961, %v5374
    %v5496 = vmul.f32 %v4963, %v5376
    %v5497 = vmul.f32 %v4967, %v5378
    %v5498 = vmul.f32 %v4969, %v5380
    %v5499 = vmul.f32 %v4971, %v5382
    %v5500 = vmul.f32 %v4973, %v5384
    %v5501 = vmul.f32 %v4977, %v5386
    %v5502 = vmul.f32 %v4979, %v5388
    %v5503 = vmul.f32 %v4981, %v5390
    %v5504 = vmul.f32 %v4983, %v5392
    %v5505 = vmul.f32 %v4987, %v5394
    %v5506 = vmul.f32 %v4989, %v5396
    %v5507 = vmul.f32 %v4991, %v5398
    %v5508 = vmul.f32 %v4993, %v5400
    %v5509 = vmul.f32 %v4997, %v5402
    %v5510 = vmul.f32 %v4999, %v5404
    %v5511 = vmul.f32 %v5001, %v5406
    %v5512 = vmul.f32 %v5003, %v5408
    %v5513 = vmul.f32 %v5007, %v5410
    %v5514 = vmul.f32 %v5009, %v5412
    %v5515 = vmul.f32 %v5011, %v5414
    %v5516 = vmul.f32 %v5013, %v5416
    %v5517 = vmul.f32 %v5017, %v5418
    %v5518 = vmul.f32 %v5019, %v5420
    %v5519 = vmul.f32 %v5021, %v5422
    %v5520 = vmul.f32 %v5023, %v5424
    %v5521 = vmul.f32 %v5027, %v5426
    %v5522 = vmul.f32 %v5029, %v5428
    %v5523 = vmul.f32 %v5031, %v5430
    %v5524 = vmul.f32 %v5033, %v5432
    %v5525 = vmul.f32 %v5037, %v5434
    %v5526 = vmul.f32 %v5039, %v5436
    %v5527 = vmul.f32 %v5041, %v5438
    %v5528 = vmul.f32 %v5043, %v5440
    %v5529 = vmul.f32 %v5047, %v5442
    %v5530 = vmul.f32 %v5049, %v5444
    %v5531 = vmul.f32 %v5051, %v5446
    %v5532 = vmul.f32 %v5053, %v5448
    %v5533 = vmul.f32 %v5057, %v5450
    %v5534 = vmul.f32 %v5059, %v5452
    %v5535 = vmul.f32 %v5061, %v5454
    %v5536 = vmul.f32 %v5063, %v5456
    %v5537 = vmul.f32 %v5067, %v5458
    %v5538 = vmul.f32 %v5069, %v5460
    %v5539 = vmul.f32 %v5071, %v5462
    %v5540 = vmul.f32 %v5073, %v5464
    %v5541 = vmul.f32 %v5077, %v5466
    %v5542 = vmul.f32 %v5079, %v5468
    %v5543 = vmul.f32 %v5081, %v5470
    %v5544 = vmul.f32 %v5083, %v5472
    %v5545 = vmul.f32 %v5087, %v5474
    %v5546 = vmul.f32 %v5089, %v5476
    %v5547 = vmul.f32 %v5091, %v5478
    %v5548 = vmul.f32 %v5093, %v5480
    %v5549 = vmul.f32 %v5097, %v5482
    %v5550 = vmul.f32 %v5099, %v5484
    %v5551 = vmul.f32 %v5101, %v5486
    %v5552 = vmul.f32 %v5103, %v5488
    %v5553 = vld [vmem:[#allocation6] sm:$0xff]
    %v5554 = vld [vmem:[#allocation6 + $0x8] sm:$0xff]
    %v5555 = vld [vmem:[#allocation6 + $0x10] sm:$0xff]
    %v5556 = vld [vmem:[#allocation6 + $0x18] sm:$0xff]
    %v5557 = vld [vmem:[#allocation6 + $0x20] sm:$0xff]
    %v5558 = vld [vmem:[#allocation6 + $0x28] sm:$0xff]
    %v5559 = vld [vmem:[#allocation6 + $0x30] sm:$0xff]
    %v5560 = vld [vmem:[#allocation6 + $0x38] sm:$0xff]
    %v5561 = vld [vmem:[#allocation6 + $0x40] sm:$0xff]
    %v5562 = vld [vmem:[#allocation6 + $0x48] sm:$0xff]
    %v5563 = vld [vmem:[#allocation6 + $0x50] sm:$0xff]
    %v5564 = vld [vmem:[#allocation6 + $0x58] sm:$0xff]
    %v5565 = vld [vmem:[#allocation6 + $0x60] sm:$0xff]
    %v5566 = vld [vmem:[#allocation6 + $0x68] sm:$0xff]
    %v5567 = vld [vmem:[#allocation6 + $0x70] sm:$0xff]
    %v5568 = vld [vmem:[#allocation6 + $0x78] sm:$0xff]
    %v5569 = vpack.c.bf16 %v5491, %v5489
    %v5570 = vpack.c.bf16 %v5492, %v5490
    %v5571 = vpack.c.bf16 %v5495, %v5493
    %v5572 = vpack.c.bf16 %v5496, %v5494
    %v5573 = vpack.c.bf16 %v5499, %v5497
    %v5574 = vpack.c.bf16 %v5500, %v5498
    %v5575 = vpack.c.bf16 %v5503, %v5501
    %v5576 = vpack.c.bf16 %v5504, %v5502
    %v5577 = vpack.c.bf16 %v5507, %v5505
    %v5578 = vpack.c.bf16 %v5508, %v5506
    %v5579 = vpack.c.bf16 %v5511, %v5509
    %v5580 = vpack.c.bf16 %v5512, %v5510
    %v5581 = vpack.c.bf16 %v5515, %v5513
    %v5582 = vpack.c.bf16 %v5516, %v5514
    %v5583 = vpack.c.bf16 %v5519, %v5517
    %v5584 = vpack.c.bf16 %v5520, %v5518
    %v5585 = vpack.c.bf16 %v5523, %v5521
    %v5586 = vpack.c.bf16 %v5524, %v5522
    %v5587 = vpack.c.bf16 %v5527, %v5525
    %v5588 = vpack.c.bf16 %v5528, %v5526
    %v5589 = vpack.c.bf16 %v5531, %v5529
    %v5590 = vpack.c.bf16 %v5532, %v5530
    %v5591 = vpack.c.bf16 %v5535, %v5533
    %v5592 = vpack.c.bf16 %v5536, %v5534
    %v5593 = vpack.c.bf16 %v5539, %v5537
    %v5594 = vpack.c.bf16 %v5540, %v5538
    %v5595 = vpack.c.bf16 %v5543, %v5541
    %v5596 = vpack.c.bf16 %v5544, %v5542
    %v5597 = vpack.c.bf16 %v5547, %v5545
    %v5598 = vpack.c.bf16 %v5548, %v5546
    %v5599 = vpack.c.bf16 %v5551, %v5549
    %v5600 = vpack.c.bf16 %v5552, %v5550
    %v5601 = vld [vmem:[%s8] sm:$0xff]
    %v5602 = vld [vmem:[%s8 + $0x8] sm:$0xff]
    %v5603 = vld [vmem:[%s8 + $0x10] sm:$0xff]
    %v5604 = vld [vmem:[%s8 + $0x18] sm:$0xff]
    %v5605 = vld [vmem:[%s8 + $0x20] sm:$0xff]
    %v5606 = vld [vmem:[%s8 + $0x28] sm:$0xff]
    %v5607 = vld [vmem:[%s8 + $0x30] sm:$0xff]
    %v5608 = vld [vmem:[%s8 + $0x38] sm:$0xff]
    %v5609 = vld [vmem:[%s8 + $0x40] sm:$0xff]
    %v5610 = vld [vmem:[%s8 + $0x48] sm:$0xff]
    %v5611 = vld [vmem:[%s8 + $0x50] sm:$0xff]
    %v5612 = vld [vmem:[%s8 + $0x58] sm:$0xff]
    %v5613 = vld [vmem:[%s8 + $0x60] sm:$0xff]
    %v5614 = vld [vmem:[%s8 + $0x68] sm:$0xff]
    %v5615 = vld [vmem:[%s8 + $0x70] sm:$0xff]
    %v5616 = vld [vmem:[%s8 + $0x78] sm:$0xff]
    %5618 = vset.pattern.permute.xlu0 0
    %5619 = vperm.xlu0 %5618, %v5601
    %v5620 = vpop.permute.xlu0 %5619
    %5623 = vset.pattern.permute.xlu0 0
    %5624 = vperm.xlu0 %5623, %v5602
    %v5625 = vpop.permute.xlu0 %5624
    %5628 = vset.pattern.permute.xlu0 0
    %5629 = vperm.xlu0 %5628, %v5603
    %v5630 = vpop.permute.xlu0 %5629
    %5633 = vset.pattern.permute.xlu0 0
    %5634 = vperm.xlu0 %5633, %v5604
    %v5635 = vpop.permute.xlu0 %5634
    %5638 = vset.pattern.permute.xlu0 0
    %5639 = vperm.xlu0 %5638, %v5605
    %v5640 = vpop.permute.xlu0 %5639
    %5643 = vset.pattern.permute.xlu0 0
    %5644 = vperm.xlu0 %5643, %v5606
    %v5645 = vpop.permute.xlu0 %5644
    %5648 = vset.pattern.permute.xlu0 0
    %5649 = vperm.xlu0 %5648, %v5607
    %v5650 = vpop.permute.xlu0 %5649
    %5653 = vset.pattern.permute.xlu0 0
    %5654 = vperm.xlu0 %5653, %v5608
    %v5655 = vpop.permute.xlu0 %5654
    %5658 = vset.pattern.permute.xlu0 0
    %5659 = vperm.xlu0 %5658, %v5609
    %v5660 = vpop.permute.xlu0 %5659
    %5663 = vset.pattern.permute.xlu0 0
    %5664 = vperm.xlu0 %5663, %v5610
    %v5665 = vpop.permute.xlu0 %5664
    %5668 = vset.pattern.permute.xlu0 0
    %5669 = vperm.xlu0 %5668, %v5611
    %v5670 = vpop.permute.xlu0 %5669
    %5673 = vset.pattern.permute.xlu0 0
    %5674 = vperm.xlu0 %5673, %v5612
    %v5675 = vpop.permute.xlu0 %5674
    %5678 = vset.pattern.permute.xlu0 0
    %5679 = vperm.xlu0 %5678, %v5613
    %v5680 = vpop.permute.xlu0 %5679
    %5683 = vset.pattern.permute.xlu0 0
    %5684 = vperm.xlu0 %5683, %v5614
    %v5685 = vpop.permute.xlu0 %5684
    %5688 = vset.pattern.permute.xlu0 0
    %5689 = vperm.xlu0 %5688, %v5615
    %v5690 = vpop.permute.xlu0 %5689
    %5693 = vset.pattern.permute.xlu0 0
    %5694 = vperm.xlu0 %5693, %v5616
    %v5695 = vpop.permute.xlu0 %5694
    %v5713 = vunpack.c.l.b16 %v5553
    %v5714 = vunpack.c.h.b16 %v5553
    %v5715 = vunpack.c.l.b16 %v5554
    %v5716 = vunpack.c.h.b16 %v5554
    %v5717 = vunpack.c.l.b16 %v5555
    %v5718 = vunpack.c.h.b16 %v5555
    %v5719 = vunpack.c.l.b16 %v5556
    %v5720 = vunpack.c.h.b16 %v5556
    %v5721 = vunpack.c.l.b16 %v5557
    %v5722 = vunpack.c.h.b16 %v5557
    %v5723 = vunpack.c.l.b16 %v5558
    %v5724 = vunpack.c.h.b16 %v5558
    %v5725 = vunpack.c.l.b16 %v5559
    %v5726 = vunpack.c.h.b16 %v5559
    %v5727 = vunpack.c.l.b16 %v5560
    %v5728 = vunpack.c.h.b16 %v5560
    %v5729 = vunpack.c.l.b16 %v5561
    %v5730 = vunpack.c.h.b16 %v5561
    %v5731 = vunpack.c.l.b16 %v5562
    %v5732 = vunpack.c.h.b16 %v5562
    %v5733 = vunpack.c.l.b16 %v5563
    %v5734 = vunpack.c.h.b16 %v5563
    %v5735 = vunpack.c.l.b16 %v5564
    %v5736 = vunpack.c.h.b16 %v5564
    %v5737 = vunpack.c.l.b16 %v5565
    %v5738 = vunpack.c.h.b16 %v5565
    %v5739 = vunpack.c.l.b16 %v5566
    %v5740 = vunpack.c.h.b16 %v5566
    %v5741 = vunpack.c.l.b16 %v5567
    %v5742 = vunpack.c.h.b16 %v5567
    %v5743 = vunpack.c.l.b16 %v5568
    %v5744 = vunpack.c.h.b16 %v5568
    %v5745 = vpack.c.b16 %v5715, %v5713
    %v5746 = vpack.c.b16 %v5716, %v5714
    %v5747 = vpack.c.b16 %v5719, %v5717
    %v5748 = vpack.c.b16 %v5720, %v5718
    %v5749 = vpack.c.b16 %v5723, %v5721
    %v5750 = vpack.c.b16 %v5724, %v5722
    %v5751 = vpack.c.b16 %v5727, %v5725
    %v5752 = vpack.c.b16 %v5728, %v5726
    %v5753 = vpack.c.b16 %v5731, %v5729
    %v5754 = vpack.c.b16 %v5732, %v5730
    %v5755 = vpack.c.b16 %v5735, %v5733
    %v5756 = vpack.c.b16 %v5736, %v5734
    %v5757 = vpack.c.b16 %v5739, %v5737
    %v5758 = vpack.c.b16 %v5740, %v5738
    %v5759 = vpack.c.b16 %v5743, %v5741
    %v5760 = vpack.c.b16 %v5744, %v5742
    %5777 = vmatprep.subr.bf16.mxu0 %v5570
    %5778 = vmatpush1.bf16.msra.mxu0 %v5569
    %5779 = vmatprep.subr.bf16.mxu0 %v5572
    %5780 = vmatpush1.bf16.msra.mxu0 %v5571
    %5781 = vmatprep.subr.bf16.mxu0 %v5574
    %5782 = vmatpush1.bf16.msra.mxu0 %v5573
    %5783 = vmatprep.subr.bf16.mxu0 %v5576
    %5784 = vmatpush1.bf16.msra.mxu0 %v5575
    %5785 = vmatprep.subr.bf16.mxu0 %v5578
    %5786 = vmatpush1.bf16.msra.mxu0 %v5577
    %5787 = vmatprep.subr.bf16.mxu0 %v5580
    %5788 = vmatpush1.bf16.msra.mxu0 %v5579
    %5789 = vmatprep.subr.bf16.mxu0 %v5582
    %5790 = vmatpush1.bf16.msra.mxu0 %v5581
    %5791 = vmatprep.subr.bf16.mxu0 %v5584
    %5792 = vmatpush1.bf16.msra.mxu0 %v5583
    %5793 = vmatprep.subr.bf16.mxu0 %v5586
    %5794 = vmatpush1.bf16.msra.mxu0 %v5585
    %5795 = vmatprep.subr.bf16.mxu0 %v5588
    %5796 = vmatpush1.bf16.msra.mxu0 %v5587
    %5797 = vmatprep.subr.bf16.mxu0 %v5590
    %5798 = vmatpush1.bf16.msra.mxu0 %v5589
    %5799 = vmatprep.subr.bf16.mxu0 %v5592
    %5800 = vmatpush1.bf16.msra.mxu0 %v5591
    %5801 = vmatprep.subr.bf16.mxu0 %v5594
    %5802 = vmatpush1.bf16.msra.mxu0 %v5593
    %5803 = vmatprep.subr.bf16.mxu0 %v5596
    %5804 = vmatpush1.bf16.msra.mxu0 %v5595
    %5805 = vmatprep.subr.bf16.mxu0 %v5598
    %5806 = vmatpush1.bf16.msra.mxu0 %v5597
    %5807 = vmatprep.subr.bf16.mxu0 %v5600
    %5808 = vmatpush1.bf16.msra.mxu0 %v5599
    %5809 = vmatprep.mubr.bf16.mxu0 %v5746
    %5810 = vmatmul.mubr.bf16.gmra.mrb[0].mxu0 %v5745
    %v5811 = vpop.f32.mrb[0].mxu0
    %v5812 = vadd.f32 %v5620, %v5811
    %v5813 = vpop.f32.mrb[0].mxu0
    %v5814 = vadd.f32 %v5620, %v5813
    %v5815 = vpop.f32.mrb[0].mxu0
    %v5816 = vadd.f32 %v5625, %v5815
    %v5817 = vpop.f32.mrb[0].mxu0
    %v5818 = vadd.f32 %v5625, %v5817
    %5819 = vmatprep.mubr.bf16.mxu0 %v5748
    %5820 = vmatmul.mubr.bf16.gmra.mrb[0].mxu0 %v5747
    %v5821 = vpop.f32.mrb[0].mxu0
    %v5822 = vadd.f32 %v5630, %v5821
    %v5823 = vpop.f32.mrb[0].mxu0
    %v5824 = vadd.f32 %v5630, %v5823
    %v5825 = vpop.f32.mrb[0].mxu0
    %v5826 = vadd.f32 %v5635, %v5825
    %v5827 = vpop.f32.mrb[0].mxu0
    %v5828 = vadd.f32 %v5635, %v5827
    %5829 = vmatprep.mubr.bf16.mxu0 %v5750
    %5830 = vmatmul.mubr.bf16.gmra.mrb[0].mxu0 %v5749
    %v5831 = vpop.f32.mrb[0].mxu0
    %v5832 = vadd.f32 %v5640, %v5831
    %v5833 = vpop.f32.mrb[0].mxu0
    %v5834 = vadd.f32 %v5640, %v5833
    %v5835 = vpop.f32.mrb[0].mxu0
    %v5836 = vadd.f32 %v5645, %v5835
    %v5837 = vpop.f32.mrb[0].mxu0
    %v5838 = vadd.f32 %v5645, %v5837
    %5839 = vmatprep.mubr.bf16.mxu0 %v5752
    %5840 = vmatmul.mubr.bf16.gmra.mrb[0].mxu0 %v5751
    %v5841 = vpop.f32.mrb[0].mxu0
    %v5842 = vadd.f32 %v5650, %v5841
    %v5843 = vpop.f32.mrb[0].mxu0
    %v5844 = vadd.f32 %v5650, %v5843
    %v5845 = vpop.f32.mrb[0].mxu0
    %v5846 = vadd.f32 %v5655, %v5845
    %v5847 = vpop.f32.mrb[0].mxu0
    %v5848 = vadd.f32 %v5655, %v5847
    %5849 = vmatprep.mubr.bf16.mxu0 %v5754
    %5850 = vmatmul.mubr.bf16.gmra.mrb[0].mxu0 %v5753
    %v5851 = vpop.f32.mrb[0].mxu0
    %v5852 = vadd.f32 %v5660, %v5851
    %v5853 = vpop.f32.mrb[0].mxu0
    %v5854 = vadd.f32 %v5660, %v5853
    %v5855 = vpop.f32.mrb[0].mxu0
    %v5856 = vadd.f32 %v5665, %v5855
    %v5857 = vpop.f32.mrb[0].mxu0
    %v5858 = vadd.f32 %v5665, %v5857
    %5859 = vmatprep.mubr.bf16.mxu0 %v5756
    %5860 = vmatmul.mubr.bf16.gmra.mrb[0].mxu0 %v5755
    %v5861 = vpop.f32.mrb[0].mxu0
    %v5862 = vadd.f32 %v5670, %v5861
    %v5863 = vpop.f32.mrb[0].mxu0
    %v5864 = vadd.f32 %v5670, %v5863
    %v5865 = vpop.f32.mrb[0].mxu0
    %v5866 = vadd.f32 %v5675, %v5865
    %v5867 = vpop.f32.mrb[0].mxu0
    %v5868 = vadd.f32 %v5675, %v5867
    %5869 = vmatprep.mubr.bf16.mxu0 %v5758
    %5870 = vmatmul.mubr.bf16.gmra.mrb[0].mxu0 %v5757
    %v5871 = vpop.f32.mrb[0].mxu0
    %v5872 = vadd.f32 %v5680, %v5871
    %v5873 = vpop.f32.mrb[0].mxu0
    %v5874 = vadd.f32 %v5680, %v5873
    %v5875 = vpop.f32.mrb[0].mxu0
    %v5876 = vadd.f32 %v5685, %v5875
    %v5877 = vpop.f32.mrb[0].mxu0
    %v5878 = vadd.f32 %v5685, %v5877
    %5879 = vmatprep.mubr.bf16.mxu0 %v5760
    %5880 = vmatmul.mubr.bf16.gmra.mrb[0].mxu0 %v5759
    %v5881 = vpop.f32.mrb[0].mxu0
    %v5882 = vadd.f32 %v5690, %v5881
    %v5883 = vpop.f32.mrb[0].mxu0
    %v5884 = vadd.f32 %v5690, %v5883
    %v5885 = vpop.f32.mrb[0].mxu0
    %v5886 = vadd.f32 %v5695, %v5885
    %v5887 = vpop.f32.mrb[0].mxu0
    %v5888 = vadd.f32 %v5695, %v5887
    %5889 = vdwg.mxu0
    %v5890 = vxor.u32 %v5812, 2147483648
    %v5891 = vxor.u32 %v5814, 2147483648
    %v5892 = vxor.u32 %v5816, 2147483648
    %v5893 = vxor.u32 %v5818, 2147483648
    %v5894 = vxor.u32 %v5822, 2147483648
    %v5895 = vxor.u32 %v5824, 2147483648
    %v5896 = vxor.u32 %v5826, 2147483648
    %v5897 = vxor.u32 %v5828, 2147483648
    %v5898 = vxor.u32 %v5832, 2147483648
    %v5899 = vxor.u32 %v5834, 2147483648
    %v5900 = vxor.u32 %v5836, 2147483648
    %v5901 = vxor.u32 %v5838, 2147483648
    %v5902 = vxor.u32 %v5842, 2147483648
    %v5903 = vxor.u32 %v5844, 2147483648
    %v5904 = vxor.u32 %v5846, 2147483648
    %v5905 = vxor.u32 %v5848, 2147483648
    %v5906 = vxor.u32 %v5852, 2147483648
    %v5907 = vxor.u32 %v5854, 2147483648
    %v5908 = vxor.u32 %v5856, 2147483648
    %v5909 = vxor.u32 %v5858, 2147483648
    %v5910 = vxor.u32 %v5862, 2147483648
    %v5911 = vxor.u32 %v5864, 2147483648
    %v5912 = vxor.u32 %v5866, 2147483648
    %v5913 = vxor.u32 %v5868, 2147483648
    %v5914 = vxor.u32 %v5872, 2147483648
    %v5915 = vxor.u32 %v5874, 2147483648
    %v5916 = vxor.u32 %v5876, 2147483648
    %v5917 = vxor.u32 %v5878, 2147483648
    %v5918 = vxor.u32 %v5882, 2147483648
    %v5919 = vxor.u32 %v5884, 2147483648
    %v5920 = vxor.u32 %v5886, 2147483648
    %v5921 = vxor.u32 %v5888, 2147483648
    %v5922 = vmul.f32 %v5890, 1.442695
    %v5923 = vpow.pop %v5922
    %v5924 = vmul.f32 %v5891, 1.442695
    %v5925 = vpow.pop %v5924
    %v5926 = vmul.f32 %v5892, 1.442695
    %v5927 = vpow.pop %v5926
    %v5928 = vmul.f32 %v5893, 1.442695
    %v5929 = vpow.pop %v5928
    %v5930 = vmul.f32 %v5894, 1.442695
    %v5931 = vpow.pop %v5930
    %v5932 = vmul.f32 %v5895, 1.442695
    %v5933 = vpow.pop %v5932
    %v5934 = vmul.f32 %v5896, 1.442695
    %v5935 = vpow.pop %v5934
    %v5936 = vmul.f32 %v5897, 1.442695
    %v5937 = vpow.pop %v5936
    %v5938 = vmul.f32 %v5898, 1.442695
    %v5939 = vpow.pop %v5938
    %v5940 = vmul.f32 %v5899, 1.442695
    %v5941 = vpow.pop %v5940
    %v5942 = vmul.f32 %v5900, 1.442695
    %v5943 = vpow.pop %v5942
    %v5944 = vmul.f32 %v5901, 1.442695
    %v5945 = vpow.pop %v5944
    %v5946 = vmul.f32 %v5902, 1.442695
    %v5947 = vpow.pop %v5946
    %v5948 = vmul.f32 %v5903, 1.442695
    %v5949 = vpow.pop %v5948
    %v5950 = vmul.f32 %v5904, 1.442695
    %v5951 = vpow.pop %v5950
    %v5952 = vmul.f32 %v5905, 1.442695
    %v5953 = vpow.pop %v5952
    %v5954 = vmul.f32 %v5906, 1.442695
    %v5955 = vpow.pop %v5954
    %v5956 = vmul.f32 %v5907, 1.442695
    %v5957 = vpow.pop %v5956
    %v5958 = vmul.f32 %v5908, 1.442695
    %v5959 = vpow.pop %v5958
    %v5960 = vmul.f32 %v5909, 1.442695
    %v5961 = vpow.pop %v5960
    %v5962 = vmul.f32 %v5910, 1.442695
    %v5963 = vpow.pop %v5962
    %v5964 = vmul.f32 %v5911, 1.442695
    %v5965 = vpow.pop %v5964
    %v5966 = vmul.f32 %v5912, 1.442695
    %v5967 = vpow.pop %v5966
    %v5968 = vmul.f32 %v5913, 1.442695
    %v5969 = vpow.pop %v5968
    %v5970 = vmul.f32 %v5914, 1.442695
    %v5971 = vpow.pop %v5970
    %v5972 = vmul.f32 %v5915, 1.442695
    %v5973 = vpow.pop %v5972
    %v5974 = vmul.f32 %v5916, 1.442695
    %v5975 = vpow.pop %v5974
    %v5976 = vmul.f32 %v5917, 1.442695
    %v5977 = vpow.pop %v5976
    %v5978 = vmul.f32 %v5918, 1.442695
    %v5979 = vpow.pop %v5978
    %v5980 = vmul.f32 %v5919, 1.442695
    %v5981 = vpow.pop %v5980
    %v5982 = vmul.f32 %v5920, 1.442695
    %v5983 = vpow.pop %v5982
    %v5984 = vmul.f32 %v5921, 1.442695
    %v5985 = vpow.pop %v5984
    %v5986 = vadd.f32 %v5923, 1.0
    %v5987 = vadd.f32 %v5925, 1.0
    %v5988 = vadd.f32 %v5927, 1.0
    %v5989 = vadd.f32 %v5929, 1.0
    %v5990 = vadd.f32 %v5931, 1.0
    %v5991 = vadd.f32 %v5933, 1.0
    %v5992 = vadd.f32 %v5935, 1.0
    %v5993 = vadd.f32 %v5937, 1.0
    %v5994 = vadd.f32 %v5939, 1.0
    %v5995 = vadd.f32 %v5941, 1.0
    %v5996 = vadd.f32 %v5943, 1.0
    %v5997 = vadd.f32 %v5945, 1.0
    %v5998 = vadd.f32 %v5947, 1.0
    %v5999 = vadd.f32 %v5949, 1.0
    %v6000 = vadd.f32 %v5951, 1.0
    %v6001 = vadd.f32 %v5953, 1.0
    %v6002 = vadd.f32 %v5955, 1.0
    %v6003 = vadd.f32 %v5957, 1.0
    %v6004 = vadd.f32 %v5959, 1.0
    %v6005 = vadd.f32 %v5961, 1.0
    %v6006 = vadd.f32 %v5963, 1.0
    %v6007 = vadd.f32 %v5965, 1.0
    %v6008 = vadd.f32 %v5967, 1.0
    %v6009 = vadd.f32 %v5969, 1.0
    %v6010 = vadd.f32 %v5971, 1.0
    %v6011 = vadd.f32 %v5973, 1.0
    %v6012 = vadd.f32 %v5975, 1.0
    %v6013 = vadd.f32 %v5977, 1.0
    %v6014 = vadd.f32 %v5979, 1.0
    %v6015 = vadd.f32 %v5981, 1.0
    %v6016 = vadd.f32 %v5983, 1.0
    %v6017 = vadd.f32 %v5985, 1.0
    %v6018 = vrcp.pop %v5986
    %v6019 = vmul.f32 1.0, %v6018
    %v6020 = vrcp.pop %v5987
    %v6021 = vmul.f32 1.0, %v6020
    %v6022 = vrcp.pop %v5988
    %v6023 = vmul.f32 1.0, %v6022
    %v6024 = vrcp.pop %v5989
    %v6025 = vmul.f32 1.0, %v6024
    %v6026 = vrcp.pop %v5990
    %v6027 = vmul.f32 1.0, %v6026
    %v6028 = vrcp.pop %v5991
    %v6029 = vmul.f32 1.0, %v6028
    %v6030 = vrcp.pop %v5992
    %v6031 = vmul.f32 1.0, %v6030
    %v6032 = vrcp.pop %v5993
    %v6033 = vmul.f32 1.0, %v6032
    %v6034 = vrcp.pop %v5994
    %v6035 = vmul.f32 1.0, %v6034
    %v6036 = vrcp.pop %v5995
    %v6037 = vmul.f32 1.0, %v6036
    %v6038 = vrcp.pop %v5996
    %v6039 = vmul.f32 1.0, %v6038
    %v6040 = vrcp.pop %v5997
    %v6041 = vmul.f32 1.0, %v6040
    %v6042 = vrcp.pop %v5998
    %v6043 = vmul.f32 1.0, %v6042
    %v6044 = vrcp.pop %v5999
    %v6045 = vmul.f32 1.0, %v6044
    %v6046 = vrcp.pop %v6000
    %v6047 = vmul.f32 1.0, %v6046
    %v6048 = vrcp.pop %v6001
    %v6049 = vmul.f32 1.0, %v6048
    %v6050 = vrcp.pop %v6002
    %v6051 = vmul.f32 1.0, %v6050
    %v6052 = vrcp.pop %v6003
    %v6053 = vmul.f32 1.0, %v6052
    %v6054 = vrcp.pop %v6004
    %v6055 = vmul.f32 1.0, %v6054
    %v6056 = vrcp.pop %v6005
    %v6057 = vmul.f32 1.0, %v6056
    %v6058 = vrcp.pop %v6006
    %v6059 = vmul.f32 1.0, %v6058
    %v6060 = vrcp.pop %v6007
    %v6061 = vmul.f32 1.0, %v6060
    %v6062 = vrcp.pop %v6008
    %v6063 = vmul.f32 1.0, %v6062
    %v6064 = vrcp.pop %v6009
    %v6065 = vmul.f32 1.0, %v6064
    %v6066 = vrcp.pop %v6010
    %v6067 = vmul.f32 1.0, %v6066
    %v6068 = vrcp.pop %v6011
    %v6069 = vmul.f32 1.0, %v6068
    %v6070 = vrcp.pop %v6012
    %v6071 = vmul.f32 1.0, %v6070
    %v6072 = vrcp.pop %v6013
    %v6073 = vmul.f32 1.0, %v6072
    %v6074 = vrcp.pop %v6014
    %v6075 = vmul.f32 1.0, %v6074
    %v6076 = vrcp.pop %v6015
    %v6077 = vmul.f32 1.0, %v6076
    %v6078 = vrcp.pop %v6016
    %v6079 = vmul.f32 1.0, %v6078
    %v6080 = vrcp.pop %v6017
    %v6081 = vmul.f32 1.0, %v6080
    %v6082 = vmul.f32 %v5812, %v6019
    %v6083 = vmul.f32 %v5814, %v6021
    %v6084 = vmul.f32 %v5816, %v6023
    %v6085 = vmul.f32 %v5818, %v6025
    %v6086 = vmul.f32 %v5822, %v6027
    %v6087 = vmul.f32 %v5824, %v6029
    %v6088 = vmul.f32 %v5826, %v6031
    %v6089 = vmul.f32 %v5828, %v6033
    %v6090 = vmul.f32 %v5832, %v6035
    %v6091 = vmul.f32 %v5834, %v6037
    %v6092 = vmul.f32 %v5836, %v6039
    %v6093 = vmul.f32 %v5838, %v6041
    %v6094 = vmul.f32 %v5842, %v6043
    %v6095 = vmul.f32 %v5844, %v6045
    %v6096 = vmul.f32 %v5846, %v6047
    %v6097 = vmul.f32 %v5848, %v6049
    %v6098 = vmul.f32 %v5852, %v6051
    %v6099 = vmul.f32 %v5854, %v6053
    %v6100 = vmul.f32 %v5856, %v6055
    %v6101 = vmul.f32 %v5858, %v6057
    %v6102 = vmul.f32 %v5862, %v6059
    %v6103 = vmul.f32 %v5864, %v6061
    %v6104 = vmul.f32 %v5866, %v6063
    %v6105 = vmul.f32 %v5868, %v6065
    %v6106 = vmul.f32 %v5872, %v6067
    %v6107 = vmul.f32 %v5874, %v6069
    %v6108 = vmul.f32 %v5876, %v6071
    %v6109 = vmul.f32 %v5878, %v6073
    %v6110 = vmul.f32 %v5882, %v6075
    %v6111 = vmul.f32 %v5884, %v6077
    %v6112 = vmul.f32 %v5886, %v6079
    %v6113 = vmul.f32 %v5888, %v6081
    %v6114 = vld [vmem:[%s9] sm:$0xf]
    %v6115 = vld [vmem:[%s9 + $0x4] sm:$0xf]
    %v6116 = vld [vmem:[%s9 + $0x8] sm:$0xf]
    %v6117 = vld [vmem:[%s9 + $0xc] sm:$0xf]
    %v6118 = vld [vmem:[%s9 + $0x10] sm:$0xf]
    %v6119 = vld [vmem:[%s9 + $0x14] sm:$0xf]
    %v6120 = vld [vmem:[%s9 + $0x18] sm:$0xf]
    %v6121 = vld [vmem:[%s9 + $0x1c] sm:$0xf]
    %v6122 = vpack.c.bf16 %v6084, %v6082
    %v6123 = vpack.c.bf16 %v6085, %v6083
    %v6124 = vpack.c.bf16 %v6088, %v6086
    %v6125 = vpack.c.bf16 %v6089, %v6087
    %v6126 = vpack.c.bf16 %v6092, %v6090
    %v6127 = vpack.c.bf16 %v6093, %v6091
    %v6128 = vpack.c.bf16 %v6096, %v6094
    %v6129 = vpack.c.bf16 %v6097, %v6095
    %v6130 = vpack.c.bf16 %v6100, %v6098
    %v6131 = vpack.c.bf16 %v6101, %v6099
    %v6132 = vpack.c.bf16 %v6104, %v6102
    %v6133 = vpack.c.bf16 %v6105, %v6103
    %v6134 = vpack.c.bf16 %v6108, %v6106
    %v6135 = vpack.c.bf16 %v6109, %v6107
    %v6136 = vpack.c.bf16 %v6112, %v6110
    %v6137 = vpack.c.bf16 %v6113, %v6111
    %v6138 = vld [vmem:[%s10] sm:$0xff]
    %v6139 = vld [vmem:[%s10 + $0x8] sm:$0xff]
    %v6140 = vld [vmem:[%s10 + $0x10] sm:$0xff]
    %v6141 = vld [vmem:[%s10 + $0x18] sm:$0xff]
    %v6142 = vld [vmem:[%s10 + $0x20] sm:$0xff]
    %v6143 = vld [vmem:[%s10 + $0x28] sm:$0xff]
    %v6144 = vld [vmem:[%s10 + $0x30] sm:$0xff]
    %v6145 = vld [vmem:[%s10 + $0x38] sm:$0xff]
    %6147 = vset.pattern.permute.xlu0 0
    %6148 = vperm.xlu0 %6147, %v6138
    %v6149 = vpop.permute.xlu0 %6148
    %6152 = vset.pattern.permute.xlu0 0
    %6153 = vperm.xlu0 %6152, %v6139
    %v6154 = vpop.permute.xlu0 %6153
    %6157 = vset.pattern.permute.xlu0 0
    %6158 = vperm.xlu0 %6157, %v6140
    %v6159 = vpop.permute.xlu0 %6158
    %6162 = vset.pattern.permute.xlu0 0
    %6163 = vperm.xlu0 %6162, %v6141
    %v6164 = vpop.permute.xlu0 %6163
    %6167 = vset.pattern.permute.xlu0 0
    %6168 = vperm.xlu0 %6167, %v6142
    %v6169 = vpop.permute.xlu0 %6168
    %6172 = vset.pattern.permute.xlu0 0
    %6173 = vperm.xlu0 %6172, %v6143
    %v6174 = vpop.permute.xlu0 %6173
    %6177 = vset.pattern.permute.xlu0 0
    %6178 = vperm.xlu0 %6177, %v6144
    %v6179 = vpop.permute.xlu0 %6178
    %6182 = vset.pattern.permute.xlu0 0
    %6183 = vperm.xlu0 %6182, %v6145
    %v6184 = vpop.permute.xlu0 %6183
    %v6194 = vunpack.c.l.b16 %v6114
    %v6195 = vunpack.c.l.b16 %v6115
    %v6196 = vunpack.c.l.b16 %v6116
    %v6197 = vunpack.c.l.b16 %v6117
    %v6198 = vunpack.c.l.b16 %v6118
    %v6199 = vunpack.c.l.b16 %v6119
    %v6200 = vunpack.c.l.b16 %v6120
    %v6201 = vunpack.c.l.b16 %v6121
    %v6202 = vpack.c.b16 %v6195, %v6194
    %v6203 = vpack.c.b16 %v6197, %v6196
    %v6204 = vpack.c.b16 %v6199, %v6198
    %v6205 = vpack.c.b16 %v6201, %v6200
    %6210 = vmatprep.subr.bf16.mxu0 %v6123
    %6211 = vmatpush1.bf16.msra.mxu0 %v6122
    %6212 = vmatprep.subr.bf16.mxu0 %v6125
    %6213 = vmatpush1.bf16.msra.mxu0 %v6124
    %6214 = vmatprep.subr.bf16.mxu0 %v6127
    %6215 = vmatpush1.bf16.msra.mxu0 %v6126
    %6216 = vmatprep.subr.bf16.mxu0 %v6129
    %6217 = vmatpush1.bf16.msra.mxu0 %v6128
    %6218 = vmatprep.subr.bf16.mxu0 %v6131
    %6219 = vmatpush1.bf16.msra.mxu0 %v6130
    %6220 = vmatprep.subr.bf16.mxu0 %v6133
    %6221 = vmatpush1.bf16.msra.mxu0 %v6132
    %6222 = vmatprep.subr.bf16.mxu0 %v6135
    %6223 = vmatpush1.bf16.msra.mxu0 %v6134
    %6224 = vmatprep.subr.bf16.mxu0 %v6137
    %6225 = vmatpush1.bf16.msra.mxu0 %v6136
    %6226 = vmatprep.subr.bf16.mxu0 0
    %6227 = vmatpush1.bf16.msra.mxu0 0
    %6228 = vmatprep.subr.bf16.mxu0 0
    %6229 = vmatpush1.bf16.msra.mxu0 0
    %6230 = vmatprep.subr.bf16.mxu0 0
    %6231 = vmatpush1.bf16.msra.mxu0 0
    %6232 = vmatprep.subr.bf16.mxu0 0
    %6233 = vmatpush1.bf16.msra.mxu0 0
    %6234 = vmatprep.subr.bf16.mxu0 0
    %6235 = vmatpush1.bf16.msra.mxu0 0
    %6236 = vmatprep.subr.bf16.mxu0 0
    %6237 = vmatpush1.bf16.msra.mxu0 0
    %6238 = vmatprep.subr.bf16.mxu0 0
    %6239 = vmatpush1.bf16.msra.mxu0 0
    %6240 = vmatprep.subr.bf16.mxu0 0
    %6241 = vmatpush1.bf16.msra.mxu0 0
    %6242 = vmatprep.mubr.bf16.mxu0 0
    %6243 = vmatmul.mubr.bf16.gmra.mrb[0].mxu0 %v6202
    %v6244 = vpop.f32.mrb[0].mxu0
    %v6245 = vadd.f32 %v6149, %v6244
    %v6246 = vpop.f32.mrb[0].mxu0
    %v6247 = vadd.f32 %v6149, %v6246
    %v6248 = vpop.f32.mrb[0].mxu0
    %v6249 = vadd.f32 %v6154, %v6248
    %v6250 = vpop.f32.mrb[0].mxu0
    %v6251 = vadd.f32 %v6154, %v6250
    %6252 = vmatprep.mubr.bf16.mxu0 0
    %6253 = vmatmul.mubr.bf16.gmra.mrb[0].mxu0 %v6203
    %v6254 = vpop.f32.mrb[0].mxu0
    %v6255 = vadd.f32 %v6159, %v6254
    %v6256 = vpop.f32.mrb[0].mxu0
    %v6257 = vadd.f32 %v6159, %v6256
    %v6258 = vpop.f32.mrb[0].mxu0
    %v6259 = vadd.f32 %v6164, %v6258
    %v6260 = vpop.f32.mrb[0].mxu0
    %v6261 = vadd.f32 %v6164, %v6260
    %6262 = vmatprep.mubr.bf16.mxu0 0
    %6263 = vmatmul.mubr.bf16.gmra.mrb[0].mxu0 %v6204
    %v6264 = vpop.f32.mrb[0].mxu0
    %v6265 = vadd.f32 %v6169, %v6264
    %v6266 = vpop.f32.mrb[0].mxu0
    %v6267 = vadd.f32 %v6169, %v6266
    %v6268 = vpop.f32.mrb[0].mxu0
    %v6269 = vadd.f32 %v6174, %v6268
    %v6270 = vpop.f32.mrb[0].mxu0
    %v6271 = vadd.f32 %v6174, %v6270
    %6272 = vmatprep.mubr.bf16.mxu0 0
    %6273 = vmatmul.mubr.bf16.gmra.mrb[0].mxu0 %v6205
    %v6274 = vpop.f32.mrb[0].mxu0
    %v6275 = vadd.f32 %v6179, %v6274
    %v6276 = vpop.f32.mrb[0].mxu0
    %v6277 = vadd.f32 %v6179, %v6276
    %v6278 = vpop.f32.mrb[0].mxu0
    %v6279 = vadd.f32 %v6184, %v6278
    %v6280 = vpop.f32.mrb[0].mxu0
    %v6281 = vadd.f32 %v6184, %v6280
    %6282 = vdwg.mxu0
    %v6283 = vxor.u32 %v6245, 2147483648
    %v6284 = vxor.u32 %v6247, 2147483648
    %v6285 = vxor.u32 %v6249, 2147483648
    %v6286 = vxor.u32 %v6251, 2147483648
    %v6287 = vxor.u32 %v6255, 2147483648
    %v6288 = vxor.u32 %v6257, 2147483648
    %v6289 = vxor.u32 %v6259, 2147483648
    %v6290 = vxor.u32 %v6261, 2147483648
    %v6291 = vxor.u32 %v6265, 2147483648
    %v6292 = vxor.u32 %v6267, 2147483648
    %v6293 = vxor.u32 %v6269, 2147483648
    %v6294 = vxor.u32 %v6271, 2147483648
    %v6295 = vxor.u32 %v6275, 2147483648
    %v6296 = vxor.u32 %v6277, 2147483648
    %v6297 = vxor.u32 %v6279, 2147483648
    %v6298 = vxor.u32 %v6281, 2147483648
    %v6299 = vmul.f32 %v6283, 1.442695
    %v6300 = vpow.pop %v6299
    %v6301 = vmul.f32 %v6284, 1.442695
    %v6302 = vpow.pop %v6301
    %v6303 = vmul.f32 %v6285, 1.442695
    %v6304 = vpow.pop %v6303
    %v6305 = vmul.f32 %v6286, 1.442695
    %v6306 = vpow.pop %v6305
    %v6307 = vmul.f32 %v6287, 1.442695
    %v6308 = vpow.pop %v6307
    %v6309 = vmul.f32 %v6288, 1.442695
    %v6310 = vpow.pop %v6309
    %v6311 = vmul.f32 %v6289, 1.442695
    %v6312 = vpow.pop %v6311
    %v6313 = vmul.f32 %v6290, 1.442695
    %v6314 = vpow.pop %v6313
    %v6315 = vmul.f32 %v6291, 1.442695
    %v6316 = vpow.pop %v6315
    %v6317 = vmul.f32 %v6292, 1.442695
    %v6318 = vpow.pop %v6317
    %v6319 = vmul.f32 %v6293, 1.442695
    %v6320 = vpow.pop %v6319
    %v6321 = vmul.f32 %v6294, 1.442695
    %v6322 = vpow.pop %v6321
    %v6323 = vmul.f32 %v6295, 1.442695
    %v6324 = vpow.pop %v6323
    %v6325 = vmul.f32 %v6296, 1.442695
    %v6326 = vpow.pop %v6325
    %v6327 = vmul.f32 %v6297, 1.442695
    %v6328 = vpow.pop %v6327
    %v6329 = vmul.f32 %v6298, 1.442695
    %v6330 = vpow.pop %v6329
    %v6331 = vadd.f32 %v6300, 1.0
    %v6332 = vadd.f32 %v6302, 1.0
    %v6333 = vadd.f32 %v6304, 1.0
    %v6334 = vadd.f32 %v6306, 1.0
    %v6335 = vadd.f32 %v6308, 1.0
    %v6336 = vadd.f32 %v6310, 1.0
    %v6337 = vadd.f32 %v6312, 1.0
    %v6338 = vadd.f32 %v6314, 1.0
    %v6339 = vadd.f32 %v6316, 1.0
    %v6340 = vadd.f32 %v6318, 1.0
    %v6341 = vadd.f32 %v6320, 1.0
    %v6342 = vadd.f32 %v6322, 1.0
    %v6343 = vadd.f32 %v6324, 1.0
    %v6344 = vadd.f32 %v6326, 1.0
    %v6345 = vadd.f32 %v6328, 1.0
    %v6346 = vadd.f32 %v6330, 1.0
    %v6347 = vrcp.pop %v6331
    %v6348 = vmul.f32 1.0, %v6347
    %v6349 = vrcp.pop %v6332
    %v6350 = vmul.f32 1.0, %v6349
    %v6351 = vrcp.pop %v6333
    %v6352 = vmul.f32 1.0, %v6351
    %v6353 = vrcp.pop %v6334
    %v6354 = vmul.f32 1.0, %v6353
    %v6355 = vrcp.pop %v6335
    %v6356 = vmul.f32 1.0, %v6355
    %v6357 = vrcp.pop %v6336
    %v6358 = vmul.f32 1.0, %v6357
    %v6359 = vrcp.pop %v6337
    %v6360 = vmul.f32 1.0, %v6359
    %v6361 = vrcp.pop %v6338
    %v6362 = vmul.f32 1.0, %v6361
    %v6363 = vrcp.pop %v6339
    %v6364 = vmul.f32 1.0, %v6363
    %v6365 = vrcp.pop %v6340
    %v6366 = vmul.f32 1.0, %v6365
    %v6367 = vrcp.pop %v6341
    %v6368 = vmul.f32 1.0, %v6367
    %v6369 = vrcp.pop %v6342
    %v6370 = vmul.f32 1.0, %v6369
    %v6371 = vrcp.pop %v6343
    %v6372 = vmul.f32 1.0, %v6371
    %v6373 = vrcp.pop %v6344
    %v6374 = vmul.f32 1.0, %v6373
    %v6375 = vrcp.pop %v6345
    %v6376 = vmul.f32 1.0, %v6375
    %v6377 = vrcp.pop %v6346
    %v6378 = vmul.f32 1.0, %v6377
    %v6379 = vmul.f32 %v6245, %v6348
    %v6380 = vmul.f32 %v6247, %v6350
    %v6381 = vmul.f32 %v6249, %v6352
    %v6382 = vmul.f32 %v6251, %v6354
    %v6383 = vmul.f32 %v6255, %v6356
    %v6384 = vmul.f32 %v6257, %v6358
    %v6385 = vmul.f32 %v6259, %v6360
    %v6386 = vmul.f32 %v6261, %v6362
    %v6387 = vmul.f32 %v6265, %v6364
    %v6388 = vmul.f32 %v6267, %v6366
    %v6389 = vmul.f32 %v6269, %v6368
    %v6390 = vmul.f32 %v6271, %v6370
    %v6391 = vmul.f32 %v6275, %v6372
    %v6392 = vmul.f32 %v6277, %v6374
    %v6393 = vmul.f32 %v6279, %v6376
    %v6394 = vmul.f32 %v6281, %v6378
    %v6395 = vld [vmem:[%s11] sm:$0xff]
    %v6396 = vld [vmem:[%s11 + $0x8] sm:$0xff]
    %v6397 = vld [vmem:[%s11 + $0x10] sm:$0xff]
    %v6398 = vld [vmem:[%s11 + $0x18] sm:$0xff]
    %v6399 = vld [vmem:[%s11 + $0x20] sm:$0xff]
    %v6400 = vld [vmem:[%s11 + $0x28] sm:$0xff]
    %v6401 = vld [vmem:[%s11 + $0x30] sm:$0xff]
    %v6402 = vld [vmem:[%s11 + $0x38] sm:$0xff]
    %6404 = vset.pattern.permute.xlu0 0
    %6405 = vperm.xlu0 %6404, %v6395
    %v6406 = vpop.permute.xlu0 %6405
    %6409 = vset.pattern.permute.xlu0 0
    %6410 = vperm.xlu0 %6409, %v6396
    %v6411 = vpop.permute.xlu0 %6410
    %6414 = vset.pattern.permute.xlu0 0
    %6415 = vperm.xlu0 %6414, %v6397
    %v6416 = vpop.permute.xlu0 %6415
    %6419 = vset.pattern.permute.xlu0 0
    %6420 = vperm.xlu0 %6419, %v6398
    %v6421 = vpop.permute.xlu0 %6420
    %6424 = vset.pattern.permute.xlu0 0
    %6425 = vperm.xlu0 %6424, %v6399
    %v6426 = vpop.permute.xlu0 %6425
    %6429 = vset.pattern.permute.xlu0 0
    %6430 = vperm.xlu0 %6429, %v6400
    %v6431 = vpop.permute.xlu0 %6430
    %6434 = vset.pattern.permute.xlu0 0
    %6435 = vperm.xlu0 %6434, %v6401
    %v6436 = vpop.permute.xlu0 %6435
    %6439 = vset.pattern.permute.xlu0 0
    %6440 = vperm.xlu0 %6439, %v6402
    %v6441 = vpop.permute.xlu0 %6440
    %v6443 = vmul.f32 %v6379, %v6406
    %v6444 = vmul.f32 %v6380, %v6406
    %v6445 = vmul.f32 %v6381, %v6411
    %v6446 = vmul.f32 %v6382, %v6411
    %v6447 = vmul.f32 %v6383, %v6416
    %v6448 = vmul.f32 %v6384, %v6416
    %v6449 = vmul.f32 %v6385, %v6421
    %v6450 = vmul.f32 %v6386, %v6421
    %v6451 = vmul.f32 %v6387, %v6426
    %v6452 = vmul.f32 %v6388, %v6426
    %v6453 = vmul.f32 %v6389, %v6431
    %v6454 = vmul.f32 %v6390, %v6431
    %v6455 = vmul.f32 %v6391, %v6436
    %v6456 = vmul.f32 %v6392, %v6436
    %v6457 = vmul.f32 %v6393, %v6441
    %v6458 = vmul.f32 %v6394, %v6441
    %v6459 = vadd.f32 %v6443, %v6445
    %v6460 = vadd.f32 %v6459, %v6447
    %v6461 = vadd.f32 %v6460, %v6449
    %v6462 = vadd.f32 %v6461, %v6451
    %v6463 = vadd.f32 %v6462, %v6453
    %v6464 = vadd.f32 %v6463, %v6455
    %v6465 = vadd.f32 %v6464, %v6457
    %v6466 = vrot.slane %v6465, 4
    %v6467 = vadd.f32 %v6465, %v6466
    %v6468 = vrot.slane %v6467, 2
    %v6469 = vadd.f32 %v6467, %v6468
    %v6470 = vrot.slane %v6469, 1
    %v6471 = vadd.f32 %v6469, %v6470
    %v6472 = vadd.f32 %v6444, %v6446
    %v6473 = vadd.f32 %v6472, %v6448
    %v6474 = vadd.f32 %v6473, %v6450
    %v6475 = vadd.f32 %v6474, %v6452
    %v6476 = vadd.f32 %v6475, %v6454
    %v6477 = vadd.f32 %v6476, %v6456
    %v6478 = vadd.f32 %v6477, %v6458
    %v6479 = vrot.slane %v6478, 4
    %v6480 = vadd.f32 %v6478, %v6479
    %v6481 = vrot.slane %v6480, 2
    %v6482 = vadd.f32 %v6480, %v6481
    %v6483 = vrot.slane %v6482, 1
    %v6484 = vadd.f32 %v6482, %v6483
    %v6485 = vld [vmem:[#allocation2] sm:$0x1]
    %6487 = vset.pattern.permute.xlu0 0
    %6488 = vperm.xlu0 %6487, %v6485
    %v6489 = vpop.permute.xlu0 %6488
    %v6491 = vlaneseq
    %v6492 = vshrl.u32 %v6491, 7
    %v6493 = vsub.s32 0, %v6492
    %v6494 = vrot.slane %v6489, %v6493
    %v6495 = vadd.f32 %v6471, %v6494
    %v6496 = vadd.f32 %v6484, %v6494
    %v6497 = vxor.u32 %v6495, 2147483648
    %v6498 = vxor.u32 %v6496, 2147483648
    %v6499 = vmul.f32 %v6497, 1.442695
    %v6500 = vpow.pop %v6499
    %v6501 = vmul.f32 %v6498, 1.442695
    %v6502 = vpow.pop %v6501
    %v6503 = vadd.f32 %v6500, 1.0
    %v6504 = vadd.f32 %v6502, 1.0
    %v6505 = vrcp.pop %v6503
    %v6506 = vmul.f32 1.0, %v6505
    %v6507 = vrcp.pop %v6504
    %v6508 = vmul.f32 1.0, %v6507
    %v6511 = vcombine.low %v6506, %v6508
    %v6513 = vunpack.c.l.s4 1966171168
    %v6514 = vunpack.c.0.s8 %v6513
    %v6515 = vlaneseq
    %v6516 = vshrl.u32 %v6515, 7
    %v6517 = vsub.s32 %v6514, %v6516
    %v6518 = vrot.slane %v6511, %v6517
    %v6520 = vunpack.c.l.s4 1966171168
    %v6521 = vunpack.c.0.s8 %v6520
    %v6522 = vlaneseq
    %v6523 = vshrl.u32 %v6522, 7
    %v6524 = vsub.s32 %v6521, %v6523
    %v6525 = vrot.slane %v6518, %v6524
    %v6527 = vlaneseq
    %vm6528 = vcmp.ge.s32.totalorder %v6527, 0
    %vm6529 = vcmp.lt.s32.totalorder %v6527, 256
    %vm6530 = vmand %vm6528, %vm6529
    %6531 = vst.msk [vmem:[#allocation8] sm:$0x3] %vm6530, %v6525
    // Predicated region
    $region62: #{tpu_custom_call.1} parent=1 // pred_check
      _
    $region63: #{tpu_custom_call.1} parent=1 // pred_check_branch
      %6533 = sbr.rel (0) target = $region65
    $region64: #{tpu_custom_call.1} parent=1 // pred_region
      %s6535 = ssub.s32 32, 32
      %6536 = vsyncadd [#allocation5], %s6535
      %s6538 = sshll.u32 [#allocation8], 4
      %s6539 = int_to_ptr.vmem [resolvable:$true] %s6538
      %6541 = dma.vmem_to_hbm [thread:$0]  %s6539, 32, %s13, [#allocation5]
    $region65: #{tpu_custom_call.1} parent=1 // pred_fallthru
      _
    // Predicated region
    $region66: #{tpu_custom_call.1} parent=1 // pred_check
      _
    $region67: #{tpu_custom_call.1} parent=1 // pred_check_branch
      %6543 = sbr.rel (0) target = $region69
    $region68: #{tpu_custom_call.1} parent=1 // pred_region
      %6544 = dma.done [#allocation5], 32
    $region69: #{tpu_custom_call.1} parent=1 // pred_fallthru
      _
    %6545 = vsyncpa [#allocation4], 1
    %6546 = vsyncpa [#allocation7], 1
    %6547 = vsyncpa [#allocation5], 1

</llo_original>
